<compile_context>
chip_gen: v6e
topology: v6e:2x2x1
jax: 0.10.0
libtpu: 0.0.40
codegen_flags: <defaults>
</compile_context>

<pallas_src>
import jax
import jax.numpy as jnp
from jax import lax
from jax.experimental import pallas as pl
from jax.experimental.pallas import tpu as pltpu

EPS = 1e-5
TM_DEFAULT = 256            # row-tile; multiple of 8 (v5e) and fine for 256-wide MXUs
VMEM_LIMIT = 48 * 1024 * 1024   # above default scoped limit, below v7x physical 64MiB


# ---------------------------------------------------------------------------
# small helpers
# ---------------------------------------------------------------------------
def _round_up(x, m):
    return (x + m - 1) // m * m


def _pad_axis(a, axis, target):
    cur = a.shape[axis]
    if cur == target:
        return a
    pads = [(0, 0)] * a.ndim
    pads[axis] = (0, target - cur)
    return jnp.pad(a, pads)


def _compiler_params(sem):
    return pltpu.CompilerParams(
        dimension_semantics=sem, vmem_limit_bytes=VMEM_LIMIT)


def _finalize_bn(stats, gamma, beta, n_rows):
    """Tiny per-channel finalize: partial (sum,sumsq) -> affine scale/shift."""
    tot = jnp.sum(stats, axis=0)                 # (8, C): row0=sum, row1=sumsq
    mean = tot[0] / n_rows
    var = tot[1] / n_rows - mean * mean          # biased variance
    scale = gamma * lax.rsqrt(var + EPS)
    shift = beta - mean * scale
    return scale.reshape(1, -1), shift.reshape(1, -1)


# ---------------------------------------------------------------------------
# kernels
# ---------------------------------------------------------------------------
def _matmul_stats_kernel(x_ref, w_ref, y_ref, st_ref):
    # y = x @ w (bf16 in, f32 acc); also emit per-tile sum / sumsq partials.
    y = jnp.dot(x_ref[...], w_ref[...], preferred_element_type=jnp.float32)
    y_ref[...] = y
    s = jnp.sum(y, axis=0, keepdims=True)
    ss = jnp.sum(y * y, axis=0, keepdims=True)
    st_ref[...] = jnp.concatenate(
        [s, ss, jnp.zeros((6, y.shape[1]), jnp.float32)], axis=0)[None]


def _bn_relu_apply_kernel(y_ref, s_ref, t_ref, o_ref):
    # o = relu(y * scale + shift), stored bf16 for the next MXU stage.
    o_ref[...] = jnp.maximum(
        y_ref[...] * s_ref[...] + t_ref[...], 0.0).astype(jnp.bfloat16)


def _residual_proj_kernel(y3_ref, s3_ref, t3_ref, ysc_ref, ssc_ref, tsc_ref, o_ref):
    o_ref[...] = jnp.maximum(
        y3_ref[...] * s3_ref[...] + t3_ref[...]
        + ysc_ref[...] * ssc_ref[...] + tsc_ref[...], 0.0)


def _residual_identity_kernel(y3_ref, s3_ref, t3_ref, sc_ref, o_ref):
    o_ref[...] = jnp.maximum(
        y3_ref[...] * s3_ref[...] + t3_ref[...] + sc_ref[...], 0.0)


# ---------------------------------------------------------------------------
# pallas_call wrappers (row-tiled grids)
# ---------------------------------------------------------------------------
def _matmul_stats(x, w, tm):
    rows, k = x.shape
    cout = w.shape[1]
    nt = rows // tm
    return pl.pallas_call(
        _matmul_stats_kernel,
        grid=(nt,),
        in_specs=[pl.BlockSpec((tm, k), lambda i: (i, 0)),
                  pl.BlockSpec((k, cout), lambda i: (0, 0))],
        out_specs=[pl.BlockSpec((tm, cout), lambda i: (i, 0)),
                   pl.BlockSpec((1, 8, cout), lambda i: (i, 0, 0))],
        out_shape=[jax.ShapeDtypeStruct((rows, cout), jnp.float32),
                   jax.ShapeDtypeStruct((nt, 8, cout), jnp.float32)],
        compiler_params=_compiler_params(("parallel",)),
    )(x, w)


def _bn_relu_apply(y, scale, shift, tm):
    rows, c = y.shape
    nt = rows // tm
    return pl.pallas_call(
        _bn_relu_apply_kernel,
        grid=(nt,),
        in_specs=[pl.BlockSpec((tm, c), lambda i: (i, 0)),
                  pl.BlockSpec((1, c), lambda i: (0, 0)),
                  pl.BlockSpec((1, c), lambda i: (0, 0))],
        out_specs=pl.BlockSpec((tm, c), lambda i: (i, 0)),
        out_shape=jax.ShapeDtypeStruct((rows, c), jnp.bfloat16),
        compiler_params=_compiler_params(("parallel",)),
    )(y, scale, shift)


def _bnrelu_matmul_stats(y_pre, scale, shift, w, tm, n_valid):
    """Fused: h = relu(y_pre*scale+shift) (f32) -> bf16 -> h @ w, plus stats."""
    rows, cin = y_pre.shape
    cout = w.shape[1]
    nt = rows // tm
    mask_rows = rows != n_valid   # zero out padded rows so stats stay exact

    def kernel(y_ref, s_ref, t_ref, w_ref, o_ref, st_ref):
        h = jnp.maximum(y_ref[...] * s_ref[...] + t_ref[...], 0.0)
        if mask_rows:
            row = (pl.program_id(0) * tm
                   + lax.broadcasted_iota(jnp.int32, h.shape, 0))
            h = jnp.where(row < n_valid, h, 0.0)
        y = jnp.dot(h.astype(jnp.bfloat16), w_ref[...],
                    preferred_element_type=jnp.float32)
        o_ref[...] = y
        s = jnp.sum(y, axis=0, keepdims=True)
        ss = jnp.sum(y * y, axis=0, keepdims=True)
        st_ref[...] = jnp.concatenate(
            [s, ss, jnp.zeros((6, cout), jnp.float32)], axis=0)[None]

    return pl.pallas_call(
        kernel,
        grid=(nt,),
        in_specs=[pl.BlockSpec((tm, cin), lambda i: (i, 0)),
                  pl.BlockSpec((1, cin), lambda i: (0, 0)),
                  pl.BlockSpec((1, cin), lambda i: (0, 0)),
                  pl.BlockSpec((cin, cout), lambda i: (0, 0))],
        out_specs=[pl.BlockSpec((tm, cout), lambda i: (i, 0)),
                   pl.BlockSpec((1, 8, cout), lambda i: (i, 0, 0))],
        out_shape=[jax.ShapeDtypeStruct((rows, cout), jnp.float32),
                   jax.ShapeDtypeStruct((nt, 8, cout), jnp.float32)],
        compiler_params=_compiler_params(("parallel",)),
    )(y_pre, scale, shift, w)


def _residual_proj(y3, s3, t3, ysc, ssc, tsc, tm):
    rows, c = y3.shape
    nt = rows // tm
    return pl.pallas_call(
        _residual_proj_kernel,
        grid=(nt,),
        in_specs=[pl.BlockSpec((tm, c), lambda i: (i, 0)),
                  pl.BlockSpec((1, c), lambda i: (0, 0)),
                  pl.BlockSpec((1, c), lambda i: (0, 0)),
                  pl.BlockSpec((tm, c), lambda i: (i, 0)),
                  pl.BlockSpec((1, c), lambda i: (0, 0)),
                  pl.BlockSpec((1, c), lambda i: (0, 0))],
        out_specs=pl.BlockSpec((tm, c), lambda i: (i, 0)),
        out_shape=jax.ShapeDtypeStruct((rows, c), jnp.float32),
        compiler_params=_compiler_params(("parallel",)),
    )(y3, s3, t3, ysc, ssc, tsc)


def _residual_identity(y3, s3, t3, sc, tm):
    rows, c = y3.shape
    nt = rows // tm
    return pl.pallas_call(
        _residual_identity_kernel,
        grid=(nt,),
        in_specs=[pl.BlockSpec((tm, c), lambda i: (i, 0)),
                  pl.BlockSpec((1, c), lambda i: (0, 0)),
                  pl.BlockSpec((1, c), lambda i: (0, 0)),
                  pl.BlockSpec((tm, c), lambda i: (i, 0))],
        out_specs=pl.BlockSpec((tm, c), lambda i: (i, 0)),
        out_shape=jax.ShapeDtypeStruct((rows, c), jnp.float32),
        compiler_params=_compiler_params(("parallel",)),
    )(y3, s3, t3, sc)


# ---------------------------------------------------------------------------
# Bottleneck forward (wrapper = layout glue; all heavy math runs in kernels)
# ---------------------------------------------------------------------------
def _bottleneck_impl(x_nchw, params, stride, tm):
    N, Cin, H, W = x_nchw.shape
    planes = params["w1"].shape[1]
    Cout = params["w3"].shape[1]                  # expansion * planes

    Cin_p = _round_up(Cin, 128)
    Pp = _round_up(planes, 128)
    Cop = _round_up(Cout, 128)

    # TODO(synk): fold NCHW<->NHWC transposes into kernel I/O instead of XLA copies.
    x = jnp.transpose(x_nchw, (0, 2, 3, 1)).astype(jnp.float32)     # NHWC
    rows1 = N * H * W
    x2d = _pad_axis(x.reshape(rows1, Cin), 1, Cin_p)                # f32, lane-padded
    x_bf = x2d.astype(jnp.bfloat16)

    # ---- padded / bf16 weights and padded BN params -------------------------
    w1 = _pad_axis(_pad_axis(params["w1"], 0, Cin_p), 1, Pp).astype(jnp.bfloat16)
    g1 = _pad_axis(params["g1"], 0, Pp)
    b1 = _pad_axis(params["b1"], 0, Pp)

    w2 = jnp.zeros((9, Pp, Pp), jnp.float32).at[:, :planes, :planes].set(
        params["w2"]).reshape(9 * Pp, Pp).astype(jnp.bfloat16)
    g2 = _pad_axis(params["g2"], 0, Pp)
    b2 = _pad_axis(params["b2"], 0, Pp)

    w3 = _pad_axis(_pad_axis(params["w3"], 0, Pp), 1, Cop).astype(jnp.bfloat16)
    g3 = _pad_axis(params["g3"], 0, Cop)
    b3 = _pad_axis(params["b3"], 0, Cop)

    # ---- stage 1: conv1 (1x1) + batch stats, then fused bn1+relu epilogue ----
    rows1_p = _round_up(rows1, tm)
    y1, st1 = _matmul_stats(_pad_axis(x_bf, 0, rows1_p), w1, tm)
    s1, t1 = _finalize_bn(st1, g1, b1, rows1)
    h1 = _bn_relu_apply(y1, s1, t1, tm)[:rows1].reshape(N, H, W, Pp)   # bf16

    # ---- stage 2: conv2 (3x3, stride, pad=1) as one folded-K matmul ----------
    Ho = (H + 2 - 3) // stride + 1
    Wo = (W + 2 - 3) // stride + 1
    rows2 = N * Ho * Wo
    rows2_p = _round_up(rows2, tm)
    # TODO(synk): replace HBM im2col with in-kernel halo DMA (memory_space=pl.ANY).
    hp = jnp.pad(h1, ((0, 0), (1, 1), (1, 1), (0, 0)))
    cols = []
    for kh in range(3):
        for kw in range(3):
            t = hp[:, kh:kh + (Ho - 1) * stride + 1:stride,
                      kw:kw + (Wo - 1) * stride + 1:stride, :]
            cols.append(t.reshape(rows2, Pp))
    im2col = jnp.concatenate(cols, axis=1)                          # (rows2, 9*Pp) bf16
    y2, st2 = _matmul_stats(_pad_axis(im2col, 0, rows2_p), w2, tm)
    s2, t2 = _finalize_bn(st2, g2, b2, rows2)

    # ---- stage 3: bn2+relu fused into conv3 (1x1) + batch stats --------------
    y3, st3 = _bnrelu_matmul_stats(y2, s2, t2, w3, tm, rows2)
    s3, t3 = _finalize_bn(st3, g3, b3, rows2)

    # ---- shortcut + residual add + relu --------------------------------------
    has_proj = (stride != 1) or (Cin != Cout)
    if stride != 1:
        xs2d = _pad_axis(x[:, ::stride, ::stride, :].reshape(rows2, Cin), 1, Cin_p)
    else:
        xs2d = x2d

    if has_proj:
        wsc = _pad_axis(_pad_axis(params["wsc"], 0, Cin_p), 1, Cop).astype(jnp.bfloat16)
        gsc = _pad_axis(params["gsc"], 0, Cop)
        bsc = _pad_axis(params["bsc"], 0, Cop)
        ysc, stsc = _matmul_stats(
            _pad_axis(xs2d.astype(jnp.bfloat16), 0, rows2_p), wsc, tm)
        ssc, tsc = _finalize_bn(stsc, gsc, bsc, rows2)
        out2d = _residual_proj(y3, s3, t3, ysc, ssc, tsc, tm)
    else:
        # identity shortcut: Cin == Cout (so Cin_p == Cop) and stride == 1
        sc = _pad_axis(xs2d, 0, rows2_p)
        out2d = _residual_identity(y3, s3, t3, sc, tm)

    out = out2d[:rows2, :Cout].reshape(N, Ho, Wo, Cout)
    return jnp.transpose(out, (0, 3, 1, 2))                         # back to NCHW


bottleneck_forward = jax.jit(_bottleneck_impl, static_argnames=("stride", "tm"))


# ---------------------------------------------------------------------------
# Pure-JAX reference (independent path via lax.conv; same bf16-in/f32-acc mix)
# ---------------------------------------------------------------------------
def reference_forward(x_nchw, params, stride=1):
    x = jnp.transpose(x_nchw, (0, 2, 3, 1)).astype(jnp.float32)
    dn = ("NHWC", "HWIO", "NHWC")

    def bn(y, g, b):
        m = jnp.mean(y, axis=(0, 1, 2), keepdims=True)
        v = jnp.mean((y - m) ** 2, axis=(0, 1, 2), keepdims=True)
        return (y - m) * lax.rsqrt(v + EPS) * g + b

    def conv(inp, w, strides, padding):
        return lax.conv_general_dilated(
            inp.astype(jnp.bfloat16), w.astype(jnp.bfloat16), strides, padding,
            dimension_numbers=dn, preferred_element_type=jnp.float32)

    w1 = params["w1"].reshape(1, 1, *params["w1"].shape)
    h = jax.nn.relu(bn(conv(x, w1, (1, 1), "VALID"),
                       params["g1"], params["b1"]))
    w2 = params["w2"].reshape(3, 3, params["w2"].shape[1], params["w2"].shape[2])
    h = jax.nn.relu(bn(conv(h, w2, (stride, stride), ((1, 1), (1, 1))),
                       params["g2"], params["b2"]))
    w3 = params["w3"].reshape(1, 1, *params["w3"].shape)
    h = bn(conv(h, w3, (1, 1), "VALID"), params["g3"], params["b3"])

    in_planes, out_planes = x.shape[-1], params["w3"].shape[1]
    if stride != 1 or in_planes != out_planes:
        wsc = params["wsc"].reshape(1, 1, *params["wsc"].shape)
        sc = bn(conv(x, wsc, (stride, stride), "VALID"),
                params["gsc"], params["bsc"])
    else:
        sc = x
    out = jax.nn.relu(h + sc)
    return jnp.transpose(out, (0, 3, 1, 2))


# ---------------------------------------------------------------------------
# Deterministic parameter init (shapes follow Bottleneck.__init__)
# ---------------------------------------------------------------------------
def make_params(key, in_planes, planes, expansion=4):
    ks = jax.random.split(key, 12)
    out_planes = expansion * planes
    return {
        "w1": 0.1 * jax.random.normal(ks[0], (in_planes, planes), jnp.float32),
        "g1": 1.0 + 0.1 * jax.random.normal(ks[1], (planes,), jnp.float32),
        "b1": 0.1 * jax.random.normal(ks[2], (planes,), jnp.float32),
        "w2": 0.1 * jax.random.normal(ks[3], (9, planes, planes), jnp.float32),
        "g2": 1.0 + 0.1 * jax.random.normal(ks[4], (planes,), jnp.float32),
        "b2": 0.1 * jax.random.normal(ks[5], (planes,), jnp.float32),
        "w3": 0.1 * jax.random.normal(ks[6], (planes, out_planes), jnp.float32),
        "g3": 1.0 + 0.1 * jax.random.normal(ks[7], (out_planes,), jnp.float32),
        "b3": 0.1 * jax.random.normal(ks[8], (out_planes,), jnp.float32),
        "wsc": 0.1 * jax.random.normal(ks[9], (in_planes, out_planes), jnp.float32),
        "gsc": 1.0 + 0.1 * jax.random.normal(ks[10], (out_planes,), jnp.float32),
        "bsc": 0.1 * jax.random.normal(ks[11], (out_planes,), jnp.float32),
    }


if __name__ == "__main__":
    key = jax.random.PRNGKey(0)

    configs = [
        # (N, in_planes, planes, H, W, stride)
        (2, 4, 4, 16, 16, 1),   # projection shortcut (4 != 16)
        (2, 16, 4, 8, 8, 1),    # identity shortcut   (16 == 16, stride 1)
        (2, 8, 4, 9, 9, 2),     # strided projection, ragged row counts
    ]
    for idx, (N, cin, planes, H, W, stride) in enumerate(configs):
        kx, kp = jax.random.split(jax.random.fold_in(key, idx))
        x = jax.random.normal(kx, (N, cin, H, W), jnp.float32)
        params = make_params(kp, cin, planes)

        out = jax.block_until_ready(
            bottleneck_forward(x, params, stride=stride, tm=TM_DEFAULT))
        ref = jax.block_until_ready(reference_forward(x, params, stride=stride))

        Ho = (H + 2 - 3) // stride + 1
        assert out.shape == (N, 4 * planes, Ho, Ho), out.shape
        max_err = float(jnp.max(jnp.abs(out - ref)))
        assert jnp.allclose(out, ref, rtol=1e-2, atol=1e-2), (idx, max_err)

    print("KERNEL_OK")
</pallas_src>

<mosaic_0001>
module attributes {stable_mosaic.version = 11 : i64} {
  func.func @_matmul_stats_kernel(%arg0: i32, %arg1: memref<256x128xbf16, #tpu.memory_space<vmem>>, %arg2: memref<128x128xbf16, #tpu.memory_space<vmem>>, %arg3: memref<256x128xf32, #tpu.memory_space<vmem>>, %arg4: memref<1x8x128xf32, #tpu.memory_space<vmem>>) attributes {dimension_semantics = [#tpu.dimension_semantics<parallel>], iteration_bounds = array<i64: 2>, scalar_prefetch = 0 : i64, scratch_operands = 0 : i64, tpu.core_type = #tpu.core_type<tc>, window_params = [{transform_indices = @transform_0, window_bounds = array<i64: 256, 128>}, {pipeline_mode = #tpu.pipeline_mode<synchronous>, transform_indices = @transform_1, window_bounds = array<i64: 128, 128>}, {transform_indices = @transform_2, window_bounds = array<i64: 256, 128>}, {transform_indices = @transform_3, window_bounds = array<i64: 1, 8, 128>}]} {
    %c0 = arith.constant 0 : index
    %c0_0 = arith.constant 0 : index
    %0 = vector.load %arg1[%c0, %c0_0] : memref<256x128xbf16, #tpu.memory_space<vmem>>, vector<256x128xbf16>
    %c0_1 = arith.constant 0 : index
    %c0_2 = arith.constant 0 : index
    %1 = vector.load %arg2[%c0_1, %c0_2] : memref<128x128xbf16, #tpu.memory_space<vmem>>, vector<128x128xbf16>
    %cst = arith.constant dense<0.000000e+00> : vector<256x128xf32>
    %2 = tpu.matmul %0, %1, %cst {dimension_numbers = #tpu.dot_dimension_numbers<[1], [0], [0], [1], [0, 0, 1, 1], [], []>} : vector<256x128xbf16>, vector<128x128xbf16>, vector<256x128xf32> -> vector<256x128xf32>
    %c0_3 = arith.constant 0 : index
    %c0_4 = arith.constant 0 : index
    %3 = vector.load %arg3[%c0_3, %c0_4] : memref<256x128xf32, #tpu.memory_space<vmem>>, vector<256x128xf32>
    tpu.vector_store %arg3[%c0_3, %c0_4], %2 {strides = array<i32>} : memref<256x128xf32, #tpu.memory_space<vmem>>, vector<256x128xf32>,
    %cst_5 = arith.constant dense<0.000000e+00> : vector<128xf32>
    %4 = vector.multi_reduction <add>, %2, %cst_5 [0] : vector<256x128xf32> to vector<128xf32>
    %5 = vector.shape_cast %4 : vector<128xf32> to vector<1x128xf32>
    %6 = arith.mulf %2, %2 : vector<256x128xf32>
    %cst_6 = arith.constant dense<0.000000e+00> : vector<128xf32>
    %7 = vector.multi_reduction <add>, %6, %cst_6 [0] : vector<256x128xf32> to vector<128xf32>
    %8 = vector.shape_cast %7 : vector<128xf32> to vector<1x128xf32>
    %cst_7 = arith.constant 0.000000e+00 : f32
    %9 = vector.broadcast %cst_7 : f32 to vector<6x128xf32>
    %10 = tpu.concatenate %5, %8, %9 in 0 : vector<1x128xf32>, vector<1x128xf32>, vector<6x128xf32> -> vector<8x128xf32>
    %11 = vector.shape_cast %10 : vector<8x128xf32> to vector<1x8x128xf32>
    %c0_8 = arith.constant 0 : index
    %c0_9 = arith.constant 0 : index
    %c0_10 = arith.constant 0 : index
    %12 = vector.load %arg4[%c0_8, %c0_9, %c0_10] : memref<1x8x128xf32, #tpu.memory_space<vmem>>, vector<1x8x128xf32>
    tpu.vector_store %arg4[%c0_8, %c0_9, %c0_10], %11 {strides = array<i32>} : memref<1x8x128xf32, #tpu.memory_space<vmem>>, vector<1x8x128xf32>,
    return
  }
  func.func @transform_0(%arg0: i32) -> (i32, i32) {
    %c0_i32 = arith.constant 0 : i32
    %c0_i32_0 = arith.constant 0 : i32
    return %arg0, %c0_i32 : i32, i32
  }
  func.func @transform_1(%arg0: i32) -> (i32, i32) {
    %c0_i32 = arith.constant 0 : i32
    %c0_i32_0 = arith.constant 0 : i32
    %c0_i32_1 = arith.constant 0 : i32
    return %c0_i32, %c0_i32_0 : i32, i32
  }
  func.func @transform_2(%arg0: i32) -> (i32, i32) {
    %c0_i32 = arith.constant 0 : i32
    %c0_i32_0 = arith.constant 0 : i32
    return %arg0, %c0_i32 : i32, i32
  }
  func.func @transform_3(%arg0: i32) -> (i32, i32, i32) {
    %c0_i32 = arith.constant 0 : i32
    %c0_i32_0 = arith.constant 0 : i32
    %c0_i32_1 = arith.constant 0 : i32
    return %arg0, %c0_i32, %c0_i32_0 : i32, i32, i32
  }
}

module attributes {stable_mosaic.version = 11 : i64} {
  func.func @_bn_relu_apply_kernel(%arg0: i32, %arg1: memref<256x128xf32, #tpu.memory_space<vmem>>, %arg2: memref<1x128xf32, #tpu.memory_space<vmem>>, %arg3: memref<1x128xf32, #tpu.memory_space<vmem>>, %arg4: memref<256x128xbf16, #tpu.memory_space<vmem>>) attributes {dimension_semantics = [#tpu.dimension_semantics<parallel>], iteration_bounds = array<i64: 2>, scalar_prefetch = 0 : i64, scratch_operands = 0 : i64, tpu.core_type = #tpu.core_type<tc>, window_params = [{transform_indices = @transform_0, window_bounds = array<i64: 256, 128>}, {pipeline_mode = #tpu.pipeline_mode<synchronous>, transform_indices = @transform_1, window_bounds = array<i64: 1, 128>}, {pipeline_mode = #tpu.pipeline_mode<synchronous>, transform_indices = @transform_2, window_bounds = array<i64: 1, 128>}, {transform_indices = @transform_3, window_bounds = array<i64: 256, 128>}]} {
    %c0 = arith.constant 0 : index
    %c0_0 = arith.constant 0 : index
    %0 = vector.load %arg1[%c0, %c0_0] : memref<256x128xf32, #tpu.memory_space<vmem>>, vector<256x128xf32>
    %c0_1 = arith.constant 0 : index
    %c0_2 = arith.constant 0 : index
    %1 = vector.load %arg2[%c0_1, %c0_2] : memref<1x128xf32, #tpu.memory_space<vmem>>, vector<1x128xf32>
    %2 = vector.broadcast %1 : vector<1x128xf32> to vector<256x128xf32>
    %3 = arith.mulf %0, %2 : vector<256x128xf32>
    %c0_3 = arith.constant 0 : index
    %c0_4 = arith.constant 0 : index
    %4 = vector.load %arg3[%c0_3, %c0_4] : memref<1x128xf32, #tpu.memory_space<vmem>>, vector<1x128xf32>
    %5 = vector.broadcast %4 : vector<1x128xf32> to vector<256x128xf32>
    %6 = arith.addf %3, %5 : vector<256x128xf32>
    %cst = arith.constant 0.000000e+00 : f32
    %7 = vector.broadcast %cst : f32 to vector<256x128xf32>
    %8 = arith.maximumf %6, %7 : vector<256x128xf32>
    %9 = arith.truncf %8 : vector<256x128xf32> to vector<256x128xbf16>
    %c0_5 = arith.constant 0 : index
    %c0_6 = arith.constant 0 : index
    %10 = vector.load %arg4[%c0_5, %c0_6] : memref<256x128xbf16, #tpu.memory_space<vmem>>, vector<256x128xbf16>
    tpu.vector_store %arg4[%c0_5, %c0_6], %9 {strides = array<i32>} : memref<256x128xbf16, #tpu.memory_space<vmem>>, vector<256x128xbf16>,
    return
  }
  func.func @transform_0(%arg0: i32) -> (i32, i32) {
    %c0_i32 = arith.constant 0 : i32
    %c0_i32_0 = arith.constant 0 : i32
    return %arg0, %c0_i32 : i32, i32
  }
  func.func @transform_1(%arg0: i32) -> (i32, i32) {
    %c0_i32 = arith.constant 0 : i32
    %c0_i32_0 = arith.constant 0 : i32
    %c0_i32_1 = arith.constant 0 : i32
    return %c0_i32, %c0_i32_0 : i32, i32
  }
  func.func @transform_2(%arg0: i32) -> (i32, i32) {
    %c0_i32 = arith.constant 0 : i32
    %c0_i32_0 = arith.constant 0 : i32
    %c0_i32_1 = arith.constant 0 : i32
    return %c0_i32, %c0_i32_0 : i32, i32
  }
  func.func @transform_3(%arg0: i32) -> (i32, i32) {
    %c0_i32 = arith.constant 0 : i32
    %c0_i32_0 = arith.constant 0 : i32
    return %arg0, %c0_i32 : i32, i32
  }
}

module attributes {stable_mosaic.version = 11 : i64} {
  func.func @_matmul_stats_kernel(%arg0: i32, %arg1: memref<256x1152xbf16, #tpu.memory_space<vmem>>, %arg2: memref<1152x128xbf16, #tpu.memory_space<vmem>>, %arg3: memref<256x128xf32, #tpu.memory_space<vmem>>, %arg4: memref<1x8x128xf32, #tpu.memory_space<vmem>>) attributes {dimension_semantics = [#tpu.dimension_semantics<parallel>], iteration_bounds = array<i64: 2>, scalar_prefetch = 0 : i64, scratch_operands = 0 : i64, tpu.core_type = #tpu.core_type<tc>, window_params = [{transform_indices = @transform_0, window_bounds = array<i64: 256, 1152>}, {pipeline_mode = #tpu.pipeline_mode<synchronous>, transform_indices = @transform_1, window_bounds = array<i64: 1152, 128>}, {transform_indices = @transform_2, window_bounds = array<i64: 256, 128>}, {transform_indices = @transform_3, window_bounds = array<i64: 1, 8, 128>}]} {
    %c0 = arith.constant 0 : index
    %c0_0 = arith.constant 0 : index
    %0 = vector.load %arg1[%c0, %c0_0] : memref<256x1152xbf16, #tpu.memory_space<vmem>>, vector<256x1152xbf16>
    %c0_1 = arith.constant 0 : index
    %c0_2 = arith.constant 0 : index
    %1 = vector.load %arg2[%c0_1, %c0_2] : memref<1152x128xbf16, #tpu.memory_space<vmem>>, vector<1152x128xbf16>
    %cst = arith.constant dense<0.000000e+00> : vector<256x128xf32>
    %2 = tpu.matmul %0, %1, %cst {dimension_numbers = #tpu.dot_dimension_numbers<[1], [0], [0], [1], [0, 0, 1, 1], [], []>} : vector<256x1152xbf16>, vector<1152x128xbf16>, vector<256x128xf32> -> vector<256x128xf32>
    %c0_3 = arith.constant 0 : index
    %c0_4 = arith.constant 0 : index
    %3 = vector.load %arg3[%c0_3, %c0_4] : memref<256x128xf32, #tpu.memory_space<vmem>>, vector<256x128xf32>
    tpu.vector_store %arg3[%c0_3, %c0_4], %2 {strides = array<i32>} : memref<256x128xf32, #tpu.memory_space<vmem>>, vector<256x128xf32>,
    %cst_5 = arith.constant dense<0.000000e+00> : vector<128xf32>
    %4 = vector.multi_reduction <add>, %2, %cst_5 [0] : vector<256x128xf32> to vector<128xf32>
    %5 = vector.shape_cast %4 : vector<128xf32> to vector<1x128xf32>
    %6 = arith.mulf %2, %2 : vector<256x128xf32>
    %cst_6 = arith.constant dense<0.000000e+00> : vector<128xf32>
    %7 = vector.multi_reduction <add>, %6, %cst_6 [0] : vector<256x128xf32> to vector<128xf32>
    %8 = vector.shape_cast %7 : vector<128xf32> to vector<1x128xf32>
    %cst_7 = arith.constant 0.000000e+00 : f32
    %9 = vector.broadcast %cst_7 : f32 to vector<6x128xf32>
    %10 = tpu.concatenate %5, %8, %9 in 0 : vector<1x128xf32>, vector<1x128xf32>, vector<6x128xf32> -> vector<8x128xf32>
    %11 = vector.shape_cast %10 : vector<8x128xf32> to vector<1x8x128xf32>
    %c0_8 = arith.constant 0 : index
    %c0_9 = arith.constant 0 : index
    %c0_10 = arith.constant 0 : index
    %12 = vector.load %arg4[%c0_8, %c0_9, %c0_10] : memref<1x8x128xf32, #tpu.memory_space<vmem>>, vector<1x8x128xf32>
    tpu.vector_store %arg4[%c0_8, %c0_9, %c0_10], %11 {strides = array<i32>} : memref<1x8x128xf32, #tpu.memory_space<vmem>>, vector<1x8x128xf32>,
    return
  }
  func.func @transform_0(%arg0: i32) -> (i32, i32) {
    %c0_i32 = arith.constant 0 : i32
    %c0_i32_0 = arith.constant 0 : i32
    return %arg0, %c0_i32 : i32, i32
  }
  func.func @transform_1(%arg0: i32) -> (i32, i32) {
    %c0_i32 = arith.constant 0 : i32
    %c0_i32_0 = arith.constant 0 : i32
    %c0_i32_1 = arith.constant 0 : i32
    return %c0_i32, %c0_i32_0 : i32, i32
  }
  func.func @transform_2(%arg0: i32) -> (i32, i32) {
    %c0_i32 = arith.constant 0 : i32
    %c0_i32_0 = arith.constant 0 : i32
    return %arg0, %c0_i32 : i32, i32
  }
  func.func @transform_3(%arg0: i32) -> (i32, i32, i32) {
    %c0_i32 = arith.constant 0 : i32
    %c0_i32_0 = arith.constant 0 : i32
    %c0_i32_1 = arith.constant 0 : i32
    return %arg0, %c0_i32, %c0_i32_0 : i32, i32, i32
  }
}

module attributes {stable_mosaic.version = 11 : i64} {
  func.func @kernel(%arg0: i32, %arg1: memref<256x128xf32, #tpu.memory_space<vmem>>, %arg2: memref<1x128xf32, #tpu.memory_space<vmem>>, %arg3: memref<1x128xf32, #tpu.memory_space<vmem>>, %arg4: memref<128x128xbf16, #tpu.memory_space<vmem>>, %arg5: memref<256x128xf32, #tpu.memory_space<vmem>>, %arg6: memref<1x8x128xf32, #tpu.memory_space<vmem>>) attributes {dimension_semantics = [#tpu.dimension_semantics<parallel>], iteration_bounds = array<i64: 2>, scalar_prefetch = 0 : i64, scratch_operands = 0 : i64, tpu.core_type = #tpu.core_type<tc>, window_params = [{transform_indices = @transform_0, window_bounds = array<i64: 256, 128>}, {pipeline_mode = #tpu.pipeline_mode<synchronous>, transform_indices = @transform_1, window_bounds = array<i64: 1, 128>}, {pipeline_mode = #tpu.pipeline_mode<synchronous>, transform_indices = @transform_2, window_bounds = array<i64: 1, 128>}, {pipeline_mode = #tpu.pipeline_mode<synchronous>, transform_indices = @transform_3, window_bounds = array<i64: 128, 128>}, {transform_indices = @transform_4, window_bounds = array<i64: 256, 128>}, {transform_indices = @transform_5, window_bounds = array<i64: 1, 8, 128>}]} {
    %c0 = arith.constant 0 : index
    %c0_0 = arith.constant 0 : index
    %0 = vector.load %arg1[%c0, %c0_0] : memref<256x128xf32, #tpu.memory_space<vmem>>, vector<256x128xf32>
    %c0_1 = arith.constant 0 : index
    %c0_2 = arith.constant 0 : index
    %1 = vector.load %arg2[%c0_1, %c0_2] : memref<1x128xf32, #tpu.memory_space<vmem>>, vector<1x128xf32>
    %2 = vector.broadcast %1 : vector<1x128xf32> to vector<256x128xf32>
    %3 = arith.mulf %0, %2 : vector<256x128xf32>
    %c0_3 = arith.constant 0 : index
    %c0_4 = arith.constant 0 : index
    %4 = vector.load %arg3[%c0_3, %c0_4] : memref<1x128xf32, #tpu.memory_space<vmem>>, vector<1x128xf32>
    %5 = vector.broadcast %4 : vector<1x128xf32> to vector<256x128xf32>
    %6 = arith.addf %3, %5 : vector<256x128xf32>
    %cst = arith.constant 0.000000e+00 : f32
    %7 = vector.broadcast %cst : f32 to vector<256x128xf32>
    %8 = arith.maximumf %6, %7 : vector<256x128xf32>
    %9 = arith.truncf %8 : vector<256x128xf32> to vector<256x128xbf16>
    %c0_5 = arith.constant 0 : index
    %c0_6 = arith.constant 0 : index
    %10 = vector.load %arg4[%c0_5, %c0_6] : memref<128x128xbf16, #tpu.memory_space<vmem>>, vector<128x128xbf16>
    %cst_7 = arith.constant dense<0.000000e+00> : vector<256x128xf32>
    %11 = tpu.matmul %9, %10, %cst_7 {dimension_numbers = #tpu.dot_dimension_numbers<[1], [0], [0], [1], [0, 0, 1, 1], [], []>} : vector<256x128xbf16>, vector<128x128xbf16>, vector<256x128xf32> -> vector<256x128xf32>
    %c0_8 = arith.constant 0 : index
    %c0_9 = arith.constant 0 : index
    %12 = vector.load %arg5[%c0_8, %c0_9] : memref<256x128xf32, #tpu.memory_space<vmem>>, vector<256x128xf32>
    tpu.vector_store %arg5[%c0_8, %c0_9], %11 {strides = array<i32>} : memref<256x128xf32, #tpu.memory_space<vmem>>, vector<256x128xf32>,
    %cst_10 = arith.constant dense<0.000000e+00> : vector<128xf32>
    %13 = vector.multi_reduction <add>, %11, %cst_10 [0] : vector<256x128xf32> to vector<128xf32>
    %14 = vector.shape_cast %13 : vector<128xf32> to vector<1x128xf32>
    %15 = arith.mulf %11, %11 : vector<256x128xf32>
    %cst_11 = arith.constant dense<0.000000e+00> : vector<128xf32>
    %16 = vector.multi_reduction <add>, %15, %cst_11 [0] : vector<256x128xf32> to vector<128xf32>
    %17 = vector.shape_cast %16 : vector<128xf32> to vector<1x128xf32>
    %cst_12 = arith.constant 0.000000e+00 : f32
    %18 = vector.broadcast %cst_12 : f32 to vector<6x128xf32>
    %19 = tpu.concatenate %14, %17, %18 in 0 : vector<1x128xf32>, vector<1x128xf32>, vector<6x128xf32> -> vector<8x128xf32>
    %20 = vector.shape_cast %19 : vector<8x128xf32> to vector<1x8x128xf32>
    %c0_13 = arith.constant 0 : index
    %c0_14 = arith.constant 0 : index
    %c0_15 = arith.constant 0 : index
    %21 = vector.load %arg6[%c0_13, %c0_14, %c0_15] : memref<1x8x128xf32, #tpu.memory_space<vmem>>, vector<1x8x128xf32>
    tpu.vector_store %arg6[%c0_13, %c0_14, %c0_15], %20 {strides = array<i32>} : memref<1x8x128xf32, #tpu.memory_space<vmem>>, vector<1x8x128xf32>,
    return
  }
  func.func @transform_0(%arg0: i32) -> (i32, i32) {
    %c0_i32 = arith.constant 0 : i32
    %c0_i32_0 = arith.constant 0 : i32
    return %arg0, %c0_i32 : i32, i32
  }
  func.func @transform_1(%arg0: i32) -> (i32, i32) {
    %c0_i32 = arith.constant 0 : i32
    %c0_i32_0 = arith.constant 0 : i32
    %c0_i32_1 = arith.constant 0 : i32
    return %c0_i32, %c0_i32_0 : i32, i32
  }
  func.func @transform_2(%arg0: i32) -> (i32, i32) {
    %c0_i32 = arith.constant 0 : i32
    %c0_i32_0 = arith.constant 0 : i32
    %c0_i32_1 = arith.constant 0 : i32
    return %c0_i32, %c0_i32_0 : i32, i32
  }
  func.func @transform_3(%arg0: i32) -> (i32, i32) {
    %c0_i32 = arith.constant 0 : i32
    %c0_i32_0 = arith.constant 0 : i32
    %c0_i32_1 = arith.constant 0 : i32
    return %c0_i32, %c0_i32_0 : i32, i32
  }
  func.func @transform_4(%arg0: i32) -> (i32, i32) {
    %c0_i32 = arith.constant 0 : i32
    %c0_i32_0 = arith.constant 0 : i32
    return %arg0, %c0_i32 : i32, i32
  }
  func.func @transform_5(%arg0: i32) -> (i32, i32, i32) {
    %c0_i32 = arith.constant 0 : i32
    %c0_i32_0 = arith.constant 0 : i32
    %c0_i32_1 = arith.constant 0 : i32
    return %arg0, %c0_i32, %c0_i32_0 : i32, i32, i32
  }
}

module attributes {stable_mosaic.version = 11 : i64} {
  func.func @_residual_proj_kernel(%arg0: i32, %arg1: memref<256x128xf32, #tpu.memory_space<vmem>>, %arg2: memref<1x128xf32, #tpu.memory_space<vmem>>, %arg3: memref<1x128xf32, #tpu.memory_space<vmem>>, %arg4: memref<256x128xf32, #tpu.memory_space<vmem>>, %arg5: memref<1x128xf32, #tpu.memory_space<vmem>>, %arg6: memref<1x128xf32, #tpu.memory_space<vmem>>, %arg7: memref<256x128xf32, #tpu.memory_space<vmem>>) attributes {dimension_semantics = [#tpu.dimension_semantics<parallel>], iteration_bounds = array<i64: 2>, scalar_prefetch = 0 : i64, scratch_operands = 0 : i64, tpu.core_type = #tpu.core_type<tc>, window_params = [{transform_indices = @transform_0, window_bounds = array<i64: 256, 128>}, {pipeline_mode = #tpu.pipeline_mode<synchronous>, transform_indices = @transform_1, window_bounds = array<i64: 1, 128>}, {pipeline_mode = #tpu.pipeline_mode<synchronous>, transform_indices = @transform_2, window_bounds = array<i64: 1, 128>}, {transform_indices = @transform_3, window_bounds = array<i64: 256, 128>}, {pipeline_mode = #tpu.pipeline_mode<synchronous>, transform_indices = @transform_4, window_bounds = array<i64: 1, 128>}, {pipeline_mode = #tpu.pipeline_mode<synchronous>, transform_indices = @transform_5, window_bounds = array<i64: 1, 128>}, {transform_indices = @transform_6, window_bounds = array<i64: 256, 128>}]} {
    %c0 = arith.constant 0 : index
    %c0_0 = arith.constant 0 : index
    %0 = vector.load %arg1[%c0, %c0_0] : memref<256x128xf32, #tpu.memory_space<vmem>>, vector<256x128xf32>
    %c0_1 = arith.constant 0 : index
    %c0_2 = arith.constant 0 : index
    %1 = vector.load %arg2[%c0_1, %c0_2] : memref<1x128xf32, #tpu.memory_space<vmem>>, vector<1x128xf32>
    %2 = vector.broadcast %1 : vector<1x128xf32> to vector<256x128xf32>
    %3 = arith.mulf %0, %2 : vector<256x128xf32>
    %c0_3 = arith.constant 0 : index
    %c0_4 = arith.constant 0 : index
    %4 = vector.load %arg3[%c0_3, %c0_4] : memref<1x128xf32, #tpu.memory_space<vmem>>, vector<1x128xf32>
    %5 = vector.broadcast %4 : vector<1x128xf32> to vector<256x128xf32>
    %6 = arith.addf %3, %5 : vector<256x128xf32>
    %c0_5 = arith.constant 0 : index
    %c0_6 = arith.constant 0 : index
    %7 = vector.load %arg4[%c0_5, %c0_6] : memref<256x128xf32, #tpu.memory_space<vmem>>, vector<256x128xf32>
    %c0_7 = arith.constant 0 : index
    %c0_8 = arith.constant 0 : index
    %8 = vector.load %arg5[%c0_7, %c0_8] : memref<1x128xf32, #tpu.memory_space<vmem>>, vector<1x128xf32>
    %9 = vector.broadcast %8 : vector<1x128xf32> to vector<256x128xf32>
    %10 = arith.mulf %7, %9 : vector<256x128xf32>
    %11 = arith.addf %6, %10 : vector<256x128xf32>
    %c0_9 = arith.constant 0 : index
    %c0_10 = arith.constant 0 : index
    %12 = vector.load %arg6[%c0_9, %c0_10] : memref<1x128xf32, #tpu.memory_space<vmem>>, vector<1x128xf32>
    %13 = vector.broadcast %12 : vector<1x128xf32> to vector<256x128xf32>
    %14 = arith.addf %11, %13 : vector<256x128xf32>
    %cst = arith.constant 0.000000e+00 : f32
    %15 = vector.broadcast %cst : f32 to vector<256x128xf32>
    %16 = arith.maximumf %14, %15 : vector<256x128xf32>
    %c0_11 = arith.constant 0 : index
    %c0_12 = arith.constant 0 : index
    %17 = vector.load %arg7[%c0_11, %c0_12] : memref<256x128xf32, #tpu.memory_space<vmem>>, vector<256x128xf32>
    tpu.vector_store %arg7[%c0_11, %c0_12], %16 {strides = array<i32>} : memref<256x128xf32, #tpu.memory_space<vmem>>, vector<256x128xf32>,
    return
  }
  func.func @transform_0(%arg0: i32) -> (i32, i32) {
    %c0_i32 = arith.constant 0 : i32
    %c0_i32_0 = arith.constant 0 : i32
    return %arg0, %c0_i32 : i32, i32
  }
  func.func @transform_1(%arg0: i32) -> (i32, i32) {
    %c0_i32 = arith.constant 0 : i32
    %c0_i32_0 = arith.constant 0 : i32
    %c0_i32_1 = arith.constant 0 : i32
    return %c0_i32, %c0_i32_0 : i32, i32
  }
  func.func @transform_2(%arg0: i32) -> (i32, i32) {
    %c0_i32 = arith.constant 0 : i32
    %c0_i32_0 = arith.constant 0 : i32
    %c0_i32_1 = arith.constant 0 : i32
    return %c0_i32, %c0_i32_0 : i32, i32
  }
  func.func @transform_3(%arg0: i32) -> (i32, i32) {
    %c0_i32 = arith.constant 0 : i32
    %c0_i32_0 = arith.constant 0 : i32
    return %arg0, %c0_i32 : i32, i32
  }
  func.func @transform_4(%arg0: i32) -> (i32, i32) {
    %c0_i32 = arith.constant 0 : i32
    %c0_i32_0 = arith.constant 0 : i32
    %c0_i32_1 = arith.constant 0 : i32
    return %c0_i32, %c0_i32_0 : i32, i32
  }
  func.func @transform_5(%arg0: i32) -> (i32, i32) {
    %c0_i32 = arith.constant 0 : i32
    %c0_i32_0 = arith.constant 0 : i32
    %c0_i32_1 = arith.constant 0 : i32
    return %c0_i32, %c0_i32_0 : i32, i32
  }
  func.func @transform_6(%arg0: i32) -> (i32, i32) {
    %c0_i32 = arith.constant 0 : i32
    %c0_i32_0 = arith.constant 0 : i32
    return %arg0, %c0_i32 : i32, i32
  }
}

</mosaic_0001>

<llo_original>
// kernel: _bottleneck_impl.7
$region0: #{_bottleneck_impl.7}
  #allocation0 [shape = 'u32[]', space=smem, size = 0x4, offset = 0x4, fixed_abs, tag = 'smem constant byte address 0x4 - core index']
  #allocation1 [shape = 'u32[144,128]{1,0:T(1,128)}', space=vmem, size = 0x12000, scoped, tag = 'internal scratch']
  %s0 = inlined_call_operand.vmem [shape: f32[512,128], index: 0, kind: input, shape index: {}]
  %s1 = inlined_call_operand.vmem [shape: f32[1,128], index: 1, kind: input, shape index: {}]
  %s2 = inlined_call_operand.vmem [shape: f32[1,128], index: 2, kind: input, shape index: {}]
  %s3 = inlined_call_operand.vmem [shape: bf16[512,128], index: 3, kind: output, shape index: {}]
  %s4 = sld [smem:[#allocation0]]
  $region45: #{_bottleneck_impl.7} parent=0
    _
  %s6 = ssub.s32 1, %s4
  %s7 = scalar_select 0, %s6, %s4
  loop: start=0, step=1, limit=4
  $region2: #{_bottleneck_impl.7} parent=0 // loop_pre_header
    _
  $region3: #{_bottleneck_impl.7} parent=0 // loop_header
    %s9 = sphi 0, %s13
    %p10 = scmp.ge.s32.totalorder %s9, 4
    %s19 = sphi 0, %s21
    %s22 = sphi 0, %s19
    %s23 = sphi 0, %s22
    %s39 = sphi 0, %s23
    %s43 = sphi 0, %s43
    %s45 = sphi 0, %s43
    %s46 = sphi 0, %s45
    %s60 = sphi 0, %s46
    %s64 = sphi 0, %s64
    %s66 = sphi 0, %s64
    %s67 = sphi 0, %s66
    %s81 = sphi 0, %s67
    %s87 = sphi 0, %s89
    %s90 = sphi 0, %s87
    %s91 = sphi 0, %s90
    %s107 = sphi 0, %s91
  $region4: #{_bottleneck_impl.7} parent=0 // loop_header_branch
    %12 = sbr.rel (%p10) target = $region8
  $region5: #{_bottleneck_impl.7} parent=0 // loop_body
    %s14 = ssub.s32 %s9, 1
    %s15 = ssub.s32 %s9, 2
    %s16 = sadd.s32 %s9, 1
    %s17 = ssub.s32 %s9, %s16
    %p18 = scmp.eq.s32.totalorder %s17, 0
    %s20 = sadd.s32 %s19, 1
    %s21 = scalar_select %p18, %s19, %s20
    %p24 = pneg %p18
    %p25 = scmp.eq.s32.totalorder %s9, 1
    %p26 = por %p24, %p25
    %p27 = scmp.ne.s32.totalorder %s19, %s22
    %p28 = scmp.eq.s32.totalorder %s9, 0
    %p29 = por %p27, %p28
    %p30 = scmp.ne.s32.totalorder %s19, %s22
    %p31 = scmp.eq.s32.totalorder %s14, 1
    %p32 = por %p30, %p31
    %p33 = scmp.ne.s32.totalorder %s22, %s23
    %p34 = scmp.eq.s32.totalorder %s14, 0
    %p35 = por %p33, %p34
    %p36 = scmp.ne.s32.totalorder %s22, %s23
    %p37 = scmp.eq.s32.totalorder %s15, 1
    %p38 = por %p36, %p37
    %p40 = scmp.ne.s32.totalorder %s23, %s39
    %p41 = scmp.eq.s32.totalorder %s15, 0
    %p42 = por %p40, %p41
    %s44 = sadd.s32 %s43, 1
    %p47 = scmp.eq.s32.totalorder %s9, 1
    %p48 = scmp.ne.s32.totalorder %s43, %s45
    %p49 = scmp.eq.s32.totalorder %s9, 0
    %p50 = por %p48, %p49
    %p51 = scmp.ne.s32.totalorder %s43, %s45
    %p52 = scmp.eq.s32.totalorder %s14, 1
    %p53 = por %p51, %p52
    %p54 = scmp.ne.s32.totalorder %s45, %s46
    %p55 = scmp.eq.s32.totalorder %s14, 0
    %p56 = por %p54, %p55
    %p57 = scmp.ne.s32.totalorder %s45, %s46
    %p58 = scmp.eq.s32.totalorder %s15, 1
    %p59 = por %p57, %p58
    %p61 = scmp.ne.s32.totalorder %s46, %s60
    %p62 = scmp.eq.s32.totalorder %s15, 0
    %p63 = por %p61, %p62
    %s65 = sadd.s32 %s64, 1
    %p68 = scmp.eq.s32.totalorder %s9, 1
    %p69 = scmp.ne.s32.totalorder %s64, %s66
    %p70 = scmp.eq.s32.totalorder %s9, 0
    %p71 = por %p69, %p70
    %p72 = scmp.ne.s32.totalorder %s64, %s66
    %p73 = scmp.eq.s32.totalorder %s14, 1
    %p74 = por %p72, %p73
    %p75 = scmp.ne.s32.totalorder %s66, %s67
    %p76 = scmp.eq.s32.totalorder %s14, 0
    %p77 = por %p75, %p76
    %p78 = scmp.ne.s32.totalorder %s66, %s67
    %p79 = scmp.eq.s32.totalorder %s15, 1
    %p80 = por %p78, %p79
    %p82 = scmp.ne.s32.totalorder %s67, %s81
    %p83 = scmp.eq.s32.totalorder %s15, 0
    %p84 = por %p82, %p83
    %s85 = ssub.s32 %s9, %s16
    %p86 = scmp.eq.s32.totalorder %s85, 0
    %s88 = sadd.s32 %s87, 1
    %s89 = scalar_select %p86, %s87, %s88
    %p92 = pneg %p86
    %p93 = scmp.eq.s32.totalorder %s9, 1
    %p94 = por %p92, %p93
    %p95 = scmp.ne.s32.totalorder %s87, %s90
    %p96 = scmp.eq.s32.totalorder %s9, 0
    %p97 = por %p95, %p96
    %p98 = scmp.ne.s32.totalorder %s87, %s90
    %p99 = scmp.eq.s32.totalorder %s14, 1
    %p100 = por %p98, %p99
    %p101 = scmp.ne.s32.totalorder %s90, %s91
    %p102 = scmp.eq.s32.totalorder %s14, 0
    %p103 = por %p101, %p102
    %p104 = scmp.ne.s32.totalorder %s90, %s91
    %p105 = scmp.eq.s32.totalorder %s15, 1
    %p106 = por %p104, %p105
    %p108 = scmp.ne.s32.totalorder %s91, %s107
    %p109 = scmp.eq.s32.totalorder %s15, 0
    %p110 = por %p108, %p109
    %p111 = scmp.le.s32.totalorder 1, %s9
    %p112 = scmp.lt.s32.totalorder %s9, 3
    %p113 = pnand %p111, %p112
    %p114 = pneg %p113
    // Predicated region
    $region9: #{_bottleneck_impl.7} parent=5 // pred_check
      _
    $region10: #{_bottleneck_impl.7} parent=5 // pred_check_branch
      %116 = sbr.rel (%p113) target = $region12
    $region11: #{_bottleneck_impl.7} parent=5 // pred_region
      %s117 = ssub.s32 %s9, 1
      // Predicated region
      $region13: #{_bottleneck_impl.7} parent=11 // pred_check
        %p118 = pneg %p56
      $region14: #{_bottleneck_impl.7} parent=11 // pred_check_branch
        %120 = sbr.rel (%p118) target = $region16
      $region15: #{_bottleneck_impl.7} parent=11 // pred_region
        _
      $region16: #{_bottleneck_impl.7} parent=11 // pred_fallthru
        _
      // Predicated region
      $region17: #{_bottleneck_impl.7} parent=11 // pred_check
        %p121 = pneg %p77
      $region18: #{_bottleneck_impl.7} parent=11 // pred_check_branch
        %123 = sbr.rel (%p121) target = $region20
      $region19: #{_bottleneck_impl.7} parent=11 // pred_region
        _
      $region20: #{_bottleneck_impl.7} parent=11 // pred_fallthru
        _
    $region12: #{_bottleneck_impl.7} parent=5 // pred_fallthru
      _
    %p124 = scmp.lt.s32.totalorder %s9, 2
    // Predicated region
    $region21: #{_bottleneck_impl.7} parent=5 // pred_check
      %p125 = pneg %p124
    $region22: #{_bottleneck_impl.7} parent=5 // pred_check_branch
      %127 = sbr.rel (%p125) target = $region24
    $region23: #{_bottleneck_impl.7} parent=5 // pred_region
      // Predicated region
      $region25: #{_bottleneck_impl.7} parent=23 // pred_check
        %p128 = pneg %p29
      $region26: #{_bottleneck_impl.7} parent=23 // pred_check_branch
        %130 = sbr.rel (%p128) target = $region28
      $region27: #{_bottleneck_impl.7} parent=23 // pred_region
        %s131 = smul.u32 32, %s9
        %p132 = scmp.lt.s32.totalorder %s131, 63
        %s133 = scalar_select %p132, %s131, 63
        %s134 = smul.addr %s133, 8
        %s135 = scalar_lea.vmem %s0, %s134
        %s136 = smul.u32 32, %s9
      $region28: #{_bottleneck_impl.7} parent=23 // pred_fallthru
        _
    $region24: #{_bottleneck_impl.7} parent=5 // pred_fallthru
      _
    %p137 = scmp.le.s32.totalorder 1, %s9
    %p138 = scmp.lt.s32.totalorder %s9, 3
    %p139 = pnand %p137, %p138
    %p140 = pneg %p139
    // Predicated region
    $region29: #{_bottleneck_impl.7} parent=5 // pred_check
      _
    $region30: #{_bottleneck_impl.7} parent=5 // pred_check_branch
      %142 = sbr.rel (%p139) target = $region32
    $region31: #{_bottleneck_impl.7} parent=5 // pred_region
      %s143 = ssub.s32 %s9, 1
      %s144 = smul.u32 32, %s14
      %p145 = scmp.lt.s32.totalorder %s144, 63
      %s146 = scalar_select %p145, %s144, 63
      %s147 = smul.addr %s146, 8
      %s148 = scalar_lea.vmem %s0, %s147
      %p149 = pneg %p35
      %p150 = pneg %p32
      %p151 = pneg %p56
      %p152 = pneg %p53
      %p153 = pneg %p77
      %p154 = pneg %p74
      %p155 = pneg %p103
      %p156 = pneg %p100
      %s157 = smul.u32 32, %s14
      %p158 = scmp.lt.s32.totalorder %s157, 63
      %s159 = scalar_select %p158, %s157, 63
      %s160 = smul.addr %s159, 4
      %s161 = scalar_lea.vmem %s3, %s160
      %s162 = smul.u32 32, %s14
      %p163 = scmp.lt.s32.totalorder %s162, 63
      %s164 = scalar_select %p163, %s162, 63
      %s165 = smul.addr %s164, 8
      %s166 = scalar_lea.vmem %s0, %s165
      %s167 = smul.u32 32, %s14
      %s168 = smul.u32 32, %s14
      %p169 = scmp.lt.s32.totalorder %s168, 63
      %s170 = scalar_select %p169, %s168, 63
      %s171 = smul.addr %s170, 4
      %s172 = scalar_lea.vmem %s3, %s171
      %s173 = smul.u32 32, %s14
      %v174 = vld [vmem:[%s166] sm:$0xff]
      %v175 = vld [vmem:[%s166 + $0x8] sm:$0xff]
      %v176 = vld [vmem:[%s166 + $0x10] sm:$0xff]
      %v177 = vld [vmem:[%s166 + $0x18] sm:$0xff]
      %v178 = vld [vmem:[%s166 + $0x20] sm:$0xff]
      %v179 = vld [vmem:[%s166 + $0x28] sm:$0xff]
      %v180 = vld [vmem:[%s166 + $0x30] sm:$0xff]
      %v181 = vld [vmem:[%s166 + $0x38] sm:$0xff]
      %v182 = vld [vmem:[%s166 + $0x40] sm:$0xff]
      %v183 = vld [vmem:[%s166 + $0x48] sm:$0xff]
      %v184 = vld [vmem:[%s166 + $0x50] sm:$0xff]
      %v185 = vld [vmem:[%s166 + $0x58] sm:$0xff]
      %v186 = vld [vmem:[%s166 + $0x60] sm:$0xff]
      %v187 = vld [vmem:[%s166 + $0x68] sm:$0xff]
      %v188 = vld [vmem:[%s166 + $0x70] sm:$0xff]
      %v189 = vld [vmem:[%s166 + $0x78] sm:$0xff]
      %v190 = vld [vmem:[%s166 + $0x80] sm:$0xff]
      %v191 = vld [vmem:[%s166 + $0x88] sm:$0xff]
      %v192 = vld [vmem:[%s166 + $0x90] sm:$0xff]
      %v193 = vld [vmem:[%s166 + $0x98] sm:$0xff]
      %v194 = vld [vmem:[%s166 + $0xa0] sm:$0xff]
      %v195 = vld [vmem:[%s166 + $0xa8] sm:$0xff]
      %v196 = vld [vmem:[%s166 + $0xb0] sm:$0xff]
      %v197 = vld [vmem:[%s166 + $0xb8] sm:$0xff]
      %v198 = vld [vmem:[%s166 + $0xc0] sm:$0xff]
      %v199 = vld [vmem:[%s166 + $0xc8] sm:$0xff]
      %v200 = vld [vmem:[%s166 + $0xd0] sm:$0xff]
      %v201 = vld [vmem:[%s166 + $0xd8] sm:$0xff]
      %v202 = vld [vmem:[%s166 + $0xe0] sm:$0xff]
      %v203 = vld [vmem:[%s166 + $0xe8] sm:$0xff]
      %v204 = vld [vmem:[%s166 + $0xf0] sm:$0xff]
      %v205 = vld [vmem:[%s166 + $0xf8] sm:$0xff]
      %v206 = vld [vmem:[%s1] sm:$0x1]
      %v208 = vlaneseq
      %v209 = vshrl.u32 %v208, 7
      %v210 = vsub.s32 0, %v209
      %v211 = vrot.slane %v206, %v210
      %v213 = vmul.f32 %v174, %v211
      %v214 = vmul.f32 %v175, %v211
      %v215 = vmul.f32 %v176, %v211
      %v216 = vmul.f32 %v177, %v211
      %v217 = vmul.f32 %v178, %v211
      %v218 = vmul.f32 %v179, %v211
      %v219 = vmul.f32 %v180, %v211
      %v220 = vmul.f32 %v181, %v211
      %v221 = vmul.f32 %v182, %v211
      %v222 = vmul.f32 %v183, %v211
      %v223 = vmul.f32 %v184, %v211
      %v224 = vmul.f32 %v185, %v211
      %v225 = vmul.f32 %v186, %v211
      %v226 = vmul.f32 %v187, %v211
      %v227 = vmul.f32 %v188, %v211
      %v228 = vmul.f32 %v189, %v211
      %v229 = vmul.f32 %v190, %v211
      %v230 = vmul.f32 %v191, %v211
      %v231 = vmul.f32 %v192, %v211
      %v232 = vmul.f32 %v193, %v211
      %v233 = vmul.f32 %v194, %v211
      %v234 = vmul.f32 %v195, %v211
      %v235 = vmul.f32 %v196, %v211
      %v236 = vmul.f32 %v197, %v211
      %v237 = vmul.f32 %v198, %v211
      %v238 = vmul.f32 %v199, %v211
      %v239 = vmul.f32 %v200, %v211
      %v240 = vmul.f32 %v201, %v211
      %v241 = vmul.f32 %v202, %v211
      %v242 = vmul.f32 %v203, %v211
      %v243 = vmul.f32 %v204, %v211
      %v244 = vmul.f32 %v205, %v211
      %v245 = vld [vmem:[%s2] sm:$0x1]
      %v247 = vlaneseq
      %v248 = vshrl.u32 %v247, 7
      %v249 = vsub.s32 0, %v248
      %v250 = vrot.slane %v245, %v249
      %v252 = vadd.f32 %v213, %v250
      %v253 = vadd.f32 %v214, %v250
      %v254 = vadd.f32 %v215, %v250
      %v255 = vadd.f32 %v216, %v250
      %v256 = vadd.f32 %v217, %v250
      %v257 = vadd.f32 %v218, %v250
      %v258 = vadd.f32 %v219, %v250
      %v259 = vadd.f32 %v220, %v250
      %v260 = vadd.f32 %v221, %v250
      %v261 = vadd.f32 %v222, %v250
      %v262 = vadd.f32 %v223, %v250
      %v263 = vadd.f32 %v224, %v250
      %v264 = vadd.f32 %v225, %v250
      %v265 = vadd.f32 %v226, %v250
      %v266 = vadd.f32 %v227, %v250
      %v267 = vadd.f32 %v228, %v250
      %v268 = vadd.f32 %v229, %v250
      %v269 = vadd.f32 %v230, %v250
      %v270 = vadd.f32 %v231, %v250
      %v271 = vadd.f32 %v232, %v250
      %v272 = vadd.f32 %v233, %v250
      %v273 = vadd.f32 %v234, %v250
      %v274 = vadd.f32 %v235, %v250
      %v275 = vadd.f32 %v236, %v250
      %v276 = vadd.f32 %v237, %v250
      %v277 = vadd.f32 %v238, %v250
      %v278 = vadd.f32 %v239, %v250
      %v279 = vadd.f32 %v240, %v250
      %v280 = vadd.f32 %v241, %v250
      %v281 = vadd.f32 %v242, %v250
      %v282 = vadd.f32 %v243, %v250
      %v283 = vadd.f32 %v244, %v250
      %v284 = vmax.f32 %v252, 0.0
      %v285 = vmax.f32 %v253, 0.0
      %v286 = vmax.f32 %v254, 0.0
      %v287 = vmax.f32 %v255, 0.0
      %v288 = vmax.f32 %v256, 0.0
      %v289 = vmax.f32 %v257, 0.0
      %v290 = vmax.f32 %v258, 0.0
      %v291 = vmax.f32 %v259, 0.0
      %v292 = vmax.f32 %v260, 0.0
      %v293 = vmax.f32 %v261, 0.0
      %v294 = vmax.f32 %v262, 0.0
      %v295 = vmax.f32 %v263, 0.0
      %v296 = vmax.f32 %v264, 0.0
      %v297 = vmax.f32 %v265, 0.0
      %v298 = vmax.f32 %v266, 0.0
      %v299 = vmax.f32 %v267, 0.0
      %v300 = vmax.f32 %v268, 0.0
      %v301 = vmax.f32 %v269, 0.0
      %v302 = vmax.f32 %v270, 0.0
      %v303 = vmax.f32 %v271, 0.0
      %v304 = vmax.f32 %v272, 0.0
      %v305 = vmax.f32 %v273, 0.0
      %v306 = vmax.f32 %v274, 0.0
      %v307 = vmax.f32 %v275, 0.0
      %v308 = vmax.f32 %v276, 0.0
      %v309 = vmax.f32 %v277, 0.0
      %v310 = vmax.f32 %v278, 0.0
      %v311 = vmax.f32 %v279, 0.0
      %v312 = vmax.f32 %v280, 0.0
      %v313 = vmax.f32 %v281, 0.0
      %v314 = vmax.f32 %v282, 0.0
      %v315 = vmax.f32 %v283, 0.0
      %v316 = vpack.c.bf16 %v285, %v284
      %v317 = vpack.c.bf16 %v287, %v286
      %v318 = vpack.c.bf16 %v289, %v288
      %v319 = vpack.c.bf16 %v291, %v290
      %v320 = vpack.c.bf16 %v293, %v292
      %v321 = vpack.c.bf16 %v295, %v294
      %v322 = vpack.c.bf16 %v297, %v296
      %v323 = vpack.c.bf16 %v299, %v298
      %v324 = vpack.c.bf16 %v301, %v300
      %v325 = vpack.c.bf16 %v303, %v302
      %v326 = vpack.c.bf16 %v305, %v304
      %v327 = vpack.c.bf16 %v307, %v306
      %v328 = vpack.c.bf16 %v309, %v308
      %v329 = vpack.c.bf16 %v311, %v310
      %v330 = vpack.c.bf16 %v313, %v312
      %v331 = vpack.c.bf16 %v315, %v314
      %v348 = vunpack.c.l.b16 %v316
      %v349 = vunpack.c.h.b16 %v316
      %v350 = vunpack.c.l.b16 %v317
      %v351 = vunpack.c.h.b16 %v317
      %v352 = vunpack.c.l.b16 %v318
      %v353 = vunpack.c.h.b16 %v318
      %v354 = vunpack.c.l.b16 %v319
      %v355 = vunpack.c.h.b16 %v319
      %v356 = vunpack.c.l.b16 %v320
      %v357 = vunpack.c.h.b16 %v320
      %v358 = vunpack.c.l.b16 %v321
      %v359 = vunpack.c.h.b16 %v321
      %v360 = vunpack.c.l.b16 %v322
      %v361 = vunpack.c.h.b16 %v322
      %v362 = vunpack.c.l.b16 %v323
      %v363 = vunpack.c.h.b16 %v323
      %v364 = vunpack.c.l.b16 %v324
      %v365 = vunpack.c.h.b16 %v324
      %v366 = vunpack.c.l.b16 %v325
      %v367 = vunpack.c.h.b16 %v325
      %v368 = vunpack.c.l.b16 %v326
      %v369 = vunpack.c.h.b16 %v326
      %v370 = vunpack.c.l.b16 %v327
      %v371 = vunpack.c.h.b16 %v327
      %v372 = vunpack.c.l.b16 %v328
      %v373 = vunpack.c.h.b16 %v328
      %v374 = vunpack.c.l.b16 %v329
      %v375 = vunpack.c.h.b16 %v329
      %v376 = vunpack.c.l.b16 %v330
      %v377 = vunpack.c.h.b16 %v330
      %v378 = vunpack.c.l.b16 %v331
      %v379 = vunpack.c.h.b16 %v331
      %v380 = vpack.c.b16 %v348, %v348
      %v381 = vpack.c.b16 %v349, %v349
      %v382 = vpack.c.b16 %v350, %v350
      %v383 = vpack.c.b16 %v351, %v351
      %v384 = vpack.c.b16 %v352, %v352
      %v385 = vpack.c.b16 %v353, %v353
      %v386 = vpack.c.b16 %v354, %v354
      %v387 = vpack.c.b16 %v355, %v355
      %v388 = vpack.c.b16 %v356, %v356
      %v389 = vpack.c.b16 %v357, %v357
      %v390 = vpack.c.b16 %v358, %v358
      %v391 = vpack.c.b16 %v359, %v359
      %v392 = vpack.c.b16 %v360, %v360
      %v393 = vpack.c.b16 %v361, %v361
      %v394 = vpack.c.b16 %v362, %v362
      %v395 = vpack.c.b16 %v363, %v363
      %v396 = vpack.c.b16 %v364, %v364
      %v397 = vpack.c.b16 %v365, %v365
      %v398 = vpack.c.b16 %v366, %v366
      %v399 = vpack.c.b16 %v367, %v367
      %v400 = vpack.c.b16 %v368, %v368
      %v401 = vpack.c.b16 %v369, %v369
      %v402 = vpack.c.b16 %v370, %v370
      %v403 = vpack.c.b16 %v371, %v371
      %v404 = vpack.c.b16 %v372, %v372
      %v405 = vpack.c.b16 %v373, %v373
      %v406 = vpack.c.b16 %v374, %v374
      %v407 = vpack.c.b16 %v375, %v375
      %v408 = vpack.c.b16 %v376, %v376
      %v409 = vpack.c.b16 %v377, %v377
      %v410 = vpack.c.b16 %v378, %v378
      %v411 = vpack.c.b16 %v379, %v379
      %444 = vst [vmem:[%s172] sm:$0xf] %v380
      %445 = vst [vmem:[%s172 + $0x4] sm:$0xf] %v381
      %446 = vst [vmem:[%s172 + $0x8] sm:$0xf] %v382
      %447 = vst [vmem:[%s172 + $0xc] sm:$0xf] %v383
      %448 = vst [vmem:[%s172 + $0x10] sm:$0xf] %v384
      %449 = vst [vmem:[%s172 + $0x14] sm:$0xf] %v385
      %450 = vst [vmem:[%s172 + $0x18] sm:$0xf] %v386
      %451 = vst [vmem:[%s172 + $0x1c] sm:$0xf] %v387
      %452 = vst [vmem:[%s172 + $0x20] sm:$0xf] %v388
      %453 = vst [vmem:[%s172 + $0x24] sm:$0xf] %v389
      %454 = vst [vmem:[%s172 + $0x28] sm:$0xf] %v390
      %455 = vst [vmem:[%s172 + $0x2c] sm:$0xf] %v391
      %456 = vst [vmem:[%s172 + $0x30] sm:$0xf] %v392
      %457 = vst [vmem:[%s172 + $0x34] sm:$0xf] %v393
      %458 = vst [vmem:[%s172 + $0x38] sm:$0xf] %v394
      %459 = vst [vmem:[%s172 + $0x3c] sm:$0xf] %v395
      %460 = vst [vmem:[%s172 + $0x40] sm:$0xf] %v396
      %461 = vst [vmem:[%s172 + $0x44] sm:$0xf] %v397
      %462 = vst [vmem:[%s172 + $0x48] sm:$0xf] %v398
      %463 = vst [vmem:[%s172 + $0x4c] sm:$0xf] %v399
      %464 = vst [vmem:[%s172 + $0x50] sm:$0xf] %v400
      %465 = vst [vmem:[%s172 + $0x54] sm:$0xf] %v401
      %466 = vst [vmem:[%s172 + $0x58] sm:$0xf] %v402
      %467 = vst [vmem:[%s172 + $0x5c] sm:$0xf] %v403
      %468 = vst [vmem:[%s172 + $0x60] sm:$0xf] %v404
      %469 = vst [vmem:[%s172 + $0x64] sm:$0xf] %v405
      %470 = vst [vmem:[%s172 + $0x68] sm:$0xf] %v406
      %471 = vst [vmem:[%s172 + $0x6c] sm:$0xf] %v407
      %472 = vst [vmem:[%s172 + $0x70] sm:$0xf] %v408
      %473 = vst [vmem:[%s172 + $0x74] sm:$0xf] %v409
      %474 = vst [vmem:[%s172 + $0x78] sm:$0xf] %v410
      %475 = vst [vmem:[%s172 + $0x7c] sm:$0xf] %v411
      %s476 = smul.u32 32, %s14
      %p477 = scmp.lt.s32.totalorder %s476, 63
      %s478 = scalar_select %p477, %s476, 63
      %s479 = smul.addr %s478, 4
      %s480 = scalar_lea.vmem %s3, %s479
      // Predicated region
      $region33: #{_bottleneck_impl.7} parent=31 // pred_check
        %p481 = pneg %p100
      $region34: #{_bottleneck_impl.7} parent=31 // pred_check_branch
        %483 = sbr.rel (%p481) target = $region36
      $region35: #{_bottleneck_impl.7} parent=31 // pred_region
        %s484 = smul.u32 32, %s14
      $region36: #{_bottleneck_impl.7} parent=31 // pred_fallthru
        _
    $region32: #{_bottleneck_impl.7} parent=5 // pred_fallthru
      _
    %p485 = scmp.le.s32.totalorder 2, %s9
    // Predicated region
    $region37: #{_bottleneck_impl.7} parent=5 // pred_check
      %p486 = pneg %p485
    $region38: #{_bottleneck_impl.7} parent=5 // pred_check_branch
      %488 = sbr.rel (%p486) target = $region40
    $region39: #{_bottleneck_impl.7} parent=5 // pred_region
      %s489 = ssub.s32 %s9, 2
      // Predicated region
      $region41: #{_bottleneck_impl.7} parent=39 // pred_check
        %p490 = pneg %p106
      $region42: #{_bottleneck_impl.7} parent=39 // pred_check_branch
        %492 = sbr.rel (%p490) target = $region44
      $region43: #{_bottleneck_impl.7} parent=39 // pred_region
        %s493 = smul.u32 32, %s15
        %p494 = scmp.lt.s32.totalorder %s493, 63
        %s495 = scalar_select %p494, %s493, 63
        %s496 = smul.addr %s495, 4
        %s497 = scalar_lea.vmem %s3, %s496
      $region44: #{_bottleneck_impl.7} parent=39 // pred_fallthru
        _
    $region40: #{_bottleneck_impl.7} parent=5 // pred_fallthru
      _
  $region6: #{_bottleneck_impl.7} parent=0 // loop_footer
    %s13 = sadd.s32 1, %s9
  $region7: #{_bottleneck_impl.7} parent=0 // loop_footer_branch
    %8 = sbr.rel target = $region3
  $region8: #{_bottleneck_impl.7} parent=0 // loop_exit
    _

// kernel: _bottleneck_impl.6
$region0: #{_bottleneck_impl.6}
  #allocation0 [shape = 'u32[]', space=smem, size = 0x4, offset = 0x4, fixed_abs, tag = 'smem constant byte address 0x4 - core index']
  #allocation1 [shape = 'u32[144,128]{1,0:T(1,128)}', space=vmem, size = 0x12000, scoped, tag = 'internal scratch']
  %s0 = inlined_call_operand.vmem [shape: bf16[512,128], index: 0, kind: input, shape index: {}]
  %s1 = inlined_call_operand.vmem [shape: bf16[128,128], index: 1, kind: input, shape index: {}]
  %s2 = inlined_call_operand.vmem [shape: f32[512,128], index: 2, kind: output, shape index: {0}]
  %s3 = inlined_call_operand.vmem [shape: f32[2,8,128], index: 3, kind: output, shape index: {1}]
  %4 = xla_tuple %s2, %s3
  %s5 = sld [smem:[#allocation0]]
  $region49: #{_bottleneck_impl.6} parent=0
    _
  %s7 = ssub.s32 1, %s5
  %s8 = scalar_select 0, %s7, %s5
  loop: start=0, step=1, limit=4
  $region2: #{_bottleneck_impl.6} parent=0 // loop_pre_header
    _
  $region3: #{_bottleneck_impl.6} parent=0 // loop_header
    %s10 = sphi 0, %s14
    %p11 = scmp.ge.s32.totalorder %s10, 4
    %s20 = sphi 0, %s22
    %s23 = sphi 0, %s20
    %s24 = sphi 0, %s23
    %s40 = sphi 0, %s24
    %s44 = sphi 0, %s44
    %s46 = sphi 0, %s44
    %s47 = sphi 0, %s46
    %s61 = sphi 0, %s47
    %s67 = sphi 0, %s69
    %s70 = sphi 0, %s67
    %s71 = sphi 0, %s70
    %s87 = sphi 0, %s71
    %s93 = sphi 0, %s95
    %s96 = sphi 0, %s93
    %s97 = sphi 0, %s96
    %s113 = sphi 0, %s97
  $region4: #{_bottleneck_impl.6} parent=0 // loop_header_branch
    %13 = sbr.rel (%p11) target = $region8
  $region5: #{_bottleneck_impl.6} parent=0 // loop_body
    %s15 = ssub.s32 %s10, 1
    %s16 = ssub.s32 %s10, 2
    %s17 = sadd.s32 %s10, 1
    %s18 = ssub.s32 %s10, %s17
    %p19 = scmp.eq.s32.totalorder %s18, 0
    %s21 = sadd.s32 %s20, 1
    %s22 = scalar_select %p19, %s20, %s21
    %p25 = pneg %p19
    %p26 = scmp.eq.s32.totalorder %s10, 1
    %p27 = por %p25, %p26
    %p28 = scmp.ne.s32.totalorder %s20, %s23
    %p29 = scmp.eq.s32.totalorder %s10, 0
    %p30 = por %p28, %p29
    %p31 = scmp.ne.s32.totalorder %s20, %s23
    %p32 = scmp.eq.s32.totalorder %s15, 1
    %p33 = por %p31, %p32
    %p34 = scmp.ne.s32.totalorder %s23, %s24
    %p35 = scmp.eq.s32.totalorder %s15, 0
    %p36 = por %p34, %p35
    %p37 = scmp.ne.s32.totalorder %s23, %s24
    %p38 = scmp.eq.s32.totalorder %s16, 1
    %p39 = por %p37, %p38
    %p41 = scmp.ne.s32.totalorder %s24, %s40
    %p42 = scmp.eq.s32.totalorder %s16, 0
    %p43 = por %p41, %p42
    %s45 = sadd.s32 %s44, 1
    %p48 = scmp.eq.s32.totalorder %s10, 1
    %p49 = scmp.ne.s32.totalorder %s44, %s46
    %p50 = scmp.eq.s32.totalorder %s10, 0
    %p51 = por %p49, %p50
    %p52 = scmp.ne.s32.totalorder %s44, %s46
    %p53 = scmp.eq.s32.totalorder %s15, 1
    %p54 = por %p52, %p53
    %p55 = scmp.ne.s32.totalorder %s46, %s47
    %p56 = scmp.eq.s32.totalorder %s15, 0
    %p57 = por %p55, %p56
    %p58 = scmp.ne.s32.totalorder %s46, %s47
    %p59 = scmp.eq.s32.totalorder %s16, 1
    %p60 = por %p58, %p59
    %p62 = scmp.ne.s32.totalorder %s47, %s61
    %p63 = scmp.eq.s32.totalorder %s16, 0
    %p64 = por %p62, %p63
    %s65 = ssub.s32 %s10, %s17
    %p66 = scmp.eq.s32.totalorder %s65, 0
    %s68 = sadd.s32 %s67, 1
    %s69 = scalar_select %p66, %s67, %s68
    %p72 = pneg %p66
    %p73 = scmp.eq.s32.totalorder %s10, 1
    %p74 = por %p72, %p73
    %p75 = scmp.ne.s32.totalorder %s67, %s70
    %p76 = scmp.eq.s32.totalorder %s10, 0
    %p77 = por %p75, %p76
    %p78 = scmp.ne.s32.totalorder %s67, %s70
    %p79 = scmp.eq.s32.totalorder %s15, 1
    %p80 = por %p78, %p79
    %p81 = scmp.ne.s32.totalorder %s70, %s71
    %p82 = scmp.eq.s32.totalorder %s15, 0
    %p83 = por %p81, %p82
    %p84 = scmp.ne.s32.totalorder %s70, %s71
    %p85 = scmp.eq.s32.totalorder %s16, 1
    %p86 = por %p84, %p85
    %p88 = scmp.ne.s32.totalorder %s71, %s87
    %p89 = scmp.eq.s32.totalorder %s16, 0
    %p90 = por %p88, %p89
    %s91 = ssub.s32 %s10, %s17
    %p92 = scmp.eq.s32.totalorder %s91, 0
    %s94 = sadd.s32 %s93, 1
    %s95 = scalar_select %p92, %s93, %s94
    %p98 = pneg %p92
    %p99 = scmp.eq.s32.totalorder %s10, 1
    %p100 = por %p98, %p99
    %p101 = scmp.ne.s32.totalorder %s93, %s96
    %p102 = scmp.eq.s32.totalorder %s10, 0
    %p103 = por %p101, %p102
    %p104 = scmp.ne.s32.totalorder %s93, %s96
    %p105 = scmp.eq.s32.totalorder %s15, 1
    %p106 = por %p104, %p105
    %p107 = scmp.ne.s32.totalorder %s96, %s97
    %p108 = scmp.eq.s32.totalorder %s15, 0
    %p109 = por %p107, %p108
    %p110 = scmp.ne.s32.totalorder %s96, %s97
    %p111 = scmp.eq.s32.totalorder %s16, 1
    %p112 = por %p110, %p111
    %p114 = scmp.ne.s32.totalorder %s97, %s113
    %p115 = scmp.eq.s32.totalorder %s16, 0
    %p116 = por %p114, %p115
    %p117 = scmp.le.s32.totalorder 1, %s10
    %p118 = scmp.lt.s32.totalorder %s10, 3
    %p119 = pnand %p117, %p118
    %p120 = pneg %p119
    // Predicated region
    $region9: #{_bottleneck_impl.6} parent=5 // pred_check
      _
    $region10: #{_bottleneck_impl.6} parent=5 // pred_check_branch
      %122 = sbr.rel (%p119) target = $region12
    $region11: #{_bottleneck_impl.6} parent=5 // pred_region
      %s123 = ssub.s32 %s10, 1
      // Predicated region
      $region13: #{_bottleneck_impl.6} parent=11 // pred_check
        %p124 = pneg %p57
      $region14: #{_bottleneck_impl.6} parent=11 // pred_check_branch
        %126 = sbr.rel (%p124) target = $region16
      $region15: #{_bottleneck_impl.6} parent=11 // pred_region
        _
      $region16: #{_bottleneck_impl.6} parent=11 // pred_fallthru
        _
    $region12: #{_bottleneck_impl.6} parent=5 // pred_fallthru
      _
    %p127 = scmp.lt.s32.totalorder %s10, 2
    // Predicated region
    $region17: #{_bottleneck_impl.6} parent=5 // pred_check
      %p128 = pneg %p127
    $region18: #{_bottleneck_impl.6} parent=5 // pred_check_branch
      %130 = sbr.rel (%p128) target = $region20
    $region19: #{_bottleneck_impl.6} parent=5 // pred_region
      // Predicated region
      $region21: #{_bottleneck_impl.6} parent=19 // pred_check
        %p131 = pneg %p30
      $region22: #{_bottleneck_impl.6} parent=19 // pred_check_branch
        %133 = sbr.rel (%p131) target = $region24
      $region23: #{_bottleneck_impl.6} parent=19 // pred_region
        %s134 = smul.u32 32, %s10
        %p135 = scmp.lt.s32.totalorder %s134, 63
        %s136 = scalar_select %p135, %s134, 63
        %s137 = smul.addr %s136, 4
        %s138 = scalar_lea.vmem %s0, %s137
        %s139 = smul.u32 32, %s10
      $region24: #{_bottleneck_impl.6} parent=19 // pred_fallthru
        _
    $region20: #{_bottleneck_impl.6} parent=5 // pred_fallthru
      _
    %p140 = scmp.le.s32.totalorder 1, %s10
    %p141 = scmp.lt.s32.totalorder %s10, 3
    %p142 = pnand %p140, %p141
    %p143 = pneg %p142
    // Predicated region
    $region25: #{_bottleneck_impl.6} parent=5 // pred_check
      _
    $region26: #{_bottleneck_impl.6} parent=5 // pred_check_branch
      %145 = sbr.rel (%p142) target = $region28
    $region27: #{_bottleneck_impl.6} parent=5 // pred_region
      %s146 = ssub.s32 %s10, 1
      %s147 = smul.u32 32, %s15
      %p148 = scmp.lt.s32.totalorder %s147, 63
      %s149 = scalar_select %p148, %s147, 63
      %s150 = smul.addr %s149, 4
      %s151 = scalar_lea.vmem %s0, %s150
      %p152 = pneg %p36
      %p153 = pneg %p33
      %p154 = pneg %p57
      %p155 = pneg %p54
      %p156 = pneg %p83
      %p157 = pneg %p80
      %s158 = smul.u32 32, %s15
      %p159 = scmp.lt.s32.totalorder %s158, 63
      %s160 = scalar_select %p159, %s158, 63
      %s161 = smul.addr %s160, 8
      %s162 = scalar_lea.vmem %s2, %s161
      %p163 = pneg %p109
      %p164 = pneg %p106
      %p165 = scmp.lt.s32.totalorder %s15, 1
      %s166 = scalar_select %p165, %s15, 1
      %s167 = smul.addr %s166, 8
      %s168 = scalar_lea.vmem %s3, %s167
      %s169 = smul.u32 32, %s15
      %p170 = scmp.lt.s32.totalorder %s169, 63
      %s171 = scalar_select %p170, %s169, 63
      %s172 = smul.addr %s171, 4
      %s173 = scalar_lea.vmem %s0, %s172
      %s174 = smul.u32 32, %s15
      %s175 = smul.u32 32, %s15
      %p176 = scmp.lt.s32.totalorder %s175, 63
      %s177 = scalar_select %p176, %s175, 63
      %s178 = smul.addr %s177, 8
      %s179 = scalar_lea.vmem %s2, %s178
      %s180 = smul.u32 32, %s15
      %p181 = scmp.lt.s32.totalorder %s15, 1
      %s182 = scalar_select %p181, %s15, 1
      %s183 = smul.addr %s182, 8
      %s184 = scalar_lea.vmem %s3, %s183
      %v186 = vld [vmem:[%s173] sm:$0xf]
      %v187 = vld [vmem:[%s173 + $0x4] sm:$0xf]
      %v188 = vld [vmem:[%s173 + $0x8] sm:$0xf]
      %v189 = vld [vmem:[%s173 + $0xc] sm:$0xf]
      %v190 = vld [vmem:[%s173 + $0x10] sm:$0xf]
      %v191 = vld [vmem:[%s173 + $0x14] sm:$0xf]
      %v192 = vld [vmem:[%s173 + $0x18] sm:$0xf]
      %v193 = vld [vmem:[%s173 + $0x1c] sm:$0xf]
      %v194 = vld [vmem:[%s173 + $0x20] sm:$0xf]
      %v195 = vld [vmem:[%s173 + $0x24] sm:$0xf]
      %v196 = vld [vmem:[%s173 + $0x28] sm:$0xf]
      %v197 = vld [vmem:[%s173 + $0x2c] sm:$0xf]
      %v198 = vld [vmem:[%s173 + $0x30] sm:$0xf]
      %v199 = vld [vmem:[%s173 + $0x34] sm:$0xf]
      %v200 = vld [vmem:[%s173 + $0x38] sm:$0xf]
      %v201 = vld [vmem:[%s173 + $0x3c] sm:$0xf]
      %v202 = vld [vmem:[%s173 + $0x40] sm:$0xf]
      %v203 = vld [vmem:[%s173 + $0x44] sm:$0xf]
      %v204 = vld [vmem:[%s173 + $0x48] sm:$0xf]
      %v205 = vld [vmem:[%s173 + $0x4c] sm:$0xf]
      %v206 = vld [vmem:[%s173 + $0x50] sm:$0xf]
      %v207 = vld [vmem:[%s173 + $0x54] sm:$0xf]
      %v208 = vld [vmem:[%s173 + $0x58] sm:$0xf]
      %v209 = vld [vmem:[%s173 + $0x5c] sm:$0xf]
      %v210 = vld [vmem:[%s173 + $0x60] sm:$0xf]
      %v211 = vld [vmem:[%s173 + $0x64] sm:$0xf]
      %v212 = vld [vmem:[%s173 + $0x68] sm:$0xf]
      %v213 = vld [vmem:[%s173 + $0x6c] sm:$0xf]
      %v214 = vld [vmem:[%s173 + $0x70] sm:$0xf]
      %v215 = vld [vmem:[%s173 + $0x74] sm:$0xf]
      %v216 = vld [vmem:[%s173 + $0x78] sm:$0xf]
      %v217 = vld [vmem:[%s173 + $0x7c] sm:$0xf]
      %v218 = vld [vmem:[%s1] sm:$0xf]
      %v219 = vld [vmem:[%s1 + $0x4] sm:$0xf]
      %v220 = vld [vmem:[%s1 + $0x8] sm:$0xf]
      %v221 = vld [vmem:[%s1 + $0xc] sm:$0xf]
      %v222 = vld [vmem:[%s1 + $0x10] sm:$0xf]
      %v223 = vld [vmem:[%s1 + $0x14] sm:$0xf]
      %v224 = vld [vmem:[%s1 + $0x18] sm:$0xf]
      %v225 = vld [vmem:[%s1 + $0x1c] sm:$0xf]
      %v226 = vld [vmem:[%s1 + $0x20] sm:$0xf]
      %v227 = vld [vmem:[%s1 + $0x24] sm:$0xf]
      %v228 = vld [vmem:[%s1 + $0x28] sm:$0xf]
      %v229 = vld [vmem:[%s1 + $0x2c] sm:$0xf]
      %v230 = vld [vmem:[%s1 + $0x30] sm:$0xf]
      %v231 = vld [vmem:[%s1 + $0x34] sm:$0xf]
      %v232 = vld [vmem:[%s1 + $0x38] sm:$0xf]
      %v233 = vld [vmem:[%s1 + $0x3c] sm:$0xf]
      %v266 = vunpack.c.l.b16 %v186
      %v267 = vunpack.c.l.b16 %v187
      %v268 = vunpack.c.l.b16 %v188
      %v269 = vunpack.c.l.b16 %v189
      %v270 = vunpack.c.l.b16 %v190
      %v271 = vunpack.c.l.b16 %v191
      %v272 = vunpack.c.l.b16 %v192
      %v273 = vunpack.c.l.b16 %v193
      %v274 = vunpack.c.l.b16 %v194
      %v275 = vunpack.c.l.b16 %v195
      %v276 = vunpack.c.l.b16 %v196
      %v277 = vunpack.c.l.b16 %v197
      %v278 = vunpack.c.l.b16 %v198
      %v279 = vunpack.c.l.b16 %v199
      %v280 = vunpack.c.l.b16 %v200
      %v281 = vunpack.c.l.b16 %v201
      %v282 = vunpack.c.l.b16 %v202
      %v283 = vunpack.c.l.b16 %v203
      %v284 = vunpack.c.l.b16 %v204
      %v285 = vunpack.c.l.b16 %v205
      %v286 = vunpack.c.l.b16 %v206
      %v287 = vunpack.c.l.b16 %v207
      %v288 = vunpack.c.l.b16 %v208
      %v289 = vunpack.c.l.b16 %v209
      %v290 = vunpack.c.l.b16 %v210
      %v291 = vunpack.c.l.b16 %v211
      %v292 = vunpack.c.l.b16 %v212
      %v293 = vunpack.c.l.b16 %v213
      %v294 = vunpack.c.l.b16 %v214
      %v295 = vunpack.c.l.b16 %v215
      %v296 = vunpack.c.l.b16 %v216
      %v297 = vunpack.c.l.b16 %v217
      %v298 = vpack.c.b16 %v267, %v266
      %v299 = vpack.c.b16 %v269, %v268
      %v300 = vpack.c.b16 %v271, %v270
      %v301 = vpack.c.b16 %v273, %v272
      %v302 = vpack.c.b16 %v275, %v274
      %v303 = vpack.c.b16 %v277, %v276
      %v304 = vpack.c.b16 %v279, %v278
      %v305 = vpack.c.b16 %v281, %v280
      %v306 = vpack.c.b16 %v283, %v282
      %v307 = vpack.c.b16 %v285, %v284
      %v308 = vpack.c.b16 %v287, %v286
      %v309 = vpack.c.b16 %v289, %v288
      %v310 = vpack.c.b16 %v291, %v290
      %v311 = vpack.c.b16 %v293, %v292
      %v312 = vpack.c.b16 %v295, %v294
      %v313 = vpack.c.b16 %v297, %v296
      %v346 = vunpack.c.l.b16 %v218
      %v347 = vunpack.c.l.b16 %v219
      %v348 = vunpack.c.l.b16 %v220
      %v349 = vunpack.c.l.b16 %v221
      %v350 = vunpack.c.l.b16 %v222
      %v351 = vunpack.c.l.b16 %v223
      %v352 = vunpack.c.l.b16 %v224
      %v353 = vunpack.c.l.b16 %v225
      %v354 = vunpack.c.l.b16 %v226
      %v355 = vunpack.c.l.b16 %v227
      %v356 = vunpack.c.l.b16 %v228
      %v357 = vunpack.c.l.b16 %v229
      %v358 = vunpack.c.l.b16 %v230
      %v359 = vunpack.c.l.b16 %v231
      %v360 = vunpack.c.l.b16 %v232
      %v361 = vunpack.c.l.b16 %v233
      %v362 = vpack.c.b16 %v347, %v346
      %v363 = vpack.c.b16 %v349, %v348
      %v364 = vpack.c.b16 %v351, %v350
      %v365 = vpack.c.b16 %v353, %v352
      %v366 = vpack.c.b16 %v355, %v354
      %v367 = vpack.c.b16 %v357, %v356
      %v368 = vpack.c.b16 %v359, %v358
      %v369 = vpack.c.b16 %v361, %v360
      %378 = vmatprep.subr.bf16.mxu0 0
      %379 = vmatpush1.bf16.msra.mxu0 %v369
      %380 = vmatprep.subr.bf16.mxu0 0
      %381 = vmatpush1.bf16.msra.mxu0 %v368
      %382 = vmatprep.subr.bf16.mxu0 0
      %383 = vmatpush1.bf16.msra.mxu0 %v367
      %384 = vmatprep.subr.bf16.mxu0 0
      %385 = vmatpush1.bf16.msra.mxu0 %v366
      %386 = vmatprep.subr.bf16.mxu0 0
      %387 = vmatpush1.bf16.msra.mxu0 %v365
      %388 = vmatprep.subr.bf16.mxu0 0
      %389 = vmatpush1.bf16.msra.mxu0 %v364
      %390 = vmatprep.subr.bf16.mxu0 0
      %391 = vmatpush1.bf16.msra.mxu0 %v363
      %392 = vmatprep.subr.bf16.mxu0 0
      %393 = vmatpush1.bf16.msra.mxu0 %v362
      %394 = vmatprep.subr.bf16.mxu0 0
      %395 = vmatpush2.bf16.msra.mxu0 0
      %396 = vmatprep.subr.bf16.mxu0 0
      %397 = vmatpush2.bf16.msra.mxu0 0
      %398 = vmatprep.subr.bf16.mxu0 0
      %399 = vmatpush2.bf16.msra.mxu0 0
      %400 = vmatprep.subr.bf16.mxu0 0
      %401 = vmatpush2.bf16.msra.mxu0 0
      %402 = vmatprep.subr.bf16.mxu0 0
      %403 = vmatpush2.bf16.msra.mxu0 0
      %404 = vmatprep.subr.bf16.mxu0 0
      %405 = vmatpush2.bf16.msra.mxu0 0
      %406 = vmatprep.subr.bf16.mxu0 0
      %407 = vmatpush2.bf16.msra.mxu0 0
      %408 = vmatprep.subr.bf16.mxu0 0
      %409 = vmatpush2.bf16.msra.mxu0 0
      %410 = vmatprep.mubr.bf16.mxu0 0
      %411 = vmatmul.mubr.bf16.gmra.mxu0 %v298
      %v412 = vpop.f32.mrf.mxu0
      %v413 = vadd.f32 0.0, %v412
      %v414 = vpop.f32.mrf.mxu0
      %v415 = vpop.f32.mrf.mxu0
      %v416 = vadd.f32 0.0, %v415
      %v417 = vpop.f32.mrf.mxu0
      %418 = vmatprep.mubr.bf16.mxu0 0
      %419 = vmatmul.mubr.bf16.gmra.mxu0 %v299
      %v420 = vpop.f32.mrf.mxu0
      %v421 = vadd.f32 0.0, %v420
      %v422 = vpop.f32.mrf.mxu0
      %v423 = vpop.f32.mrf.mxu0
      %v424 = vadd.f32 0.0, %v423
      %v425 = vpop.f32.mrf.mxu0
      %426 = vmatprep.mubr.bf16.mxu0 0
      %427 = vmatmul.mubr.bf16.gmra.mxu0 %v300
      %v428 = vpop.f32.mrf.mxu0
      %v429 = vadd.f32 0.0, %v428
      %v430 = vpop.f32.mrf.mxu0
      %v431 = vpop.f32.mrf.mxu0
      %v432 = vadd.f32 0.0, %v431
      %v433 = vpop.f32.mrf.mxu0
      %434 = vmatprep.mubr.bf16.mxu0 0
      %435 = vmatmul.mubr.bf16.gmra.mxu0 %v301
      %v436 = vpop.f32.mrf.mxu0
      %v437 = vadd.f32 0.0, %v436
      %v438 = vpop.f32.mrf.mxu0
      %v439 = vpop.f32.mrf.mxu0
      %v440 = vadd.f32 0.0, %v439
      %v441 = vpop.f32.mrf.mxu0
      %442 = vmatprep.mubr.bf16.mxu0 0
      %443 = vmatmul.mubr.bf16.gmra.mxu0 %v302
      %v444 = vpop.f32.mrf.mxu0
      %v445 = vadd.f32 0.0, %v444
      %v446 = vpop.f32.mrf.mxu0
      %v447 = vpop.f32.mrf.mxu0
      %v448 = vadd.f32 0.0, %v447
      %v449 = vpop.f32.mrf.mxu0
      %450 = vmatprep.mubr.bf16.mxu0 0
      %451 = vmatmul.mubr.bf16.gmra.mxu0 %v303
      %v452 = vpop.f32.mrf.mxu0
      %v453 = vadd.f32 0.0, %v452
      %v454 = vpop.f32.mrf.mxu0
      %v455 = vpop.f32.mrf.mxu0
      %v456 = vadd.f32 0.0, %v455
      %v457 = vpop.f32.mrf.mxu0
      %458 = vmatprep.mubr.bf16.mxu0 0
      %459 = vmatmul.mubr.bf16.gmra.mxu0 %v304
      %v460 = vpop.f32.mrf.mxu0
      %v461 = vadd.f32 0.0, %v460
      %v462 = vpop.f32.mrf.mxu0
      %v463 = vpop.f32.mrf.mxu0
      %v464 = vadd.f32 0.0, %v463
      %v465 = vpop.f32.mrf.mxu0
      %466 = vmatprep.mubr.bf16.mxu0 0
      %467 = vmatmul.mubr.bf16.gmra.mxu0 %v305
      %v468 = vpop.f32.mrf.mxu0
      %v469 = vadd.f32 0.0, %v468
      %v470 = vpop.f32.mrf.mxu0
      %v471 = vpop.f32.mrf.mxu0
      %v472 = vadd.f32 0.0, %v471
      %v473 = vpop.f32.mrf.mxu0
      %474 = vmatprep.mubr.bf16.mxu0 0
      %475 = vmatmul.mubr.bf16.gmra.mxu0 %v306
      %v476 = vpop.f32.mrf.mxu0
      %v477 = vadd.f32 0.0, %v476
      %v478 = vpop.f32.mrf.mxu0
      %v479 = vpop.f32.mrf.mxu0
      %v480 = vadd.f32 0.0, %v479
      %v481 = vpop.f32.mrf.mxu0
      %482 = vmatprep.mubr.bf16.mxu0 0
      %483 = vmatmul.mubr.bf16.gmra.mxu0 %v307
      %v484 = vpop.f32.mrf.mxu0
      %v485 = vadd.f32 0.0, %v484
      %v486 = vpop.f32.mrf.mxu0
      %v487 = vpop.f32.mrf.mxu0
      %v488 = vadd.f32 0.0, %v487
      %v489 = vpop.f32.mrf.mxu0
      %490 = vmatprep.mubr.bf16.mxu0 0
      %491 = vmatmul.mubr.bf16.gmra.mxu0 %v308
      %v492 = vpop.f32.mrf.mxu0
      %v493 = vadd.f32 0.0, %v492
      %v494 = vpop.f32.mrf.mxu0
      %v495 = vpop.f32.mrf.mxu0
      %v496 = vadd.f32 0.0, %v495
      %v497 = vpop.f32.mrf.mxu0
      %498 = vmatprep.mubr.bf16.mxu0 0
      %499 = vmatmul.mubr.bf16.gmra.mxu0 %v309
      %v500 = vpop.f32.mrf.mxu0
      %v501 = vadd.f32 0.0, %v500
      %v502 = vpop.f32.mrf.mxu0
      %v503 = vpop.f32.mrf.mxu0
      %v504 = vadd.f32 0.0, %v503
      %v505 = vpop.f32.mrf.mxu0
      %506 = vmatprep.mubr.bf16.mxu0 0
      %507 = vmatmul.mubr.bf16.gmra.mxu0 %v310
      %v508 = vpop.f32.mrf.mxu0
      %v509 = vadd.f32 0.0, %v508
      %v510 = vpop.f32.mrf.mxu0
      %v511 = vpop.f32.mrf.mxu0
      %v512 = vadd.f32 0.0, %v511
      %v513 = vpop.f32.mrf.mxu0
      %514 = vmatprep.mubr.bf16.mxu0 0
      %515 = vmatmul.mubr.bf16.gmra.mxu0 %v311
      %v516 = vpop.f32.mrf.mxu0
      %v517 = vadd.f32 0.0, %v516
      %v518 = vpop.f32.mrf.mxu0
      %v519 = vpop.f32.mrf.mxu0
      %v520 = vadd.f32 0.0, %v519
      %v521 = vpop.f32.mrf.mxu0
      %522 = vmatprep.mubr.bf16.mxu0 0
      %523 = vmatmul.mubr.bf16.gmra.mxu0 %v312
      %v524 = vpop.f32.mrf.mxu0
      %v525 = vadd.f32 0.0, %v524
      %v526 = vpop.f32.mrf.mxu0
      %v527 = vpop.f32.mrf.mxu0
      %v528 = vadd.f32 0.0, %v527
      %v529 = vpop.f32.mrf.mxu0
      %530 = vmatprep.mubr.bf16.mxu0 0
      %531 = vmatmul.mubr.bf16.gmra.mxu0 %v313
      %v532 = vpop.f32.mrf.mxu0
      %v533 = vadd.f32 0.0, %v532
      %v534 = vpop.f32.mrf.mxu0
      %v535 = vpop.f32.mrf.mxu0
      %v536 = vadd.f32 0.0, %v535
      %v537 = vpop.f32.mrf.mxu0
      %538 = vdwg.mxu0
      %539 = vst [vmem:[%s179] sm:$0xff] %v413
      %540 = vst [vmem:[%s179 + $0x8] sm:$0xff] %v416
      %541 = vst [vmem:[%s179 + $0x10] sm:$0xff] %v421
      %542 = vst [vmem:[%s179 + $0x18] sm:$0xff] %v424
      %543 = vst [vmem:[%s179 + $0x20] sm:$0xff] %v429
      %544 = vst [vmem:[%s179 + $0x28] sm:$0xff] %v432
      %545 = vst [vmem:[%s179 + $0x30] sm:$0xff] %v437
      %546 = vst [vmem:[%s179 + $0x38] sm:$0xff] %v440
      %547 = vst [vmem:[%s179 + $0x40] sm:$0xff] %v445
      %548 = vst [vmem:[%s179 + $0x48] sm:$0xff] %v448
      %549 = vst [vmem:[%s179 + $0x50] sm:$0xff] %v453
      %550 = vst [vmem:[%s179 + $0x58] sm:$0xff] %v456
      %551 = vst [vmem:[%s179 + $0x60] sm:$0xff] %v461
      %552 = vst [vmem:[%s179 + $0x68] sm:$0xff] %v464
      %553 = vst [vmem:[%s179 + $0x70] sm:$0xff] %v469
      %554 = vst [vmem:[%s179 + $0x78] sm:$0xff] %v472
      %555 = vst [vmem:[%s179 + $0x80] sm:$0xff] %v477
      %556 = vst [vmem:[%s179 + $0x88] sm:$0xff] %v480
      %557 = vst [vmem:[%s179 + $0x90] sm:$0xff] %v485
      %558 = vst [vmem:[%s179 + $0x98] sm:$0xff] %v488
      %559 = vst [vmem:[%s179 + $0xa0] sm:$0xff] %v493
      %560 = vst [vmem:[%s179 + $0xa8] sm:$0xff] %v496
      %561 = vst [vmem:[%s179 + $0xb0] sm:$0xff] %v501
      %562 = vst [vmem:[%s179 + $0xb8] sm:$0xff] %v504
      %563 = vst [vmem:[%s179 + $0xc0] sm:$0xff] %v509
      %564 = vst [vmem:[%s179 + $0xc8] sm:$0xff] %v512
      %565 = vst [vmem:[%s179 + $0xd0] sm:$0xff] %v517
      %566 = vst [vmem:[%s179 + $0xd8] sm:$0xff] %v520
      %567 = vst [vmem:[%s179 + $0xe0] sm:$0xff] %v525
      %568 = vst [vmem:[%s179 + $0xe8] sm:$0xff] %v528
      %569 = vst [vmem:[%s179 + $0xf0] sm:$0xff] %v533
      %570 = vst [vmem:[%s179 + $0xf8] sm:$0xff] %v536
      %v571 = vadd.f32 %v413, %v416
      %v572 = vadd.f32 %v571, %v421
      %v573 = vadd.f32 %v572, %v424
      %v574 = vadd.f32 %v573, %v429
      %v575 = vadd.f32 %v574, %v432
      %v576 = vadd.f32 %v575, %v437
      %v577 = vadd.f32 %v576, %v440
      %v578 = vadd.f32 %v577, %v445
      %v579 = vadd.f32 %v578, %v448
      %v580 = vadd.f32 %v579, %v453
      %v581 = vadd.f32 %v580, %v456
      %v582 = vadd.f32 %v581, %v461
      %v583 = vadd.f32 %v582, %v464
      %v584 = vadd.f32 %v583, %v469
      %v585 = vadd.f32 %v584, %v472
      %v586 = vadd.f32 %v585, %v477
      %v587 = vadd.f32 %v586, %v480
      %v588 = vadd.f32 %v587, %v485
      %v589 = vadd.f32 %v588, %v488
      %v590 = vadd.f32 %v589, %v493
      %v591 = vadd.f32 %v590, %v496
      %v592 = vadd.f32 %v591, %v501
      %v593 = vadd.f32 %v592, %v504
      %v594 = vadd.f32 %v593, %v509
      %v595 = vadd.f32 %v594, %v512
      %v596 = vadd.f32 %v595, %v517
      %v597 = vadd.f32 %v596, %v520
      %v598 = vadd.f32 %v597, %v525
      %v599 = vadd.f32 %v598, %v528
      %v600 = vadd.f32 %v599, %v533
      %v601 = vadd.f32 %v600, %v536
      %v602 = vrot.slane %v601, 4
      %v603 = vadd.f32 %v601, %v602
      %v604 = vrot.slane %v603, 2
      %v605 = vadd.f32 %v603, %v604
      %v606 = vrot.slane %v605, 1
      %v607 = vadd.f32 %v605, %v606
      %v608 = vmul.f32 %v413, %v413
      %v609 = vmul.f32 %v416, %v416
      %v610 = vmul.f32 %v421, %v421
      %v611 = vmul.f32 %v424, %v424
      %v612 = vmul.f32 %v429, %v429
      %v613 = vmul.f32 %v432, %v432
      %v614 = vmul.f32 %v437, %v437
      %v615 = vmul.f32 %v440, %v440
      %v616 = vmul.f32 %v445, %v445
      %v617 = vmul.f32 %v448, %v448
      %v618 = vmul.f32 %v453, %v453
      %v619 = vmul.f32 %v456, %v456
      %v620 = vmul.f32 %v461, %v461
      %v621 = vmul.f32 %v464, %v464
      %v622 = vmul.f32 %v469, %v469
      %v623 = vmul.f32 %v472, %v472
      %v624 = vmul.f32 %v477, %v477
      %v625 = vmul.f32 %v480, %v480
      %v626 = vmul.f32 %v485, %v485
      %v627 = vmul.f32 %v488, %v488
      %v628 = vmul.f32 %v493, %v493
      %v629 = vmul.f32 %v496, %v496
      %v630 = vmul.f32 %v501, %v501
      %v631 = vmul.f32 %v504, %v504
      %v632 = vmul.f32 %v509, %v509
      %v633 = vmul.f32 %v512, %v512
      %v634 = vmul.f32 %v517, %v517
      %v635 = vmul.f32 %v520, %v520
      %v636 = vmul.f32 %v525, %v525
      %v637 = vmul.f32 %v528, %v528
      %v638 = vmul.f32 %v533, %v533
      %v639 = vmul.f32 %v536, %v536
      %v640 = vadd.f32 %v608, %v609
      %v641 = vadd.f32 %v640, %v610
      %v642 = vadd.f32 %v641, %v611
      %v643 = vadd.f32 %v642, %v612
      %v644 = vadd.f32 %v643, %v613
      %v645 = vadd.f32 %v644, %v614
      %v646 = vadd.f32 %v645, %v615
      %v647 = vadd.f32 %v646, %v616
      %v648 = vadd.f32 %v647, %v617
      %v649 = vadd.f32 %v648, %v618
      %v650 = vadd.f32 %v649, %v619
      %v651 = vadd.f32 %v650, %v620
      %v652 = vadd.f32 %v651, %v621
      %v653 = vadd.f32 %v652, %v622
      %v654 = vadd.f32 %v653, %v623
      %v655 = vadd.f32 %v654, %v624
      %v656 = vadd.f32 %v655, %v625
      %v657 = vadd.f32 %v656, %v626
      %v658 = vadd.f32 %v657, %v627
      %v659 = vadd.f32 %v658, %v628
      %v660 = vadd.f32 %v659, %v629
      %v661 = vadd.f32 %v660, %v630
      %v662 = vadd.f32 %v661, %v631
      %v663 = vadd.f32 %v662, %v632
      %v664 = vadd.f32 %v663, %v633
      %v665 = vadd.f32 %v664, %v634
      %v666 = vadd.f32 %v665, %v635
      %v667 = vadd.f32 %v666, %v636
      %v668 = vadd.f32 %v667, %v637
      %v669 = vadd.f32 %v668, %v638
      %v670 = vadd.f32 %v669, %v639
      %v671 = vrot.slane %v670, 4
      %v672 = vadd.f32 %v670, %v671
      %v673 = vrot.slane %v672, 2
      %v674 = vadd.f32 %v672, %v673
      %v675 = vrot.slane %v674, 1
      %v676 = vadd.f32 %v674, %v675
      %vm677 = vcmask 1040384
      %v678 = vsel %vm677, %v607, %v676
      %vm679 = vcmask 1041408
      %v680 = vsel %vm679, %v678, 0.0
      %681 = vst [vmem:[%s184] sm:$0xff] %v680
      %s682 = smul.u32 32, %s15
      %p683 = scmp.lt.s32.totalorder %s682, 63
      %s684 = scalar_select %p683, %s682, 63
      %s685 = smul.addr %s684, 8
      %s686 = scalar_lea.vmem %s2, %s685
      %p687 = scmp.lt.s32.totalorder %s15, 1
      %s688 = scalar_select %p687, %s15, 1
      %s689 = smul.addr %s688, 8
      %s690 = scalar_lea.vmem %s3, %s689
      // Predicated region
      $region29: #{_bottleneck_impl.6} parent=27 // pred_check
        %p691 = pneg %p80
      $region30: #{_bottleneck_impl.6} parent=27 // pred_check_branch
        %693 = sbr.rel (%p691) target = $region32
      $region31: #{_bottleneck_impl.6} parent=27 // pred_region
        %s694 = smul.u32 32, %s15
      $region32: #{_bottleneck_impl.6} parent=27 // pred_fallthru
        _
      // Predicated region
      $region33: #{_bottleneck_impl.6} parent=27 // pred_check
        %p695 = pneg %p106
      $region34: #{_bottleneck_impl.6} parent=27 // pred_check_branch
        %697 = sbr.rel (%p695) target = $region36
      $region35: #{_bottleneck_impl.6} parent=27 // pred_region
        _
      $region36: #{_bottleneck_impl.6} parent=27 // pred_fallthru
        _
    $region28: #{_bottleneck_impl.6} parent=5 // pred_fallthru
      _
    %p698 = scmp.le.s32.totalorder 2, %s10
    // Predicated region
    $region37: #{_bottleneck_impl.6} parent=5 // pred_check
      %p699 = pneg %p698
    $region38: #{_bottleneck_impl.6} parent=5 // pred_check_branch
      %701 = sbr.rel (%p699) target = $region40
    $region39: #{_bottleneck_impl.6} parent=5 // pred_region
      %s702 = ssub.s32 %s10, 2
      // Predicated region
      $region41: #{_bottleneck_impl.6} parent=39 // pred_check
        %p703 = pneg %p86
      $region42: #{_bottleneck_impl.6} parent=39 // pred_check_branch
        %705 = sbr.rel (%p703) target = $region44
      $region43: #{_bottleneck_impl.6} parent=39 // pred_region
        %s706 = smul.u32 32, %s16
        %p707 = scmp.lt.s32.totalorder %s706, 63
        %s708 = scalar_select %p707, %s706, 63
        %s709 = smul.addr %s708, 8
        %s710 = scalar_lea.vmem %s2, %s709
      $region44: #{_bottleneck_impl.6} parent=39 // pred_fallthru
        _
      // Predicated region
      $region45: #{_bottleneck_impl.6} parent=39 // pred_check
        %p711 = pneg %p112
      $region46: #{_bottleneck_impl.6} parent=39 // pred_check_branch
        %713 = sbr.rel (%p711) target = $region48
      $region47: #{_bottleneck_impl.6} parent=39 // pred_region
        %p714 = scmp.lt.s32.totalorder %s16, 1
        %s715 = scalar_select %p714, %s16, 1
        %s716 = smul.addr %s715, 8
        %s717 = scalar_lea.vmem %s3, %s716
      $region48: #{_bottleneck_impl.6} parent=39 // pred_fallthru
        _
    $region40: #{_bottleneck_impl.6} parent=5 // pred_fallthru
      _
  $region6: #{_bottleneck_impl.6} parent=0 // loop_footer
    %s14 = sadd.s32 1, %s10
  $region7: #{_bottleneck_impl.6} parent=0 // loop_footer_branch
    %9 = sbr.rel target = $region3
  $region8: #{_bottleneck_impl.6} parent=0 // loop_exit
    _

// kernel: _bottleneck_impl.9
$region0: #{_bottleneck_impl.9}
  #allocation0 [shape = 'u32[]', space=smem, size = 0x4, offset = 0x4, fixed_abs, tag = 'smem constant byte address 0x4 - core index']
  #allocation1 [shape = 'u32[144,128]{1,0:T(1,128)}', space=vmem, size = 0x12000, scoped, tag = 'internal scratch']
  %s0 = inlined_call_operand.vmem [shape: f32[512,128], index: 0, kind: input, shape index: {}]
  %s1 = inlined_call_operand.vmem [shape: f32[1,128], index: 1, kind: input, shape index: {}]
  %s2 = inlined_call_operand.vmem [shape: f32[1,128], index: 2, kind: input, shape index: {}]
  %s3 = inlined_call_operand.vmem [shape: bf16[128,128], index: 3, kind: input, shape index: {}]
  %s4 = inlined_call_operand.vmem [shape: f32[512,128], index: 4, kind: output, shape index: {0}]
  %s5 = inlined_call_operand.vmem [shape: f32[2,8,128], index: 5, kind: output, shape index: {1}]
  %6 = xla_tuple %s4, %s5
  %s7 = sld [smem:[#allocation0]]
  $region57: #{_bottleneck_impl.9} parent=0
    _
  %s9 = ssub.s32 1, %s7
  %s10 = scalar_select 0, %s9, %s7
  loop: start=0, step=1, limit=4
  $region2: #{_bottleneck_impl.9} parent=0 // loop_pre_header
    _
  $region3: #{_bottleneck_impl.9} parent=0 // loop_header
    %s12 = sphi 0, %s16
    %p13 = scmp.ge.s32.totalorder %s12, 4
    %s22 = sphi 0, %s24
    %s25 = sphi 0, %s22
    %s26 = sphi 0, %s25
    %s42 = sphi 0, %s26
    %s46 = sphi 0, %s46
    %s48 = sphi 0, %s46
    %s49 = sphi 0, %s48
    %s63 = sphi 0, %s49
    %s67 = sphi 0, %s67
    %s69 = sphi 0, %s67
    %s70 = sphi 0, %s69
    %s84 = sphi 0, %s70
    %s88 = sphi 0, %s88
    %s90 = sphi 0, %s88
    %s91 = sphi 0, %s90
    %s105 = sphi 0, %s91
    %s111 = sphi 0, %s113
    %s114 = sphi 0, %s111
    %s115 = sphi 0, %s114
    %s131 = sphi 0, %s115
    %s137 = sphi 0, %s139
    %s140 = sphi 0, %s137
    %s141 = sphi 0, %s140
    %s157 = sphi 0, %s141
  $region4: #{_bottleneck_impl.9} parent=0 // loop_header_branch
    %15 = sbr.rel (%p13) target = $region8
  $region5: #{_bottleneck_impl.9} parent=0 // loop_body
    %s17 = ssub.s32 %s12, 1
    %s18 = ssub.s32 %s12, 2
    %s19 = sadd.s32 %s12, 1
    %s20 = ssub.s32 %s12, %s19
    %p21 = scmp.eq.s32.totalorder %s20, 0
    %s23 = sadd.s32 %s22, 1
    %s24 = scalar_select %p21, %s22, %s23
    %p27 = pneg %p21
    %p28 = scmp.eq.s32.totalorder %s12, 1
    %p29 = por %p27, %p28
    %p30 = scmp.ne.s32.totalorder %s22, %s25
    %p31 = scmp.eq.s32.totalorder %s12, 0
    %p32 = por %p30, %p31
    %p33 = scmp.ne.s32.totalorder %s22, %s25
    %p34 = scmp.eq.s32.totalorder %s17, 1
    %p35 = por %p33, %p34
    %p36 = scmp.ne.s32.totalorder %s25, %s26
    %p37 = scmp.eq.s32.totalorder %s17, 0
    %p38 = por %p36, %p37
    %p39 = scmp.ne.s32.totalorder %s25, %s26
    %p40 = scmp.eq.s32.totalorder %s18, 1
    %p41 = por %p39, %p40
    %p43 = scmp.ne.s32.totalorder %s26, %s42
    %p44 = scmp.eq.s32.totalorder %s18, 0
    %p45 = por %p43, %p44
    %s47 = sadd.s32 %s46, 1
    %p50 = scmp.eq.s32.totalorder %s12, 1
    %p51 = scmp.ne.s32.totalorder %s46, %s48
    %p52 = scmp.eq.s32.totalorder %s12, 0
    %p53 = por %p51, %p52
    %p54 = scmp.ne.s32.totalorder %s46, %s48
    %p55 = scmp.eq.s32.totalorder %s17, 1
    %p56 = por %p54, %p55
    %p57 = scmp.ne.s32.totalorder %s48, %s49
    %p58 = scmp.eq.s32.totalorder %s17, 0
    %p59 = por %p57, %p58
    %p60 = scmp.ne.s32.totalorder %s48, %s49
    %p61 = scmp.eq.s32.totalorder %s18, 1
    %p62 = por %p60, %p61
    %p64 = scmp.ne.s32.totalorder %s49, %s63
    %p65 = scmp.eq.s32.totalorder %s18, 0
    %p66 = por %p64, %p65
    %s68 = sadd.s32 %s67, 1
    %p71 = scmp.eq.s32.totalorder %s12, 1
    %p72 = scmp.ne.s32.totalorder %s67, %s69
    %p73 = scmp.eq.s32.totalorder %s12, 0
    %p74 = por %p72, %p73
    %p75 = scmp.ne.s32.totalorder %s67, %s69
    %p76 = scmp.eq.s32.totalorder %s17, 1
    %p77 = por %p75, %p76
    %p78 = scmp.ne.s32.totalorder %s69, %s70
    %p79 = scmp.eq.s32.totalorder %s17, 0
    %p80 = por %p78, %p79
    %p81 = scmp.ne.s32.totalorder %s69, %s70
    %p82 = scmp.eq.s32.totalorder %s18, 1
    %p83 = por %p81, %p82
    %p85 = scmp.ne.s32.totalorder %s70, %s84
    %p86 = scmp.eq.s32.totalorder %s18, 0
    %p87 = por %p85, %p86
    %s89 = sadd.s32 %s88, 1
    %p92 = scmp.eq.s32.totalorder %s12, 1
    %p93 = scmp.ne.s32.totalorder %s88, %s90
    %p94 = scmp.eq.s32.totalorder %s12, 0
    %p95 = por %p93, %p94
    %p96 = scmp.ne.s32.totalorder %s88, %s90
    %p97 = scmp.eq.s32.totalorder %s17, 1
    %p98 = por %p96, %p97
    %p99 = scmp.ne.s32.totalorder %s90, %s91
    %p100 = scmp.eq.s32.totalorder %s17, 0
    %p101 = por %p99, %p100
    %p102 = scmp.ne.s32.totalorder %s90, %s91
    %p103 = scmp.eq.s32.totalorder %s18, 1
    %p104 = por %p102, %p103
    %p106 = scmp.ne.s32.totalorder %s91, %s105
    %p107 = scmp.eq.s32.totalorder %s18, 0
    %p108 = por %p106, %p107
    %s109 = ssub.s32 %s12, %s19
    %p110 = scmp.eq.s32.totalorder %s109, 0
    %s112 = sadd.s32 %s111, 1
    %s113 = scalar_select %p110, %s111, %s112
    %p116 = pneg %p110
    %p117 = scmp.eq.s32.totalorder %s12, 1
    %p118 = por %p116, %p117
    %p119 = scmp.ne.s32.totalorder %s111, %s114
    %p120 = scmp.eq.s32.totalorder %s12, 0
    %p121 = por %p119, %p120
    %p122 = scmp.ne.s32.totalorder %s111, %s114
    %p123 = scmp.eq.s32.totalorder %s17, 1
    %p124 = por %p122, %p123
    %p125 = scmp.ne.s32.totalorder %s114, %s115
    %p126 = scmp.eq.s32.totalorder %s17, 0
    %p127 = por %p125, %p126
    %p128 = scmp.ne.s32.totalorder %s114, %s115
    %p129 = scmp.eq.s32.totalorder %s18, 1
    %p130 = por %p128, %p129
    %p132 = scmp.ne.s32.totalorder %s115, %s131
    %p133 = scmp.eq.s32.totalorder %s18, 0
    %p134 = por %p132, %p133
    %s135 = ssub.s32 %s12, %s19
    %p136 = scmp.eq.s32.totalorder %s135, 0
    %s138 = sadd.s32 %s137, 1
    %s139 = scalar_select %p136, %s137, %s138
    %p142 = pneg %p136
    %p143 = scmp.eq.s32.totalorder %s12, 1
    %p144 = por %p142, %p143
    %p145 = scmp.ne.s32.totalorder %s137, %s140
    %p146 = scmp.eq.s32.totalorder %s12, 0
    %p147 = por %p145, %p146
    %p148 = scmp.ne.s32.totalorder %s137, %s140
    %p149 = scmp.eq.s32.totalorder %s17, 1
    %p150 = por %p148, %p149
    %p151 = scmp.ne.s32.totalorder %s140, %s141
    %p152 = scmp.eq.s32.totalorder %s17, 0
    %p153 = por %p151, %p152
    %p154 = scmp.ne.s32.totalorder %s140, %s141
    %p155 = scmp.eq.s32.totalorder %s18, 1
    %p156 = por %p154, %p155
    %p158 = scmp.ne.s32.totalorder %s141, %s157
    %p159 = scmp.eq.s32.totalorder %s18, 0
    %p160 = por %p158, %p159
    %p161 = scmp.le.s32.totalorder 1, %s12
    %p162 = scmp.lt.s32.totalorder %s12, 3
    %p163 = pnand %p161, %p162
    %p164 = pneg %p163
    // Predicated region
    $region9: #{_bottleneck_impl.9} parent=5 // pred_check
      _
    $region10: #{_bottleneck_impl.9} parent=5 // pred_check_branch
      %166 = sbr.rel (%p163) target = $region12
    $region11: #{_bottleneck_impl.9} parent=5 // pred_region
      %s167 = ssub.s32 %s12, 1
      // Predicated region
      $region13: #{_bottleneck_impl.9} parent=11 // pred_check
        %p168 = pneg %p59
      $region14: #{_bottleneck_impl.9} parent=11 // pred_check_branch
        %170 = sbr.rel (%p168) target = $region16
      $region15: #{_bottleneck_impl.9} parent=11 // pred_region
        _
      $region16: #{_bottleneck_impl.9} parent=11 // pred_fallthru
        _
      // Predicated region
      $region17: #{_bottleneck_impl.9} parent=11 // pred_check
        %p171 = pneg %p80
      $region18: #{_bottleneck_impl.9} parent=11 // pred_check_branch
        %173 = sbr.rel (%p171) target = $region20
      $region19: #{_bottleneck_impl.9} parent=11 // pred_region
        _
      $region20: #{_bottleneck_impl.9} parent=11 // pred_fallthru
        _
      // Predicated region
      $region21: #{_bottleneck_impl.9} parent=11 // pred_check
        %p174 = pneg %p101
      $region22: #{_bottleneck_impl.9} parent=11 // pred_check_branch
        %176 = sbr.rel (%p174) target = $region24
      $region23: #{_bottleneck_impl.9} parent=11 // pred_region
        _
      $region24: #{_bottleneck_impl.9} parent=11 // pred_fallthru
        _
    $region12: #{_bottleneck_impl.9} parent=5 // pred_fallthru
      _
    %p177 = scmp.lt.s32.totalorder %s12, 2
    // Predicated region
    $region25: #{_bottleneck_impl.9} parent=5 // pred_check
      %p178 = pneg %p177
    $region26: #{_bottleneck_impl.9} parent=5 // pred_check_branch
      %180 = sbr.rel (%p178) target = $region28
    $region27: #{_bottleneck_impl.9} parent=5 // pred_region
      // Predicated region
      $region29: #{_bottleneck_impl.9} parent=27 // pred_check
        %p181 = pneg %p32
      $region30: #{_bottleneck_impl.9} parent=27 // pred_check_branch
        %183 = sbr.rel (%p181) target = $region32
      $region31: #{_bottleneck_impl.9} parent=27 // pred_region
        %s184 = smul.u32 32, %s12
        %p185 = scmp.lt.s32.totalorder %s184, 63
        %s186 = scalar_select %p185, %s184, 63
        %s187 = smul.addr %s186, 8
        %s188 = scalar_lea.vmem %s0, %s187
        %s189 = smul.u32 32, %s12
      $region32: #{_bottleneck_impl.9} parent=27 // pred_fallthru
        _
    $region28: #{_bottleneck_impl.9} parent=5 // pred_fallthru
      _
    %p190 = scmp.le.s32.totalorder 1, %s12
    %p191 = scmp.lt.s32.totalorder %s12, 3
    %p192 = pnand %p190, %p191
    %p193 = pneg %p192
    // Predicated region
    $region33: #{_bottleneck_impl.9} parent=5 // pred_check
      _
    $region34: #{_bottleneck_impl.9} parent=5 // pred_check_branch
      %195 = sbr.rel (%p192) target = $region36
    $region35: #{_bottleneck_impl.9} parent=5 // pred_region
      %s196 = ssub.s32 %s12, 1
      %s197 = smul.u32 32, %s17
      %p198 = scmp.lt.s32.totalorder %s197, 63
      %s199 = scalar_select %p198, %s197, 63
      %s200 = smul.addr %s199, 8
      %s201 = scalar_lea.vmem %s0, %s200
      %p202 = pneg %p38
      %p203 = pneg %p35
      %p204 = pneg %p59
      %p205 = pneg %p56
      %p206 = pneg %p80
      %p207 = pneg %p77
      %p208 = pneg %p101
      %p209 = pneg %p98
      %p210 = pneg %p127
      %p211 = pneg %p124
      %s212 = smul.u32 32, %s17
      %p213 = scmp.lt.s32.totalorder %s212, 63
      %s214 = scalar_select %p213, %s212, 63
      %s215 = smul.addr %s214, 8
      %s216 = scalar_lea.vmem %s4, %s215
      %p217 = pneg %p153
      %p218 = pneg %p150
      %p219 = scmp.lt.s32.totalorder %s17, 1
      %s220 = scalar_select %p219, %s17, 1
      %s221 = smul.addr %s220, 8
      %s222 = scalar_lea.vmem %s5, %s221
      %s223 = smul.u32 32, %s17
      %p224 = scmp.lt.s32.totalorder %s223, 63
      %s225 = scalar_select %p224, %s223, 63
      %s226 = smul.addr %s225, 8
      %s227 = scalar_lea.vmem %s0, %s226
      %s228 = smul.u32 32, %s17
      %s229 = smul.u32 32, %s17
      %p230 = scmp.lt.s32.totalorder %s229, 63
      %s231 = scalar_select %p230, %s229, 63
      %s232 = smul.addr %s231, 8
      %s233 = scalar_lea.vmem %s4, %s232
      %s234 = smul.u32 32, %s17
      %p235 = scmp.lt.s32.totalorder %s17, 1
      %s236 = scalar_select %p235, %s17, 1
      %s237 = smul.addr %s236, 8
      %s238 = scalar_lea.vmem %s5, %s237
      %v240 = vld [vmem:[%s227] sm:$0xff]
      %v241 = vld [vmem:[%s227 + $0x8] sm:$0xff]
      %v242 = vld [vmem:[%s227 + $0x10] sm:$0xff]
      %v243 = vld [vmem:[%s227 + $0x18] sm:$0xff]
      %v244 = vld [vmem:[%s227 + $0x20] sm:$0xff]
      %v245 = vld [vmem:[%s227 + $0x28] sm:$0xff]
      %v246 = vld [vmem:[%s227 + $0x30] sm:$0xff]
      %v247 = vld [vmem:[%s227 + $0x38] sm:$0xff]
      %v248 = vld [vmem:[%s227 + $0x40] sm:$0xff]
      %v249 = vld [vmem:[%s227 + $0x48] sm:$0xff]
      %v250 = vld [vmem:[%s227 + $0x50] sm:$0xff]
      %v251 = vld [vmem:[%s227 + $0x58] sm:$0xff]
      %v252 = vld [vmem:[%s227 + $0x60] sm:$0xff]
      %v253 = vld [vmem:[%s227 + $0x68] sm:$0xff]
      %v254 = vld [vmem:[%s227 + $0x70] sm:$0xff]
      %v255 = vld [vmem:[%s227 + $0x78] sm:$0xff]
      %v256 = vld [vmem:[%s227 + $0x80] sm:$0xff]
      %v257 = vld [vmem:[%s227 + $0x88] sm:$0xff]
      %v258 = vld [vmem:[%s227 + $0x90] sm:$0xff]
      %v259 = vld [vmem:[%s227 + $0x98] sm:$0xff]
      %v260 = vld [vmem:[%s227 + $0xa0] sm:$0xff]
      %v261 = vld [vmem:[%s227 + $0xa8] sm:$0xff]
      %v262 = vld [vmem:[%s227 + $0xb0] sm:$0xff]
      %v263 = vld [vmem:[%s227 + $0xb8] sm:$0xff]
      %v264 = vld [vmem:[%s227 + $0xc0] sm:$0xff]
      %v265 = vld [vmem:[%s227 + $0xc8] sm:$0xff]
      %v266 = vld [vmem:[%s227 + $0xd0] sm:$0xff]
      %v267 = vld [vmem:[%s227 + $0xd8] sm:$0xff]
      %v268 = vld [vmem:[%s227 + $0xe0] sm:$0xff]
      %v269 = vld [vmem:[%s227 + $0xe8] sm:$0xff]
      %v270 = vld [vmem:[%s227 + $0xf0] sm:$0xff]
      %v271 = vld [vmem:[%s227 + $0xf8] sm:$0xff]
      %v272 = vld [vmem:[%s1] sm:$0x1]
      %v274 = vlaneseq
      %v275 = vshrl.u32 %v274, 7
      %v276 = vsub.s32 0, %v275
      %v277 = vrot.slane %v272, %v276
      %v279 = vmul.f32 %v240, %v277
      %v280 = vmul.f32 %v241, %v277
      %v281 = vmul.f32 %v242, %v277
      %v282 = vmul.f32 %v243, %v277
      %v283 = vmul.f32 %v244, %v277
      %v284 = vmul.f32 %v245, %v277
      %v285 = vmul.f32 %v246, %v277
      %v286 = vmul.f32 %v247, %v277
      %v287 = vmul.f32 %v248, %v277
      %v288 = vmul.f32 %v249, %v277
      %v289 = vmul.f32 %v250, %v277
      %v290 = vmul.f32 %v251, %v277
      %v291 = vmul.f32 %v252, %v277
      %v292 = vmul.f32 %v253, %v277
      %v293 = vmul.f32 %v254, %v277
      %v294 = vmul.f32 %v255, %v277
      %v295 = vmul.f32 %v256, %v277
      %v296 = vmul.f32 %v257, %v277
      %v297 = vmul.f32 %v258, %v277
      %v298 = vmul.f32 %v259, %v277
      %v299 = vmul.f32 %v260, %v277
      %v300 = vmul.f32 %v261, %v277
      %v301 = vmul.f32 %v262, %v277
      %v302 = vmul.f32 %v263, %v277
      %v303 = vmul.f32 %v264, %v277
      %v304 = vmul.f32 %v265, %v277
      %v305 = vmul.f32 %v266, %v277
      %v306 = vmul.f32 %v267, %v277
      %v307 = vmul.f32 %v268, %v277
      %v308 = vmul.f32 %v269, %v277
      %v309 = vmul.f32 %v270, %v277
      %v310 = vmul.f32 %v271, %v277
      %v311 = vld [vmem:[%s2] sm:$0x1]
      %v313 = vlaneseq
      %v314 = vshrl.u32 %v313, 7
      %v315 = vsub.s32 0, %v314
      %v316 = vrot.slane %v311, %v315
      %v318 = vadd.f32 %v279, %v316
      %v319 = vadd.f32 %v280, %v316
      %v320 = vadd.f32 %v281, %v316
      %v321 = vadd.f32 %v282, %v316
      %v322 = vadd.f32 %v283, %v316
      %v323 = vadd.f32 %v284, %v316
      %v324 = vadd.f32 %v285, %v316
      %v325 = vadd.f32 %v286, %v316
      %v326 = vadd.f32 %v287, %v316
      %v327 = vadd.f32 %v288, %v316
      %v328 = vadd.f32 %v289, %v316
      %v329 = vadd.f32 %v290, %v316
      %v330 = vadd.f32 %v291, %v316
      %v331 = vadd.f32 %v292, %v316
      %v332 = vadd.f32 %v293, %v316
      %v333 = vadd.f32 %v294, %v316
      %v334 = vadd.f32 %v295, %v316
      %v335 = vadd.f32 %v296, %v316
      %v336 = vadd.f32 %v297, %v316
      %v337 = vadd.f32 %v298, %v316
      %v338 = vadd.f32 %v299, %v316
      %v339 = vadd.f32 %v300, %v316
      %v340 = vadd.f32 %v301, %v316
      %v341 = vadd.f32 %v302, %v316
      %v342 = vadd.f32 %v303, %v316
      %v343 = vadd.f32 %v304, %v316
      %v344 = vadd.f32 %v305, %v316
      %v345 = vadd.f32 %v306, %v316
      %v346 = vadd.f32 %v307, %v316
      %v347 = vadd.f32 %v308, %v316
      %v348 = vadd.f32 %v309, %v316
      %v349 = vadd.f32 %v310, %v316
      %v350 = vmax.f32 %v318, 0.0
      %v351 = vmax.f32 %v319, 0.0
      %v352 = vmax.f32 %v320, 0.0
      %v353 = vmax.f32 %v321, 0.0
      %v354 = vmax.f32 %v322, 0.0
      %v355 = vmax.f32 %v323, 0.0
      %v356 = vmax.f32 %v324, 0.0
      %v357 = vmax.f32 %v325, 0.0
      %v358 = vmax.f32 %v326, 0.0
      %v359 = vmax.f32 %v327, 0.0
      %v360 = vmax.f32 %v328, 0.0
      %v361 = vmax.f32 %v329, 0.0
      %v362 = vmax.f32 %v330, 0.0
      %v363 = vmax.f32 %v331, 0.0
      %v364 = vmax.f32 %v332, 0.0
      %v365 = vmax.f32 %v333, 0.0
      %v366 = vmax.f32 %v334, 0.0
      %v367 = vmax.f32 %v335, 0.0
      %v368 = vmax.f32 %v336, 0.0
      %v369 = vmax.f32 %v337, 0.0
      %v370 = vmax.f32 %v338, 0.0
      %v371 = vmax.f32 %v339, 0.0
      %v372 = vmax.f32 %v340, 0.0
      %v373 = vmax.f32 %v341, 0.0
      %v374 = vmax.f32 %v342, 0.0
      %v375 = vmax.f32 %v343, 0.0
      %v376 = vmax.f32 %v344, 0.0
      %v377 = vmax.f32 %v345, 0.0
      %v378 = vmax.f32 %v346, 0.0
      %v379 = vmax.f32 %v347, 0.0
      %v380 = vmax.f32 %v348, 0.0
      %v381 = vmax.f32 %v349, 0.0
      %v382 = vpack.c.bf16 %v351, %v350
      %v383 = vpack.c.bf16 %v353, %v352
      %v384 = vpack.c.bf16 %v355, %v354
      %v385 = vpack.c.bf16 %v357, %v356
      %v386 = vpack.c.bf16 %v359, %v358
      %v387 = vpack.c.bf16 %v361, %v360
      %v388 = vpack.c.bf16 %v363, %v362
      %v389 = vpack.c.bf16 %v365, %v364
      %v390 = vpack.c.bf16 %v367, %v366
      %v391 = vpack.c.bf16 %v369, %v368
      %v392 = vpack.c.bf16 %v371, %v370
      %v393 = vpack.c.bf16 %v373, %v372
      %v394 = vpack.c.bf16 %v375, %v374
      %v395 = vpack.c.bf16 %v377, %v376
      %v396 = vpack.c.bf16 %v379, %v378
      %v397 = vpack.c.bf16 %v381, %v380
      %v398 = vld [vmem:[%s3] sm:$0xf]
      %v399 = vld [vmem:[%s3 + $0x4] sm:$0xf]
      %v400 = vld [vmem:[%s3 + $0x8] sm:$0xf]
      %v401 = vld [vmem:[%s3 + $0xc] sm:$0xf]
      %v402 = vld [vmem:[%s3 + $0x10] sm:$0xf]
      %v403 = vld [vmem:[%s3 + $0x14] sm:$0xf]
      %v404 = vld [vmem:[%s3 + $0x18] sm:$0xf]
      %v405 = vld [vmem:[%s3 + $0x1c] sm:$0xf]
      %v406 = vld [vmem:[%s3 + $0x20] sm:$0xf]
      %v407 = vld [vmem:[%s3 + $0x24] sm:$0xf]
      %v408 = vld [vmem:[%s3 + $0x28] sm:$0xf]
      %v409 = vld [vmem:[%s3 + $0x2c] sm:$0xf]
      %v410 = vld [vmem:[%s3 + $0x30] sm:$0xf]
      %v411 = vld [vmem:[%s3 + $0x34] sm:$0xf]
      %v412 = vld [vmem:[%s3 + $0x38] sm:$0xf]
      %v413 = vld [vmem:[%s3 + $0x3c] sm:$0xf]
      %v430 = vunpack.c.l.b16 %v398
      %v431 = vunpack.c.l.b16 %v399
      %v432 = vunpack.c.l.b16 %v400
      %v433 = vunpack.c.l.b16 %v401
      %v434 = vunpack.c.l.b16 %v402
      %v435 = vunpack.c.l.b16 %v403
      %v436 = vunpack.c.l.b16 %v404
      %v437 = vunpack.c.l.b16 %v405
      %v438 = vunpack.c.l.b16 %v406
      %v439 = vunpack.c.l.b16 %v407
      %v440 = vunpack.c.l.b16 %v408
      %v441 = vunpack.c.l.b16 %v409
      %v442 = vunpack.c.l.b16 %v410
      %v443 = vunpack.c.l.b16 %v411
      %v444 = vunpack.c.l.b16 %v412
      %v445 = vunpack.c.l.b16 %v413
      %v446 = vpack.c.b16 %v431, %v430
      %v447 = vpack.c.b16 %v433, %v432
      %v448 = vpack.c.b16 %v435, %v434
      %v449 = vpack.c.b16 %v437, %v436
      %v450 = vpack.c.b16 %v439, %v438
      %v451 = vpack.c.b16 %v441, %v440
      %v452 = vpack.c.b16 %v443, %v442
      %v453 = vpack.c.b16 %v445, %v444
      %462 = vmatprep.subr.bf16.mxu0 0
      %463 = vmatpush1.bf16.msra.mxu0 %v453
      %464 = vmatprep.subr.bf16.mxu0 0
      %465 = vmatpush1.bf16.msra.mxu0 %v452
      %466 = vmatprep.subr.bf16.mxu0 0
      %467 = vmatpush1.bf16.msra.mxu0 %v451
      %468 = vmatprep.subr.bf16.mxu0 0
      %469 = vmatpush1.bf16.msra.mxu0 %v450
      %470 = vmatprep.subr.bf16.mxu0 0
      %471 = vmatpush1.bf16.msra.mxu0 %v449
      %472 = vmatprep.subr.bf16.mxu0 0
      %473 = vmatpush1.bf16.msra.mxu0 %v448
      %474 = vmatprep.subr.bf16.mxu0 0
      %475 = vmatpush1.bf16.msra.mxu0 %v447
      %476 = vmatprep.subr.bf16.mxu0 0
      %477 = vmatpush1.bf16.msra.mxu0 %v446
      %478 = vmatprep.subr.bf16.mxu0 0
      %479 = vmatpush2.bf16.msra.mxu0 0
      %480 = vmatprep.subr.bf16.mxu0 0
      %481 = vmatpush2.bf16.msra.mxu0 0
      %482 = vmatprep.subr.bf16.mxu0 0
      %483 = vmatpush2.bf16.msra.mxu0 0
      %484 = vmatprep.subr.bf16.mxu0 0
      %485 = vmatpush2.bf16.msra.mxu0 0
      %486 = vmatprep.subr.bf16.mxu0 0
      %487 = vmatpush2.bf16.msra.mxu0 0
      %488 = vmatprep.subr.bf16.mxu0 0
      %489 = vmatpush2.bf16.msra.mxu0 0
      %490 = vmatprep.subr.bf16.mxu0 0
      %491 = vmatpush2.bf16.msra.mxu0 0
      %492 = vmatprep.subr.bf16.mxu0 0
      %493 = vmatpush2.bf16.msra.mxu0 0
      %494 = vmatprep.mubr.bf16.mxu0 0
      %495 = vmatmul.mubr.bf16.gmra.mxu0 %v382
      %v496 = vpop.f32.mrf.mxu0
      %v497 = vadd.f32 0.0, %v496
      %v498 = vpop.f32.mrf.mxu0
      %v499 = vpop.f32.mrf.mxu0
      %v500 = vadd.f32 0.0, %v499
      %v501 = vpop.f32.mrf.mxu0
      %502 = vmatprep.mubr.bf16.mxu0 0
      %503 = vmatmul.mubr.bf16.gmra.mxu0 %v383
      %v504 = vpop.f32.mrf.mxu0
      %v505 = vadd.f32 0.0, %v504
      %v506 = vpop.f32.mrf.mxu0
      %v507 = vpop.f32.mrf.mxu0
      %v508 = vadd.f32 0.0, %v507
      %v509 = vpop.f32.mrf.mxu0
      %510 = vmatprep.mubr.bf16.mxu0 0
      %511 = vmatmul.mubr.bf16.gmra.mxu0 %v384
      %v512 = vpop.f32.mrf.mxu0
      %v513 = vadd.f32 0.0, %v512
      %v514 = vpop.f32.mrf.mxu0
      %v515 = vpop.f32.mrf.mxu0
      %v516 = vadd.f32 0.0, %v515
      %v517 = vpop.f32.mrf.mxu0
      %518 = vmatprep.mubr.bf16.mxu0 0
      %519 = vmatmul.mubr.bf16.gmra.mxu0 %v385
      %v520 = vpop.f32.mrf.mxu0
      %v521 = vadd.f32 0.0, %v520
      %v522 = vpop.f32.mrf.mxu0
      %v523 = vpop.f32.mrf.mxu0
      %v524 = vadd.f32 0.0, %v523
      %v525 = vpop.f32.mrf.mxu0
      %526 = vmatprep.mubr.bf16.mxu0 0
      %527 = vmatmul.mubr.bf16.gmra.mxu0 %v386
      %v528 = vpop.f32.mrf.mxu0
      %v529 = vadd.f32 0.0, %v528
      %v530 = vpop.f32.mrf.mxu0
      %v531 = vpop.f32.mrf.mxu0
      %v532 = vadd.f32 0.0, %v531
      %v533 = vpop.f32.mrf.mxu0
      %534 = vmatprep.mubr.bf16.mxu0 0
      %535 = vmatmul.mubr.bf16.gmra.mxu0 %v387
      %v536 = vpop.f32.mrf.mxu0
      %v537 = vadd.f32 0.0, %v536
      %v538 = vpop.f32.mrf.mxu0
      %v539 = vpop.f32.mrf.mxu0
      %v540 = vadd.f32 0.0, %v539
      %v541 = vpop.f32.mrf.mxu0
      %542 = vmatprep.mubr.bf16.mxu0 0
      %543 = vmatmul.mubr.bf16.gmra.mxu0 %v388
      %v544 = vpop.f32.mrf.mxu0
      %v545 = vadd.f32 0.0, %v544
      %v546 = vpop.f32.mrf.mxu0
      %v547 = vpop.f32.mrf.mxu0
      %v548 = vadd.f32 0.0, %v547
      %v549 = vpop.f32.mrf.mxu0
      %550 = vmatprep.mubr.bf16.mxu0 0
      %551 = vmatmul.mubr.bf16.gmra.mxu0 %v389
      %v552 = vpop.f32.mrf.mxu0
      %v553 = vadd.f32 0.0, %v552
      %v554 = vpop.f32.mrf.mxu0
      %v555 = vpop.f32.mrf.mxu0
      %v556 = vadd.f32 0.0, %v555
      %v557 = vpop.f32.mrf.mxu0
      %558 = vmatprep.mubr.bf16.mxu0 0
      %559 = vmatmul.mubr.bf16.gmra.mxu0 %v390
      %v560 = vpop.f32.mrf.mxu0
      %v561 = vadd.f32 0.0, %v560
      %v562 = vpop.f32.mrf.mxu0
      %v563 = vpop.f32.mrf.mxu0
      %v564 = vadd.f32 0.0, %v563
      %v565 = vpop.f32.mrf.mxu0
      %566 = vmatprep.mubr.bf16.mxu0 0
      %567 = vmatmul.mubr.bf16.gmra.mxu0 %v391
      %v568 = vpop.f32.mrf.mxu0
      %v569 = vadd.f32 0.0, %v568
      %v570 = vpop.f32.mrf.mxu0
      %v571 = vpop.f32.mrf.mxu0
      %v572 = vadd.f32 0.0, %v571
      %v573 = vpop.f32.mrf.mxu0
      %574 = vmatprep.mubr.bf16.mxu0 0
      %575 = vmatmul.mubr.bf16.gmra.mxu0 %v392
      %v576 = vpop.f32.mrf.mxu0
      %v577 = vadd.f32 0.0, %v576
      %v578 = vpop.f32.mrf.mxu0
      %v579 = vpop.f32.mrf.mxu0
      %v580 = vadd.f32 0.0, %v579
      %v581 = vpop.f32.mrf.mxu0
      %582 = vmatprep.mubr.bf16.mxu0 0
      %583 = vmatmul.mubr.bf16.gmra.mxu0 %v393
      %v584 = vpop.f32.mrf.mxu0
      %v585 = vadd.f32 0.0, %v584
      %v586 = vpop.f32.mrf.mxu0
      %v587 = vpop.f32.mrf.mxu0
      %v588 = vadd.f32 0.0, %v587
      %v589 = vpop.f32.mrf.mxu0
      %590 = vmatprep.mubr.bf16.mxu0 0
      %591 = vmatmul.mubr.bf16.gmra.mxu0 %v394
      %v592 = vpop.f32.mrf.mxu0
      %v593 = vadd.f32 0.0, %v592
      %v594 = vpop.f32.mrf.mxu0
      %v595 = vpop.f32.mrf.mxu0
      %v596 = vadd.f32 0.0, %v595
      %v597 = vpop.f32.mrf.mxu0
      %598 = vmatprep.mubr.bf16.mxu0 0
      %599 = vmatmul.mubr.bf16.gmra.mxu0 %v395
      %v600 = vpop.f32.mrf.mxu0
      %v601 = vadd.f32 0.0, %v600
      %v602 = vpop.f32.mrf.mxu0
      %v603 = vpop.f32.mrf.mxu0
      %v604 = vadd.f32 0.0, %v603
      %v605 = vpop.f32.mrf.mxu0
      %606 = vmatprep.mubr.bf16.mxu0 0
      %607 = vmatmul.mubr.bf16.gmra.mxu0 %v396
      %v608 = vpop.f32.mrf.mxu0
      %v609 = vadd.f32 0.0, %v608
      %v610 = vpop.f32.mrf.mxu0
      %v611 = vpop.f32.mrf.mxu0
      %v612 = vadd.f32 0.0, %v611
      %v613 = vpop.f32.mrf.mxu0
      %614 = vmatprep.mubr.bf16.mxu0 0
      %615 = vmatmul.mubr.bf16.gmra.mxu0 %v397
      %v616 = vpop.f32.mrf.mxu0
      %v617 = vadd.f32 0.0, %v616
      %v618 = vpop.f32.mrf.mxu0
      %v619 = vpop.f32.mrf.mxu0
      %v620 = vadd.f32 0.0, %v619
      %v621 = vpop.f32.mrf.mxu0
      %622 = vdwg.mxu0
      %623 = vst [vmem:[%s233] sm:$0xff] %v497
      %624 = vst [vmem:[%s233 + $0x8] sm:$0xff] %v500
      %625 = vst [vmem:[%s233 + $0x10] sm:$0xff] %v505
      %626 = vst [vmem:[%s233 + $0x18] sm:$0xff] %v508
      %627 = vst [vmem:[%s233 + $0x20] sm:$0xff] %v513
      %628 = vst [vmem:[%s233 + $0x28] sm:$0xff] %v516
      %629 = vst [vmem:[%s233 + $0x30] sm:$0xff] %v521
      %630 = vst [vmem:[%s233 + $0x38] sm:$0xff] %v524
      %631 = vst [vmem:[%s233 + $0x40] sm:$0xff] %v529
      %632 = vst [vmem:[%s233 + $0x48] sm:$0xff] %v532
      %633 = vst [vmem:[%s233 + $0x50] sm:$0xff] %v537
      %634 = vst [vmem:[%s233 + $0x58] sm:$0xff] %v540
      %635 = vst [vmem:[%s233 + $0x60] sm:$0xff] %v545
      %636 = vst [vmem:[%s233 + $0x68] sm:$0xff] %v548
      %637 = vst [vmem:[%s233 + $0x70] sm:$0xff] %v553
      %638 = vst [vmem:[%s233 + $0x78] sm:$0xff] %v556
      %639 = vst [vmem:[%s233 + $0x80] sm:$0xff] %v561
      %640 = vst [vmem:[%s233 + $0x88] sm:$0xff] %v564
      %641 = vst [vmem:[%s233 + $0x90] sm:$0xff] %v569
      %642 = vst [vmem:[%s233 + $0x98] sm:$0xff] %v572
      %643 = vst [vmem:[%s233 + $0xa0] sm:$0xff] %v577
      %644 = vst [vmem:[%s233 + $0xa8] sm:$0xff] %v580
      %645 = vst [vmem:[%s233 + $0xb0] sm:$0xff] %v585
      %646 = vst [vmem:[%s233 + $0xb8] sm:$0xff] %v588
      %647 = vst [vmem:[%s233 + $0xc0] sm:$0xff] %v593
      %648 = vst [vmem:[%s233 + $0xc8] sm:$0xff] %v596
      %649 = vst [vmem:[%s233 + $0xd0] sm:$0xff] %v601
      %650 = vst [vmem:[%s233 + $0xd8] sm:$0xff] %v604
      %651 = vst [vmem:[%s233 + $0xe0] sm:$0xff] %v609
      %652 = vst [vmem:[%s233 + $0xe8] sm:$0xff] %v612
      %653 = vst [vmem:[%s233 + $0xf0] sm:$0xff] %v617
      %654 = vst [vmem:[%s233 + $0xf8] sm:$0xff] %v620
      %v655 = vadd.f32 %v497, %v500
      %v656 = vadd.f32 %v655, %v505
      %v657 = vadd.f32 %v656, %v508
      %v658 = vadd.f32 %v657, %v513
      %v659 = vadd.f32 %v658, %v516
      %v660 = vadd.f32 %v659, %v521
      %v661 = vadd.f32 %v660, %v524
      %v662 = vadd.f32 %v661, %v529
      %v663 = vadd.f32 %v662, %v532
      %v664 = vadd.f32 %v663, %v537
      %v665 = vadd.f32 %v664, %v540
      %v666 = vadd.f32 %v665, %v545
      %v667 = vadd.f32 %v666, %v548
      %v668 = vadd.f32 %v667, %v553
      %v669 = vadd.f32 %v668, %v556
      %v670 = vadd.f32 %v669, %v561
      %v671 = vadd.f32 %v670, %v564
      %v672 = vadd.f32 %v671, %v569
      %v673 = vadd.f32 %v672, %v572
      %v674 = vadd.f32 %v673, %v577
      %v675 = vadd.f32 %v674, %v580
      %v676 = vadd.f32 %v675, %v585
      %v677 = vadd.f32 %v676, %v588
      %v678 = vadd.f32 %v677, %v593
      %v679 = vadd.f32 %v678, %v596
      %v680 = vadd.f32 %v679, %v601
      %v681 = vadd.f32 %v680, %v604
      %v682 = vadd.f32 %v681, %v609
      %v683 = vadd.f32 %v682, %v612
      %v684 = vadd.f32 %v683, %v617
      %v685 = vadd.f32 %v684, %v620
      %v686 = vrot.slane %v685, 4
      %v687 = vadd.f32 %v685, %v686
      %v688 = vrot.slane %v687, 2
      %v689 = vadd.f32 %v687, %v688
      %v690 = vrot.slane %v689, 1
      %v691 = vadd.f32 %v689, %v690
      %v692 = vmul.f32 %v497, %v497
      %v693 = vmul.f32 %v500, %v500
      %v694 = vmul.f32 %v505, %v505
      %v695 = vmul.f32 %v508, %v508
      %v696 = vmul.f32 %v513, %v513
      %v697 = vmul.f32 %v516, %v516
      %v698 = vmul.f32 %v521, %v521
      %v699 = vmul.f32 %v524, %v524
      %v700 = vmul.f32 %v529, %v529
      %v701 = vmul.f32 %v532, %v532
      %v702 = vmul.f32 %v537, %v537
      %v703 = vmul.f32 %v540, %v540
      %v704 = vmul.f32 %v545, %v545
      %v705 = vmul.f32 %v548, %v548
      %v706 = vmul.f32 %v553, %v553
      %v707 = vmul.f32 %v556, %v556
      %v708 = vmul.f32 %v561, %v561
      %v709 = vmul.f32 %v564, %v564
      %v710 = vmul.f32 %v569, %v569
      %v711 = vmul.f32 %v572, %v572
      %v712 = vmul.f32 %v577, %v577
      %v713 = vmul.f32 %v580, %v580
      %v714 = vmul.f32 %v585, %v585
      %v715 = vmul.f32 %v588, %v588
      %v716 = vmul.f32 %v593, %v593
      %v717 = vmul.f32 %v596, %v596
      %v718 = vmul.f32 %v601, %v601
      %v719 = vmul.f32 %v604, %v604
      %v720 = vmul.f32 %v609, %v609
      %v721 = vmul.f32 %v612, %v612
      %v722 = vmul.f32 %v617, %v617
      %v723 = vmul.f32 %v620, %v620
      %v724 = vadd.f32 %v692, %v693
      %v725 = vadd.f32 %v724, %v694
      %v726 = vadd.f32 %v725, %v695
      %v727 = vadd.f32 %v726, %v696
      %v728 = vadd.f32 %v727, %v697
      %v729 = vadd.f32 %v728, %v698
      %v730 = vadd.f32 %v729, %v699
      %v731 = vadd.f32 %v730, %v700
      %v732 = vadd.f32 %v731, %v701
      %v733 = vadd.f32 %v732, %v702
      %v734 = vadd.f32 %v733, %v703
      %v735 = vadd.f32 %v734, %v704
      %v736 = vadd.f32 %v735, %v705
      %v737 = vadd.f32 %v736, %v706
      %v738 = vadd.f32 %v737, %v707
      %v739 = vadd.f32 %v738, %v708
      %v740 = vadd.f32 %v739, %v709
      %v741 = vadd.f32 %v740, %v710
      %v742 = vadd.f32 %v741, %v711
      %v743 = vadd.f32 %v742, %v712
      %v744 = vadd.f32 %v743, %v713
      %v745 = vadd.f32 %v744, %v714
      %v746 = vadd.f32 %v745, %v715
      %v747 = vadd.f32 %v746, %v716
      %v748 = vadd.f32 %v747, %v717
      %v749 = vadd.f32 %v748, %v718
      %v750 = vadd.f32 %v749, %v719
      %v751 = vadd.f32 %v750, %v720
      %v752 = vadd.f32 %v751, %v721
      %v753 = vadd.f32 %v752, %v722
      %v754 = vadd.f32 %v753, %v723
      %v755 = vrot.slane %v754, 4
      %v756 = vadd.f32 %v754, %v755
      %v757 = vrot.slane %v756, 2
      %v758 = vadd.f32 %v756, %v757
      %v759 = vrot.slane %v758, 1
      %v760 = vadd.f32 %v758, %v759
      %vm761 = vcmask 1040384
      %v762 = vsel %vm761, %v691, %v760
      %vm763 = vcmask 1041408
      %v764 = vsel %vm763, %v762, 0.0
      %765 = vst [vmem:[%s238] sm:$0xff] %v764
      %s766 = smul.u32 32, %s17
      %p767 = scmp.lt.s32.totalorder %s766, 63
      %s768 = scalar_select %p767, %s766, 63
      %s769 = smul.addr %s768, 8
      %s770 = scalar_lea.vmem %s4, %s769
      %p771 = scmp.lt.s32.totalorder %s17, 1
      %s772 = scalar_select %p771, %s17, 1
      %s773 = smul.addr %s772, 8
      %s774 = scalar_lea.vmem %s5, %s773
      // Predicated region
      $region37: #{_bottleneck_impl.9} parent=35 // pred_check
        %p775 = pneg %p124
      $region38: #{_bottleneck_impl.9} parent=35 // pred_check_branch
        %777 = sbr.rel (%p775) target = $region40
      $region39: #{_bottleneck_impl.9} parent=35 // pred_region
        %s778 = smul.u32 32, %s17
      $region40: #{_bottleneck_impl.9} parent=35 // pred_fallthru
        _
      // Predicated region
      $region41: #{_bottleneck_impl.9} parent=35 // pred_check
        %p779 = pneg %p150
      $region42: #{_bottleneck_impl.9} parent=35 // pred_check_branch
        %781 = sbr.rel (%p779) target = $region44
      $region43: #{_bottleneck_impl.9} parent=35 // pred_region
        _
      $region44: #{_bottleneck_impl.9} parent=35 // pred_fallthru
        _
    $region36: #{_bottleneck_impl.9} parent=5 // pred_fallthru
      _
    %p782 = scmp.le.s32.totalorder 2, %s12
    // Predicated region
    $region45: #{_bottleneck_impl.9} parent=5 // pred_check
      %p783 = pneg %p782
    $region46: #{_bottleneck_impl.9} parent=5 // pred_check_branch
      %785 = sbr.rel (%p783) target = $region48
    $region47: #{_bottleneck_impl.9} parent=5 // pred_region
      %s786 = ssub.s32 %s12, 2
      // Predicated region
      $region49: #{_bottleneck_impl.9} parent=47 // pred_check
        %p787 = pneg %p130
      $region50: #{_bottleneck_impl.9} parent=47 // pred_check_branch
        %789 = sbr.rel (%p787) target = $region52
      $region51: #{_bottleneck_impl.9} parent=47 // pred_region
        %s790 = smul.u32 32, %s18
        %p791 = scmp.lt.s32.totalorder %s790, 63
        %s792 = scalar_select %p791, %s790, 63
        %s793 = smul.addr %s792, 8
        %s794 = scalar_lea.vmem %s4, %s793
      $region52: #{_bottleneck_impl.9} parent=47 // pred_fallthru
        _
      // Predicated region
      $region53: #{_bottleneck_impl.9} parent=47 // pred_check
        %p795 = pneg %p156
      $region54: #{_bottleneck_impl.9} parent=47 // pred_check_branch
        %797 = sbr.rel (%p795) target = $region56
      $region55: #{_bottleneck_impl.9} parent=47 // pred_region
        %p798 = scmp.lt.s32.totalorder %s18, 1
        %s799 = scalar_select %p798, %s18, 1
        %s800 = smul.addr %s799, 8
        %s801 = scalar_lea.vmem %s5, %s800
      $region56: #{_bottleneck_impl.9} parent=47 // pred_fallthru
        _
    $region48: #{_bottleneck_impl.9} parent=5 // pred_fallthru
      _
  $region6: #{_bottleneck_impl.9} parent=0 // loop_footer
    %s16 = sadd.s32 1, %s12
  $region7: #{_bottleneck_impl.9} parent=0 // loop_footer_branch
    %11 = sbr.rel target = $region3
  $region8: #{_bottleneck_impl.9} parent=0 // loop_exit
    _

// kernel: _bottleneck_impl.11
$region0: #{_bottleneck_impl.11}
  #allocation0 [shape = 'u32[]', space=smem, size = 0x4, offset = 0x4, fixed_abs, tag = 'smem constant byte address 0x4 - core index']
  #allocation1 [shape = 'u32[144,128]{1,0:T(1,128)}', space=vmem, size = 0x12000, scoped, tag = 'internal scratch']
  %s0 = inlined_call_operand.vmem [shape: f32[512,128], index: 0, kind: input, shape index: {}]
  %s1 = inlined_call_operand.vmem [shape: f32[1,128], index: 1, kind: input, shape index: {}]
  %s2 = inlined_call_operand.vmem [shape: f32[1,128], index: 2, kind: input, shape index: {}]
  %s3 = inlined_call_operand.vmem [shape: f32[512,128], index: 3, kind: input, shape index: {}]
  %s4 = inlined_call_operand.vmem [shape: f32[1,128], index: 4, kind: input, shape index: {}]
  %s5 = inlined_call_operand.vmem [shape: f32[1,128], index: 5, kind: input, shape index: {}]
  %s6 = inlined_call_operand.vmem [shape: f32[512,128], index: 6, kind: output, shape index: {}]
  %s7 = sld [smem:[#allocation0]]
  $region57: #{_bottleneck_impl.11} parent=0
    _
  %s9 = ssub.s32 1, %s7
  %s10 = scalar_select 0, %s9, %s7
  loop: start=0, step=1, limit=4
  $region2: #{_bottleneck_impl.11} parent=0 // loop_pre_header
    _
  $region3: #{_bottleneck_impl.11} parent=0 // loop_header
    %s12 = sphi 0, %s16
    %p13 = scmp.ge.s32.totalorder %s12, 4
    %s22 = sphi 0, %s24
    %s25 = sphi 0, %s22
    %s26 = sphi 0, %s25
    %s42 = sphi 0, %s26
    %s46 = sphi 0, %s46
    %s48 = sphi 0, %s46
    %s49 = sphi 0, %s48
    %s63 = sphi 0, %s49
    %s67 = sphi 0, %s67
    %s69 = sphi 0, %s67
    %s70 = sphi 0, %s69
    %s84 = sphi 0, %s70
    %s90 = sphi 0, %s92
    %s93 = sphi 0, %s90
    %s94 = sphi 0, %s93
    %s110 = sphi 0, %s94
    %s114 = sphi 0, %s114
    %s116 = sphi 0, %s114
    %s117 = sphi 0, %s116
    %s131 = sphi 0, %s117
    %s135 = sphi 0, %s135
    %s137 = sphi 0, %s135
    %s138 = sphi 0, %s137
    %s152 = sphi 0, %s138
    %s158 = sphi 0, %s160
    %s161 = sphi 0, %s158
    %s162 = sphi 0, %s161
    %s178 = sphi 0, %s162
  $region4: #{_bottleneck_impl.11} parent=0 // loop_header_branch
    %15 = sbr.rel (%p13) target = $region8
  $region5: #{_bottleneck_impl.11} parent=0 // loop_body
    %s17 = ssub.s32 %s12, 1
    %s18 = ssub.s32 %s12, 2
    %s19 = sadd.s32 %s12, 1
    %s20 = ssub.s32 %s12, %s19
    %p21 = scmp.eq.s32.totalorder %s20, 0
    %s23 = sadd.s32 %s22, 1
    %s24 = scalar_select %p21, %s22, %s23
    %p27 = pneg %p21
    %p28 = scmp.eq.s32.totalorder %s12, 1
    %p29 = por %p27, %p28
    %p30 = scmp.ne.s32.totalorder %s22, %s25
    %p31 = scmp.eq.s32.totalorder %s12, 0
    %p32 = por %p30, %p31
    %p33 = scmp.ne.s32.totalorder %s22, %s25
    %p34 = scmp.eq.s32.totalorder %s17, 1
    %p35 = por %p33, %p34
    %p36 = scmp.ne.s32.totalorder %s25, %s26
    %p37 = scmp.eq.s32.totalorder %s17, 0
    %p38 = por %p36, %p37
    %p39 = scmp.ne.s32.totalorder %s25, %s26
    %p40 = scmp.eq.s32.totalorder %s18, 1
    %p41 = por %p39, %p40
    %p43 = scmp.ne.s32.totalorder %s26, %s42
    %p44 = scmp.eq.s32.totalorder %s18, 0
    %p45 = por %p43, %p44
    %s47 = sadd.s32 %s46, 1
    %p50 = scmp.eq.s32.totalorder %s12, 1
    %p51 = scmp.ne.s32.totalorder %s46, %s48
    %p52 = scmp.eq.s32.totalorder %s12, 0
    %p53 = por %p51, %p52
    %p54 = scmp.ne.s32.totalorder %s46, %s48
    %p55 = scmp.eq.s32.totalorder %s17, 1
    %p56 = por %p54, %p55
    %p57 = scmp.ne.s32.totalorder %s48, %s49
    %p58 = scmp.eq.s32.totalorder %s17, 0
    %p59 = por %p57, %p58
    %p60 = scmp.ne.s32.totalorder %s48, %s49
    %p61 = scmp.eq.s32.totalorder %s18, 1
    %p62 = por %p60, %p61
    %p64 = scmp.ne.s32.totalorder %s49, %s63
    %p65 = scmp.eq.s32.totalorder %s18, 0
    %p66 = por %p64, %p65
    %s68 = sadd.s32 %s67, 1
    %p71 = scmp.eq.s32.totalorder %s12, 1
    %p72 = scmp.ne.s32.totalorder %s67, %s69
    %p73 = scmp.eq.s32.totalorder %s12, 0
    %p74 = por %p72, %p73
    %p75 = scmp.ne.s32.totalorder %s67, %s69
    %p76 = scmp.eq.s32.totalorder %s17, 1
    %p77 = por %p75, %p76
    %p78 = scmp.ne.s32.totalorder %s69, %s70
    %p79 = scmp.eq.s32.totalorder %s17, 0
    %p80 = por %p78, %p79
    %p81 = scmp.ne.s32.totalorder %s69, %s70
    %p82 = scmp.eq.s32.totalorder %s18, 1
    %p83 = por %p81, %p82
    %p85 = scmp.ne.s32.totalorder %s70, %s84
    %p86 = scmp.eq.s32.totalorder %s18, 0
    %p87 = por %p85, %p86
    %s88 = ssub.s32 %s12, %s19
    %p89 = scmp.eq.s32.totalorder %s88, 0
    %s91 = sadd.s32 %s90, 1
    %s92 = scalar_select %p89, %s90, %s91
    %p95 = pneg %p89
    %p96 = scmp.eq.s32.totalorder %s12, 1
    %p97 = por %p95, %p96
    %p98 = scmp.ne.s32.totalorder %s90, %s93
    %p99 = scmp.eq.s32.totalorder %s12, 0
    %p100 = por %p98, %p99
    %p101 = scmp.ne.s32.totalorder %s90, %s93
    %p102 = scmp.eq.s32.totalorder %s17, 1
    %p103 = por %p101, %p102
    %p104 = scmp.ne.s32.totalorder %s93, %s94
    %p105 = scmp.eq.s32.totalorder %s17, 0
    %p106 = por %p104, %p105
    %p107 = scmp.ne.s32.totalorder %s93, %s94
    %p108 = scmp.eq.s32.totalorder %s18, 1
    %p109 = por %p107, %p108
    %p111 = scmp.ne.s32.totalorder %s94, %s110
    %p112 = scmp.eq.s32.totalorder %s18, 0
    %p113 = por %p111, %p112
    %s115 = sadd.s32 %s114, 1
    %p118 = scmp.eq.s32.totalorder %s12, 1
    %p119 = scmp.ne.s32.totalorder %s114, %s116
    %p120 = scmp.eq.s32.totalorder %s12, 0
    %p121 = por %p119, %p120
    %p122 = scmp.ne.s32.totalorder %s114, %s116
    %p123 = scmp.eq.s32.totalorder %s17, 1
    %p124 = por %p122, %p123
    %p125 = scmp.ne.s32.totalorder %s116, %s117
    %p126 = scmp.eq.s32.totalorder %s17, 0
    %p127 = por %p125, %p126
    %p128 = scmp.ne.s32.totalorder %s116, %s117
    %p129 = scmp.eq.s32.totalorder %s18, 1
    %p130 = por %p128, %p129
    %p132 = scmp.ne.s32.totalorder %s117, %s131
    %p133 = scmp.eq.s32.totalorder %s18, 0
    %p134 = por %p132, %p133
    %s136 = sadd.s32 %s135, 1
    %p139 = scmp.eq.s32.totalorder %s12, 1
    %p140 = scmp.ne.s32.totalorder %s135, %s137
    %p141 = scmp.eq.s32.totalorder %s12, 0
    %p142 = por %p140, %p141
    %p143 = scmp.ne.s32.totalorder %s135, %s137
    %p144 = scmp.eq.s32.totalorder %s17, 1
    %p145 = por %p143, %p144
    %p146 = scmp.ne.s32.totalorder %s137, %s138
    %p147 = scmp.eq.s32.totalorder %s17, 0
    %p148 = por %p146, %p147
    %p149 = scmp.ne.s32.totalorder %s137, %s138
    %p150 = scmp.eq.s32.totalorder %s18, 1
    %p151 = por %p149, %p150
    %p153 = scmp.ne.s32.totalorder %s138, %s152
    %p154 = scmp.eq.s32.totalorder %s18, 0
    %p155 = por %p153, %p154
    %s156 = ssub.s32 %s12, %s19
    %p157 = scmp.eq.s32.totalorder %s156, 0
    %s159 = sadd.s32 %s158, 1
    %s160 = scalar_select %p157, %s158, %s159
    %p163 = pneg %p157
    %p164 = scmp.eq.s32.totalorder %s12, 1
    %p165 = por %p163, %p164
    %p166 = scmp.ne.s32.totalorder %s158, %s161
    %p167 = scmp.eq.s32.totalorder %s12, 0
    %p168 = por %p166, %p167
    %p169 = scmp.ne.s32.totalorder %s158, %s161
    %p170 = scmp.eq.s32.totalorder %s17, 1
    %p171 = por %p169, %p170
    %p172 = scmp.ne.s32.totalorder %s161, %s162
    %p173 = scmp.eq.s32.totalorder %s17, 0
    %p174 = por %p172, %p173
    %p175 = scmp.ne.s32.totalorder %s161, %s162
    %p176 = scmp.eq.s32.totalorder %s18, 1
    %p177 = por %p175, %p176
    %p179 = scmp.ne.s32.totalorder %s162, %s178
    %p180 = scmp.eq.s32.totalorder %s18, 0
    %p181 = por %p179, %p180
    %p182 = scmp.le.s32.totalorder 1, %s12
    %p183 = scmp.lt.s32.totalorder %s12, 3
    %p184 = pnand %p182, %p183
    %p185 = pneg %p184
    // Predicated region
    $region9: #{_bottleneck_impl.11} parent=5 // pred_check
      _
    $region10: #{_bottleneck_impl.11} parent=5 // pred_check_branch
      %187 = sbr.rel (%p184) target = $region12
    $region11: #{_bottleneck_impl.11} parent=5 // pred_region
      %s188 = ssub.s32 %s12, 1
      // Predicated region
      $region13: #{_bottleneck_impl.11} parent=11 // pred_check
        %p189 = pneg %p59
      $region14: #{_bottleneck_impl.11} parent=11 // pred_check_branch
        %191 = sbr.rel (%p189) target = $region16
      $region15: #{_bottleneck_impl.11} parent=11 // pred_region
        _
      $region16: #{_bottleneck_impl.11} parent=11 // pred_fallthru
        _
      // Predicated region
      $region17: #{_bottleneck_impl.11} parent=11 // pred_check
        %p192 = pneg %p80
      $region18: #{_bottleneck_impl.11} parent=11 // pred_check_branch
        %194 = sbr.rel (%p192) target = $region20
      $region19: #{_bottleneck_impl.11} parent=11 // pred_region
        _
      $region20: #{_bottleneck_impl.11} parent=11 // pred_fallthru
        _
      // Predicated region
      $region21: #{_bottleneck_impl.11} parent=11 // pred_check
        %p195 = pneg %p127
      $region22: #{_bottleneck_impl.11} parent=11 // pred_check_branch
        %197 = sbr.rel (%p195) target = $region24
      $region23: #{_bottleneck_impl.11} parent=11 // pred_region
        _
      $region24: #{_bottleneck_impl.11} parent=11 // pred_fallthru
        _
      // Predicated region
      $region25: #{_bottleneck_impl.11} parent=11 // pred_check
        %p198 = pneg %p148
      $region26: #{_bottleneck_impl.11} parent=11 // pred_check_branch
        %200 = sbr.rel (%p198) target = $region28
      $region27: #{_bottleneck_impl.11} parent=11 // pred_region
        _
      $region28: #{_bottleneck_impl.11} parent=11 // pred_fallthru
        _
    $region12: #{_bottleneck_impl.11} parent=5 // pred_fallthru
      _
    %p201 = scmp.lt.s32.totalorder %s12, 2
    // Predicated region
    $region29: #{_bottleneck_impl.11} parent=5 // pred_check
      %p202 = pneg %p201
    $region30: #{_bottleneck_impl.11} parent=5 // pred_check_branch
      %204 = sbr.rel (%p202) target = $region32
    $region31: #{_bottleneck_impl.11} parent=5 // pred_region
      // Predicated region
      $region33: #{_bottleneck_impl.11} parent=31 // pred_check
        %p205 = pneg %p32
      $region34: #{_bottleneck_impl.11} parent=31 // pred_check_branch
        %207 = sbr.rel (%p205) target = $region36
      $region35: #{_bottleneck_impl.11} parent=31 // pred_region
        %s208 = smul.u32 32, %s12
        %p209 = scmp.lt.s32.totalorder %s208, 63
        %s210 = scalar_select %p209, %s208, 63
        %s211 = smul.addr %s210, 8
        %s212 = scalar_lea.vmem %s0, %s211
        %s213 = smul.u32 32, %s12
      $region36: #{_bottleneck_impl.11} parent=31 // pred_fallthru
        _
      // Predicated region
      $region37: #{_bottleneck_impl.11} parent=31 // pred_check
        %p214 = pneg %p100
      $region38: #{_bottleneck_impl.11} parent=31 // pred_check_branch
        %216 = sbr.rel (%p214) target = $region40
      $region39: #{_bottleneck_impl.11} parent=31 // pred_region
        %s217 = smul.u32 32, %s12
        %p218 = scmp.lt.s32.totalorder %s217, 63
        %s219 = scalar_select %p218, %s217, 63
        %s220 = smul.addr %s219, 8
        %s221 = scalar_lea.vmem %s3, %s220
        %s222 = smul.u32 32, %s12
      $region40: #{_bottleneck_impl.11} parent=31 // pred_fallthru
        _
    $region32: #{_bottleneck_impl.11} parent=5 // pred_fallthru
      _
    %p223 = scmp.le.s32.totalorder 1, %s12
    %p224 = scmp.lt.s32.totalorder %s12, 3
    %p225 = pnand %p223, %p224
    %p226 = pneg %p225
    // Predicated region
    $region41: #{_bottleneck_impl.11} parent=5 // pred_check
      _
    $region42: #{_bottleneck_impl.11} parent=5 // pred_check_branch
      %228 = sbr.rel (%p225) target = $region44
    $region43: #{_bottleneck_impl.11} parent=5 // pred_region
      %s229 = ssub.s32 %s12, 1
      %s230 = smul.u32 32, %s17
      %p231 = scmp.lt.s32.totalorder %s230, 63
      %s232 = scalar_select %p231, %s230, 63
      %s233 = smul.addr %s232, 8
      %s234 = scalar_lea.vmem %s0, %s233
      %p235 = pneg %p38
      %p236 = pneg %p35
      %p237 = pneg %p59
      %p238 = pneg %p56
      %p239 = pneg %p80
      %p240 = pneg %p77
      %s241 = smul.u32 32, %s17
      %p242 = scmp.lt.s32.totalorder %s241, 63
      %s243 = scalar_select %p242, %s241, 63
      %s244 = smul.addr %s243, 8
      %s245 = scalar_lea.vmem %s3, %s244
      %p246 = pneg %p106
      %p247 = pneg %p103
      %p248 = pneg %p127
      %p249 = pneg %p124
      %p250 = pneg %p148
      %p251 = pneg %p145
      %p252 = pneg %p174
      %p253 = pneg %p171
      %s254 = smul.u32 32, %s17
      %p255 = scmp.lt.s32.totalorder %s254, 63
      %s256 = scalar_select %p255, %s254, 63
      %s257 = smul.addr %s256, 8
      %s258 = scalar_lea.vmem %s6, %s257
      %s259 = smul.u32 32, %s17
      %p260 = scmp.lt.s32.totalorder %s259, 63
      %s261 = scalar_select %p260, %s259, 63
      %s262 = smul.addr %s261, 8
      %s263 = scalar_lea.vmem %s0, %s262
      %s264 = smul.u32 32, %s17
      %s265 = smul.u32 32, %s17
      %p266 = scmp.lt.s32.totalorder %s265, 63
      %s267 = scalar_select %p266, %s265, 63
      %s268 = smul.addr %s267, 8
      %s269 = scalar_lea.vmem %s3, %s268
      %s270 = smul.u32 32, %s17
      %s271 = smul.u32 32, %s17
      %p272 = scmp.lt.s32.totalorder %s271, 63
      %s273 = scalar_select %p272, %s271, 63
      %s274 = smul.addr %s273, 8
      %s275 = scalar_lea.vmem %s6, %s274
      %s276 = smul.u32 32, %s17
      %v277 = vld [vmem:[%s263] sm:$0xff]
      %v278 = vld [vmem:[%s263 + $0x8] sm:$0xff]
      %v279 = vld [vmem:[%s263 + $0x10] sm:$0xff]
      %v280 = vld [vmem:[%s263 + $0x18] sm:$0xff]
      %v281 = vld [vmem:[%s263 + $0x20] sm:$0xff]
      %v282 = vld [vmem:[%s263 + $0x28] sm:$0xff]
      %v283 = vld [vmem:[%s263 + $0x30] sm:$0xff]
      %v284 = vld [vmem:[%s263 + $0x38] sm:$0xff]
      %v285 = vld [vmem:[%s263 + $0x40] sm:$0xff]
      %v286 = vld [vmem:[%s263 + $0x48] sm:$0xff]
      %v287 = vld [vmem:[%s263 + $0x50] sm:$0xff]
      %v288 = vld [vmem:[%s263 + $0x58] sm:$0xff]
      %v289 = vld [vmem:[%s263 + $0x60] sm:$0xff]
      %v290 = vld [vmem:[%s263 + $0x68] sm:$0xff]
      %v291 = vld [vmem:[%s263 + $0x70] sm:$0xff]
      %v292 = vld [vmem:[%s263 + $0x78] sm:$0xff]
      %v293 = vld [vmem:[%s263 + $0x80] sm:$0xff]
      %v294 = vld [vmem:[%s263 + $0x88] sm:$0xff]
      %v295 = vld [vmem:[%s263 + $0x90] sm:$0xff]
      %v296 = vld [vmem:[%s263 + $0x98] sm:$0xff]
      %v297 = vld [vmem:[%s263 + $0xa0] sm:$0xff]
      %v298 = vld [vmem:[%s263 + $0xa8] sm:$0xff]
      %v299 = vld [vmem:[%s263 + $0xb0] sm:$0xff]
      %v300 = vld [vmem:[%s263 + $0xb8] sm:$0xff]
      %v301 = vld [vmem:[%s263 + $0xc0] sm:$0xff]
      %v302 = vld [vmem:[%s263 + $0xc8] sm:$0xff]
      %v303 = vld [vmem:[%s263 + $0xd0] sm:$0xff]
      %v304 = vld [vmem:[%s263 + $0xd8] sm:$0xff]
      %v305 = vld [vmem:[%s263 + $0xe0] sm:$0xff]
      %v306 = vld [vmem:[%s263 + $0xe8] sm:$0xff]
      %v307 = vld [vmem:[%s263 + $0xf0] sm:$0xff]
      %v308 = vld [vmem:[%s263 + $0xf8] sm:$0xff]
      %v309 = vld [vmem:[%s1] sm:$0x1]
      %v311 = vlaneseq
      %v312 = vshrl.u32 %v311, 7
      %v313 = vsub.s32 0, %v312
      %v314 = vrot.slane %v309, %v313
      %v316 = vmul.f32 %v277, %v314
      %v317 = vmul.f32 %v278, %v314
      %v318 = vmul.f32 %v279, %v314
      %v319 = vmul.f32 %v280, %v314
      %v320 = vmul.f32 %v281, %v314
      %v321 = vmul.f32 %v282, %v314
      %v322 = vmul.f32 %v283, %v314
      %v323 = vmul.f32 %v284, %v314
      %v324 = vmul.f32 %v285, %v314
      %v325 = vmul.f32 %v286, %v314
      %v326 = vmul.f32 %v287, %v314
      %v327 = vmul.f32 %v288, %v314
      %v328 = vmul.f32 %v289, %v314
      %v329 = vmul.f32 %v290, %v314
      %v330 = vmul.f32 %v291, %v314
      %v331 = vmul.f32 %v292, %v314
      %v332 = vmul.f32 %v293, %v314
      %v333 = vmul.f32 %v294, %v314
      %v334 = vmul.f32 %v295, %v314
      %v335 = vmul.f32 %v296, %v314
      %v336 = vmul.f32 %v297, %v314
      %v337 = vmul.f32 %v298, %v314
      %v338 = vmul.f32 %v299, %v314
      %v339 = vmul.f32 %v300, %v314
      %v340 = vmul.f32 %v301, %v314
      %v341 = vmul.f32 %v302, %v314
      %v342 = vmul.f32 %v303, %v314
      %v343 = vmul.f32 %v304, %v314
      %v344 = vmul.f32 %v305, %v314
      %v345 = vmul.f32 %v306, %v314
      %v346 = vmul.f32 %v307, %v314
      %v347 = vmul.f32 %v308, %v314
      %v348 = vld [vmem:[%s2] sm:$0x1]
      %v350 = vlaneseq
      %v351 = vshrl.u32 %v350, 7
      %v352 = vsub.s32 0, %v351
      %v353 = vrot.slane %v348, %v352
      %v355 = vadd.f32 %v316, %v353
      %v356 = vadd.f32 %v317, %v353
      %v357 = vadd.f32 %v318, %v353
      %v358 = vadd.f32 %v319, %v353
      %v359 = vadd.f32 %v320, %v353
      %v360 = vadd.f32 %v321, %v353
      %v361 = vadd.f32 %v322, %v353
      %v362 = vadd.f32 %v323, %v353
      %v363 = vadd.f32 %v324, %v353
      %v364 = vadd.f32 %v325, %v353
      %v365 = vadd.f32 %v326, %v353
      %v366 = vadd.f32 %v327, %v353
      %v367 = vadd.f32 %v328, %v353
      %v368 = vadd.f32 %v329, %v353
      %v369 = vadd.f32 %v330, %v353
      %v370 = vadd.f32 %v331, %v353
      %v371 = vadd.f32 %v332, %v353
      %v372 = vadd.f32 %v333, %v353
      %v373 = vadd.f32 %v334, %v353
      %v374 = vadd.f32 %v335, %v353
      %v375 = vadd.f32 %v336, %v353
      %v376 = vadd.f32 %v337, %v353
      %v377 = vadd.f32 %v338, %v353
      %v378 = vadd.f32 %v339, %v353
      %v379 = vadd.f32 %v340, %v353
      %v380 = vadd.f32 %v341, %v353
      %v381 = vadd.f32 %v342, %v353
      %v382 = vadd.f32 %v343, %v353
      %v383 = vadd.f32 %v344, %v353
      %v384 = vadd.f32 %v345, %v353
      %v385 = vadd.f32 %v346, %v353
      %v386 = vadd.f32 %v347, %v353
      %v387 = vld [vmem:[%s269] sm:$0xff]
      %v388 = vld [vmem:[%s269 + $0x8] sm:$0xff]
      %v389 = vld [vmem:[%s269 + $0x10] sm:$0xff]
      %v390 = vld [vmem:[%s269 + $0x18] sm:$0xff]
      %v391 = vld [vmem:[%s269 + $0x20] sm:$0xff]
      %v392 = vld [vmem:[%s269 + $0x28] sm:$0xff]
      %v393 = vld [vmem:[%s269 + $0x30] sm:$0xff]
      %v394 = vld [vmem:[%s269 + $0x38] sm:$0xff]
      %v395 = vld [vmem:[%s269 + $0x40] sm:$0xff]
      %v396 = vld [vmem:[%s269 + $0x48] sm:$0xff]
      %v397 = vld [vmem:[%s269 + $0x50] sm:$0xff]
      %v398 = vld [vmem:[%s269 + $0x58] sm:$0xff]
      %v399 = vld [vmem:[%s269 + $0x60] sm:$0xff]
      %v400 = vld [vmem:[%s269 + $0x68] sm:$0xff]
      %v401 = vld [vmem:[%s269 + $0x70] sm:$0xff]
      %v402 = vld [vmem:[%s269 + $0x78] sm:$0xff]
      %v403 = vld [vmem:[%s269 + $0x80] sm:$0xff]
      %v404 = vld [vmem:[%s269 + $0x88] sm:$0xff]
      %v405 = vld [vmem:[%s269 + $0x90] sm:$0xff]
      %v406 = vld [vmem:[%s269 + $0x98] sm:$0xff]
      %v407 = vld [vmem:[%s269 + $0xa0] sm:$0xff]
      %v408 = vld [vmem:[%s269 + $0xa8] sm:$0xff]
      %v409 = vld [vmem:[%s269 + $0xb0] sm:$0xff]
      %v410 = vld [vmem:[%s269 + $0xb8] sm:$0xff]
      %v411 = vld [vmem:[%s269 + $0xc0] sm:$0xff]
      %v412 = vld [vmem:[%s269 + $0xc8] sm:$0xff]
      %v413 = vld [vmem:[%s269 + $0xd0] sm:$0xff]
      %v414 = vld [vmem:[%s269 + $0xd8] sm:$0xff]
      %v415 = vld [vmem:[%s269 + $0xe0] sm:$0xff]
      %v416 = vld [vmem:[%s269 + $0xe8] sm:$0xff]
      %v417 = vld [vmem:[%s269 + $0xf0] sm:$0xff]
      %v418 = vld [vmem:[%s269 + $0xf8] sm:$0xff]
      %v419 = vld [vmem:[%s4] sm:$0x1]
      %v421 = vlaneseq
      %v422 = vshrl.u32 %v421, 7
      %v423 = vsub.s32 0, %v422
      %v424 = vrot.slane %v419, %v423
      %v426 = vmul.f32 %v387, %v424
      %v427 = vmul.f32 %v388, %v424
      %v428 = vmul.f32 %v389, %v424
      %v429 = vmul.f32 %v390, %v424
      %v430 = vmul.f32 %v391, %v424
      %v431 = vmul.f32 %v392, %v424
      %v432 = vmul.f32 %v393, %v424
      %v433 = vmul.f32 %v394, %v424
      %v434 = vmul.f32 %v395, %v424
      %v435 = vmul.f32 %v396, %v424
      %v436 = vmul.f32 %v397, %v424
      %v437 = vmul.f32 %v398, %v424
      %v438 = vmul.f32 %v399, %v424
      %v439 = vmul.f32 %v400, %v424
      %v440 = vmul.f32 %v401, %v424
      %v441 = vmul.f32 %v402, %v424
      %v442 = vmul.f32 %v403, %v424
      %v443 = vmul.f32 %v404, %v424
      %v444 = vmul.f32 %v405, %v424
      %v445 = vmul.f32 %v406, %v424
      %v446 = vmul.f32 %v407, %v424
      %v447 = vmul.f32 %v408, %v424
      %v448 = vmul.f32 %v409, %v424
      %v449 = vmul.f32 %v410, %v424
      %v450 = vmul.f32 %v411, %v424
      %v451 = vmul.f32 %v412, %v424
      %v452 = vmul.f32 %v413, %v424
      %v453 = vmul.f32 %v414, %v424
      %v454 = vmul.f32 %v415, %v424
      %v455 = vmul.f32 %v416, %v424
      %v456 = vmul.f32 %v417, %v424
      %v457 = vmul.f32 %v418, %v424
      %v458 = vadd.f32 %v355, %v426
      %v459 = vadd.f32 %v356, %v427
      %v460 = vadd.f32 %v357, %v428
      %v461 = vadd.f32 %v358, %v429
      %v462 = vadd.f32 %v359, %v430
      %v463 = vadd.f32 %v360, %v431
      %v464 = vadd.f32 %v361, %v432
      %v465 = vadd.f32 %v362, %v433
      %v466 = vadd.f32 %v363, %v434
      %v467 = vadd.f32 %v364, %v435
      %v468 = vadd.f32 %v365, %v436
      %v469 = vadd.f32 %v366, %v437
      %v470 = vadd.f32 %v367, %v438
      %v471 = vadd.f32 %v368, %v439
      %v472 = vadd.f32 %v369, %v440
      %v473 = vadd.f32 %v370, %v441
      %v474 = vadd.f32 %v371, %v442
      %v475 = vadd.f32 %v372, %v443
      %v476 = vadd.f32 %v373, %v444
      %v477 = vadd.f32 %v374, %v445
      %v478 = vadd.f32 %v375, %v446
      %v479 = vadd.f32 %v376, %v447
      %v480 = vadd.f32 %v377, %v448
      %v481 = vadd.f32 %v378, %v449
      %v482 = vadd.f32 %v379, %v450
      %v483 = vadd.f32 %v380, %v451
      %v484 = vadd.f32 %v381, %v452
      %v485 = vadd.f32 %v382, %v453
      %v486 = vadd.f32 %v383, %v454
      %v487 = vadd.f32 %v384, %v455
      %v488 = vadd.f32 %v385, %v456
      %v489 = vadd.f32 %v386, %v457
      %v490 = vld [vmem:[%s5] sm:$0x1]
      %v492 = vlaneseq
      %v493 = vshrl.u32 %v492, 7
      %v494 = vsub.s32 0, %v493
      %v495 = vrot.slane %v490, %v494
      %v497 = vadd.f32 %v458, %v495
      %v498 = vadd.f32 %v459, %v495
      %v499 = vadd.f32 %v460, %v495
      %v500 = vadd.f32 %v461, %v495
      %v501 = vadd.f32 %v462, %v495
      %v502 = vadd.f32 %v463, %v495
      %v503 = vadd.f32 %v464, %v495
      %v504 = vadd.f32 %v465, %v495
      %v505 = vadd.f32 %v466, %v495
      %v506 = vadd.f32 %v467, %v495
      %v507 = vadd.f32 %v468, %v495
      %v508 = vadd.f32 %v469, %v495
      %v509 = vadd.f32 %v470, %v495
      %v510 = vadd.f32 %v471, %v495
      %v511 = vadd.f32 %v472, %v495
      %v512 = vadd.f32 %v473, %v495
      %v513 = vadd.f32 %v474, %v495
      %v514 = vadd.f32 %v475, %v495
      %v515 = vadd.f32 %v476, %v495
      %v516 = vadd.f32 %v477, %v495
      %v517 = vadd.f32 %v478, %v495
      %v518 = vadd.f32 %v479, %v495
      %v519 = vadd.f32 %v480, %v495
      %v520 = vadd.f32 %v481, %v495
      %v521 = vadd.f32 %v482, %v495
      %v522 = vadd.f32 %v483, %v495
      %v523 = vadd.f32 %v484, %v495
      %v524 = vadd.f32 %v485, %v495
      %v525 = vadd.f32 %v486, %v495
      %v526 = vadd.f32 %v487, %v495
      %v527 = vadd.f32 %v488, %v495
      %v528 = vadd.f32 %v489, %v495
      %v529 = vmax.f32 %v497, 0.0
      %v530 = vmax.f32 %v498, 0.0
      %v531 = vmax.f32 %v499, 0.0
      %v532 = vmax.f32 %v500, 0.0
      %v533 = vmax.f32 %v501, 0.0
      %v534 = vmax.f32 %v502, 0.0
      %v535 = vmax.f32 %v503, 0.0
      %v536 = vmax.f32 %v504, 0.0
      %v537 = vmax.f32 %v505, 0.0
      %v538 = vmax.f32 %v506, 0.0
      %v539 = vmax.f32 %v507, 0.0
      %v540 = vmax.f32 %v508, 0.0
      %v541 = vmax.f32 %v509, 0.0
      %v542 = vmax.f32 %v510, 0.0
      %v543 = vmax.f32 %v511, 0.0
      %v544 = vmax.f32 %v512, 0.0
      %v545 = vmax.f32 %v513, 0.0
      %v546 = vmax.f32 %v514, 0.0
      %v547 = vmax.f32 %v515, 0.0
      %v548 = vmax.f32 %v516, 0.0
      %v549 = vmax.f32 %v517, 0.0
      %v550 = vmax.f32 %v518, 0.0
      %v551 = vmax.f32 %v519, 0.0
      %v552 = vmax.f32 %v520, 0.0
      %v553 = vmax.f32 %v521, 0.0
      %v554 = vmax.f32 %v522, 0.0
      %v555 = vmax.f32 %v523, 0.0
      %v556 = vmax.f32 %v524, 0.0
      %v557 = vmax.f32 %v525, 0.0
      %v558 = vmax.f32 %v526, 0.0
      %v559 = vmax.f32 %v527, 0.0
      %v560 = vmax.f32 %v528, 0.0
      %561 = vst [vmem:[%s275] sm:$0xff] %v529
      %562 = vst [vmem:[%s275 + $0x8] sm:$0xff] %v530
      %563 = vst [vmem:[%s275 + $0x10] sm:$0xff] %v531
      %564 = vst [vmem:[%s275 + $0x18] sm:$0xff] %v532
      %565 = vst [vmem:[%s275 + $0x20] sm:$0xff] %v533
      %566 = vst [vmem:[%s275 + $0x28] sm:$0xff] %v534
      %567 = vst [vmem:[%s275 + $0x30] sm:$0xff] %v535
      %568 = vst [vmem:[%s275 + $0x38] sm:$0xff] %v536
      %569 = vst [vmem:[%s275 + $0x40] sm:$0xff] %v537
      %570 = vst [vmem:[%s275 + $0x48] sm:$0xff] %v538
      %571 = vst [vmem:[%s275 + $0x50] sm:$0xff] %v539
      %572 = vst [vmem:[%s275 + $0x58] sm:$0xff] %v540
      %573 = vst [vmem:[%s275 + $0x60] sm:$0xff] %v541
      %574 = vst [vmem:[%s275 + $0x68] sm:$0xff] %v542
      %575 = vst [vmem:[%s275 + $0x70] sm:$0xff] %v543
      %576 = vst [vmem:[%s275 + $0x78] sm:$0xff] %v544
      %577 = vst [vmem:[%s275 + $0x80] sm:$0xff] %v545
      %578 = vst [vmem:[%s275 + $0x88] sm:$0xff] %v546
      %579 = vst [vmem:[%s275 + $0x90] sm:$0xff] %v547
      %580 = vst [vmem:[%s275 + $0x98] sm:$0xff] %v548
      %581 = vst [vmem:[%s275 + $0xa0] sm:$0xff] %v549
      %582 = vst [vmem:[%s275 + $0xa8] sm:$0xff] %v550
      %583 = vst [vmem:[%s275 + $0xb0] sm:$0xff] %v551
      %584 = vst [vmem:[%s275 + $0xb8] sm:$0xff] %v552
      %585 = vst [vmem:[%s275 + $0xc0] sm:$0xff] %v553
      %586 = vst [vmem:[%s275 + $0xc8] sm:$0xff] %v554
      %587 = vst [vmem:[%s275 + $0xd0] sm:$0xff] %v555
      %588 = vst [vmem:[%s275 + $0xd8] sm:$0xff] %v556
      %589 = vst [vmem:[%s275 + $0xe0] sm:$0xff] %v557
      %590 = vst [vmem:[%s275 + $0xe8] sm:$0xff] %v558
      %591 = vst [vmem:[%s275 + $0xf0] sm:$0xff] %v559
      %592 = vst [vmem:[%s275 + $0xf8] sm:$0xff] %v560
      %s593 = smul.u32 32, %s17
      %p594 = scmp.lt.s32.totalorder %s593, 63
      %s595 = scalar_select %p594, %s593, 63
      %s596 = smul.addr %s595, 8
      %s597 = scalar_lea.vmem %s6, %s596
      // Predicated region
      $region45: #{_bottleneck_impl.11} parent=43 // pred_check
        %p598 = pneg %p171
      $region46: #{_bottleneck_impl.11} parent=43 // pred_check_branch
        %600 = sbr.rel (%p598) target = $region48
      $region47: #{_bottleneck_impl.11} parent=43 // pred_region
        %s601 = smul.u32 32, %s17
      $region48: #{_bottleneck_impl.11} parent=43 // pred_fallthru
        _
    $region44: #{_bottleneck_impl.11} parent=5 // pred_fallthru
      _
    %p602 = scmp.le.s32.totalorder 2, %s12
    // Predicated region
    $region49: #{_bottleneck_impl.11} parent=5 // pred_check
      %p603 = pneg %p602
    $region50: #{_bottleneck_impl.11} parent=5 // pred_check_branch
      %605 = sbr.rel (%p603) target = $region52
    $region51: #{_bottleneck_impl.11} parent=5 // pred_region
      %s606 = ssub.s32 %s12, 2
      // Predicated region
      $region53: #{_bottleneck_impl.11} parent=51 // pred_check
        %p607 = pneg %p177
      $region54: #{_bottleneck_impl.11} parent=51 // pred_check_branch
        %609 = sbr.rel (%p607) target = $region56
      $region55: #{_bottleneck_impl.11} parent=51 // pred_region
        %s610 = smul.u32 32, %s18
        %p611 = scmp.lt.s32.totalorder %s610, 63
        %s612 = scalar_select %p611, %s610, 63
        %s613 = smul.addr %s612, 8
        %s614 = scalar_lea.vmem %s6, %s613
      $region56: #{_bottleneck_impl.11} parent=51 // pred_fallthru
        _
    $region52: #{_bottleneck_impl.11} parent=5 // pred_fallthru
      _
  $region6: #{_bottleneck_impl.11} parent=0 // loop_footer
    %s16 = sadd.s32 1, %s12
  $region7: #{_bottleneck_impl.11} parent=0 // loop_footer_branch
    %11 = sbr.rel target = $region3
  $region8: #{_bottleneck_impl.11} parent=0 // loop_exit
    _

// kernel: _bottleneck_impl.8
$region0: #{_bottleneck_impl.8}
  #allocation0 [shape = 'u32[]', space=smem, size = 0x4, offset = 0x4, fixed_abs, tag = 'smem constant byte address 0x4 - core index']
  #allocation1 [shape = 'u32[144,128]{1,0:T(1,128)}', space=vmem, size = 0x12000, scoped, tag = 'internal scratch']
  %s0 = inlined_call_operand.vmem [shape: bf16[512,1152], index: 0, kind: input, shape index: {}]
  %s1 = inlined_call_operand.vmem [shape: bf16[1152,128], index: 1, kind: input, shape index: {}]
  %s2 = inlined_call_operand.vmem [shape: f32[512,128], index: 2, kind: output, shape index: {0}]
  %s3 = inlined_call_operand.vmem [shape: f32[2,8,128], index: 3, kind: output, shape index: {1}]
  %4 = xla_tuple %s2, %s3
  %s5 = sld [smem:[#allocation0]]
  $region49: #{_bottleneck_impl.8} parent=0
    _
  %s7 = ssub.s32 1, %s5
  %s8 = scalar_select 0, %s7, %s5
  loop: start=0, step=1, limit=4
  $region2: #{_bottleneck_impl.8} parent=0 // loop_pre_header
    _
  $region3: #{_bottleneck_impl.8} parent=0 // loop_header
    %s10 = sphi 0, %s14
    %p11 = scmp.ge.s32.totalorder %s10, 4
    %s20 = sphi 0, %s22
    %s23 = sphi 0, %s20
    %s24 = sphi 0, %s23
    %s40 = sphi 0, %s24
    %s44 = sphi 0, %s44
    %s46 = sphi 0, %s44
    %s47 = sphi 0, %s46
    %s61 = sphi 0, %s47
    %s67 = sphi 0, %s69
    %s70 = sphi 0, %s67
    %s71 = sphi 0, %s70
    %s87 = sphi 0, %s71
    %s93 = sphi 0, %s95
    %s96 = sphi 0, %s93
    %s97 = sphi 0, %s96
    %s113 = sphi 0, %s97
  $region4: #{_bottleneck_impl.8} parent=0 // loop_header_branch
    %13 = sbr.rel (%p11) target = $region8
  $region5: #{_bottleneck_impl.8} parent=0 // loop_body
    %s15 = ssub.s32 %s10, 1
    %s16 = ssub.s32 %s10, 2
    %s17 = sadd.s32 %s10, 1
    %s18 = ssub.s32 %s10, %s17
    %p19 = scmp.eq.s32.totalorder %s18, 0
    %s21 = sadd.s32 %s20, 1
    %s22 = scalar_select %p19, %s20, %s21
    %p25 = pneg %p19
    %p26 = scmp.eq.s32.totalorder %s10, 1
    %p27 = por %p25, %p26
    %p28 = scmp.ne.s32.totalorder %s20, %s23
    %p29 = scmp.eq.s32.totalorder %s10, 0
    %p30 = por %p28, %p29
    %p31 = scmp.ne.s32.totalorder %s20, %s23
    %p32 = scmp.eq.s32.totalorder %s15, 1
    %p33 = por %p31, %p32
    %p34 = scmp.ne.s32.totalorder %s23, %s24
    %p35 = scmp.eq.s32.totalorder %s15, 0
    %p36 = por %p34, %p35
    %p37 = scmp.ne.s32.totalorder %s23, %s24
    %p38 = scmp.eq.s32.totalorder %s16, 1
    %p39 = por %p37, %p38
    %p41 = scmp.ne.s32.totalorder %s24, %s40
    %p42 = scmp.eq.s32.totalorder %s16, 0
    %p43 = por %p41, %p42
    %s45 = sadd.s32 %s44, 1
    %p48 = scmp.eq.s32.totalorder %s10, 1
    %p49 = scmp.ne.s32.totalorder %s44, %s46
    %p50 = scmp.eq.s32.totalorder %s10, 0
    %p51 = por %p49, %p50
    %p52 = scmp.ne.s32.totalorder %s44, %s46
    %p53 = scmp.eq.s32.totalorder %s15, 1
    %p54 = por %p52, %p53
    %p55 = scmp.ne.s32.totalorder %s46, %s47
    %p56 = scmp.eq.s32.totalorder %s15, 0
    %p57 = por %p55, %p56
    %p58 = scmp.ne.s32.totalorder %s46, %s47
    %p59 = scmp.eq.s32.totalorder %s16, 1
    %p60 = por %p58, %p59
    %p62 = scmp.ne.s32.totalorder %s47, %s61
    %p63 = scmp.eq.s32.totalorder %s16, 0
    %p64 = por %p62, %p63
    %s65 = ssub.s32 %s10, %s17
    %p66 = scmp.eq.s32.totalorder %s65, 0
    %s68 = sadd.s32 %s67, 1
    %s69 = scalar_select %p66, %s67, %s68
    %p72 = pneg %p66
    %p73 = scmp.eq.s32.totalorder %s10, 1
    %p74 = por %p72, %p73
    %p75 = scmp.ne.s32.totalorder %s67, %s70
    %p76 = scmp.eq.s32.totalorder %s10, 0
    %p77 = por %p75, %p76
    %p78 = scmp.ne.s32.totalorder %s67, %s70
    %p79 = scmp.eq.s32.totalorder %s15, 1
    %p80 = por %p78, %p79
    %p81 = scmp.ne.s32.totalorder %s70, %s71
    %p82 = scmp.eq.s32.totalorder %s15, 0
    %p83 = por %p81, %p82
    %p84 = scmp.ne.s32.totalorder %s70, %s71
    %p85 = scmp.eq.s32.totalorder %s16, 1
    %p86 = por %p84, %p85
    %p88 = scmp.ne.s32.totalorder %s71, %s87
    %p89 = scmp.eq.s32.totalorder %s16, 0
    %p90 = por %p88, %p89
    %s91 = ssub.s32 %s10, %s17
    %p92 = scmp.eq.s32.totalorder %s91, 0
    %s94 = sadd.s32 %s93, 1
    %s95 = scalar_select %p92, %s93, %s94
    %p98 = pneg %p92
    %p99 = scmp.eq.s32.totalorder %s10, 1
    %p100 = por %p98, %p99
    %p101 = scmp.ne.s32.totalorder %s93, %s96
    %p102 = scmp.eq.s32.totalorder %s10, 0
    %p103 = por %p101, %p102
    %p104 = scmp.ne.s32.totalorder %s93, %s96
    %p105 = scmp.eq.s32.totalorder %s15, 1
    %p106 = por %p104, %p105
    %p107 = scmp.ne.s32.totalorder %s96, %s97
    %p108 = scmp.eq.s32.totalorder %s15, 0
    %p109 = por %p107, %p108
    %p110 = scmp.ne.s32.totalorder %s96, %s97
    %p111 = scmp.eq.s32.totalorder %s16, 1
    %p112 = por %p110, %p111
    %p114 = scmp.ne.s32.totalorder %s97, %s113
    %p115 = scmp.eq.s32.totalorder %s16, 0
    %p116 = por %p114, %p115
    %p117 = scmp.le.s32.totalorder 1, %s10
    %p118 = scmp.lt.s32.totalorder %s10, 3
    %p119 = pnand %p117, %p118
    %p120 = pneg %p119
    // Predicated region
    $region9: #{_bottleneck_impl.8} parent=5 // pred_check
      _
    $region10: #{_bottleneck_impl.8} parent=5 // pred_check_branch
      %122 = sbr.rel (%p119) target = $region12
    $region11: #{_bottleneck_impl.8} parent=5 // pred_region
      %s123 = ssub.s32 %s10, 1
      // Predicated region
      $region13: #{_bottleneck_impl.8} parent=11 // pred_check
        %p124 = pneg %p57
      $region14: #{_bottleneck_impl.8} parent=11 // pred_check_branch
        %126 = sbr.rel (%p124) target = $region16
      $region15: #{_bottleneck_impl.8} parent=11 // pred_region
        _
      $region16: #{_bottleneck_impl.8} parent=11 // pred_fallthru
        _
    $region12: #{_bottleneck_impl.8} parent=5 // pred_fallthru
      _
    %p127 = scmp.lt.s32.totalorder %s10, 2
    // Predicated region
    $region17: #{_bottleneck_impl.8} parent=5 // pred_check
      %p128 = pneg %p127
    $region18: #{_bottleneck_impl.8} parent=5 // pred_check_branch
      %130 = sbr.rel (%p128) target = $region20
    $region19: #{_bottleneck_impl.8} parent=5 // pred_region
      // Predicated region
      $region21: #{_bottleneck_impl.8} parent=19 // pred_check
        %p131 = pneg %p30
      $region22: #{_bottleneck_impl.8} parent=19 // pred_check_branch
        %133 = sbr.rel (%p131) target = $region24
      $region23: #{_bottleneck_impl.8} parent=19 // pred_region
        %s134 = smul.u32 32, %s10
        %p135 = scmp.lt.s32.totalorder %s134, 63
        %s136 = scalar_select %p135, %s134, 63
        %s137 = smul.addr %s136, 9
        %s138 = smul.addr %s137, 4
        %s139 = scalar_lea.vmem %s0, %s138
        %s140 = smul.u32 32, %s10
      $region24: #{_bottleneck_impl.8} parent=19 // pred_fallthru
        _
    $region20: #{_bottleneck_impl.8} parent=5 // pred_fallthru
      _
    %p141 = scmp.le.s32.totalorder 1, %s10
    %p142 = scmp.lt.s32.totalorder %s10, 3
    %p143 = pnand %p141, %p142
    %p144 = pneg %p143
    // Predicated region
    $region25: #{_bottleneck_impl.8} parent=5 // pred_check
      _
    $region26: #{_bottleneck_impl.8} parent=5 // pred_check_branch
      %146 = sbr.rel (%p143) target = $region28
    $region27: #{_bottleneck_impl.8} parent=5 // pred_region
      %s147 = ssub.s32 %s10, 1
      %s148 = smul.u32 32, %s15
      %p149 = scmp.lt.s32.totalorder %s148, 63
      %s150 = scalar_select %p149, %s148, 63
      %s151 = smul.addr %s150, 9
      %s152 = smul.addr %s151, 4
      %s153 = scalar_lea.vmem %s0, %s152
      %p154 = pneg %p36
      %p155 = pneg %p33
      %p156 = pneg %p57
      %p157 = pneg %p54
      %p158 = pneg %p83
      %p159 = pneg %p80
      %s160 = smul.u32 32, %s15
      %p161 = scmp.lt.s32.totalorder %s160, 63
      %s162 = scalar_select %p161, %s160, 63
      %s163 = smul.addr %s162, 8
      %s164 = scalar_lea.vmem %s2, %s163
      %p165 = pneg %p109
      %p166 = pneg %p106
      %p167 = scmp.lt.s32.totalorder %s15, 1
      %s168 = scalar_select %p167, %s15, 1
      %s169 = smul.addr %s168, 8
      %s170 = scalar_lea.vmem %s3, %s169
      %s171 = smul.u32 32, %s15
      %p172 = scmp.lt.s32.totalorder %s171, 63
      %s173 = scalar_select %p172, %s171, 63
      %s174 = smul.addr %s173, 9
      %s175 = smul.addr %s174, 4
      %s176 = scalar_lea.vmem %s0, %s175
      %s177 = smul.u32 32, %s15
      %s178 = smul.u32 32, %s15
      %p179 = scmp.lt.s32.totalorder %s178, 63
      %s180 = scalar_select %p179, %s178, 63
      %s181 = smul.addr %s180, 8
      %s182 = scalar_lea.vmem %s2, %s181
      %s183 = smul.u32 32, %s15
      %p184 = scmp.lt.s32.totalorder %s15, 1
      %s185 = scalar_select %p184, %s15, 1
      %s186 = smul.addr %s185, 8
      %s187 = scalar_lea.vmem %s3, %s186
      %v189 = vld [vmem:[%s176] sm:$0xff]
      %v190 = vld [vmem:[%s176 + $0x8] sm:$0xff]
      %v191 = vld [vmem:[%s176 + $0x10] sm:$0xff]
      %v192 = vld [vmem:[%s176 + $0x18] sm:$0xff]
      %v193 = vld [vmem:[%s176 + $0x20] sm:$0xf]
      %v194 = vld [vmem:[%s176 + $0x24] sm:$0xff]
      %v195 = vld [vmem:[%s176 + $0x2c] sm:$0xff]
      %v196 = vld [vmem:[%s176 + $0x34] sm:$0xff]
      %v197 = vld [vmem:[%s176 + $0x3c] sm:$0xff]
      %v198 = vld [vmem:[%s176 + $0x44] sm:$0xf]
      %v199 = vld [vmem:[%s176 + $0x48] sm:$0xff]
      %v200 = vld [vmem:[%s176 + $0x50] sm:$0xff]
      %v201 = vld [vmem:[%s176 + $0x58] sm:$0xff]
      %v202 = vld [vmem:[%s176 + $0x60] sm:$0xff]
      %v203 = vld [vmem:[%s176 + $0x68] sm:$0xf]
      %v204 = vld [vmem:[%s176 + $0x6c] sm:$0xff]
      %v205 = vld [vmem:[%s176 + $0x74] sm:$0xff]
      %v206 = vld [vmem:[%s176 + $0x7c] sm:$0xff]
      %v207 = vld [vmem:[%s176 + $0x84] sm:$0xff]
      %v208 = vld [vmem:[%s176 + $0x8c] sm:$0xf]
      %v209 = vld [vmem:[%s176 + $0x90] sm:$0xff]
      %v210 = vld [vmem:[%s176 + $0x98] sm:$0xff]
      %v211 = vld [vmem:[%s176 + $0xa0] sm:$0xff]
      %v212 = vld [vmem:[%s176 + $0xa8] sm:$0xff]
      %v213 = vld [vmem:[%s176 + $0xb0] sm:$0xf]
      %v214 = vld [vmem:[%s176 + $0xb4] sm:$0xff]
      %v215 = vld [vmem:[%s176 + $0xbc] sm:$0xff]
      %v216 = vld [vmem:[%s176 + $0xc4] sm:$0xff]
      %v217 = vld [vmem:[%s176 + $0xcc] sm:$0xff]
      %v218 = vld [vmem:[%s176 + $0xd4] sm:$0xf]
      %v219 = vld [vmem:[%s176 + $0xd8] sm:$0xff]
      %v220 = vld [vmem:[%s176 + $0xe0] sm:$0xff]
      %v221 = vld [vmem:[%s176 + $0xe8] sm:$0xff]
      %v222 = vld [vmem:[%s176 + $0xf0] sm:$0xff]
      %v223 = vld [vmem:[%s176 + $0xf8] sm:$0xf]
      %v224 = vld [vmem:[%s176 + $0xfc] sm:$0xff]
      %v225 = vld [vmem:[%s176 + $0x104] sm:$0xff]
      %v226 = vld [vmem:[%s176 + $0x10c] sm:$0xff]
      %v227 = vld [vmem:[%s176 + $0x114] sm:$0xff]
      %v228 = vld [vmem:[%s176 + $0x11c] sm:$0xf]
      %v229 = vld [vmem:[%s176 + $0x120] sm:$0xff]
      %v230 = vld [vmem:[%s176 + $0x128] sm:$0xff]
      %v231 = vld [vmem:[%s176 + $0x130] sm:$0xff]
      %v232 = vld [vmem:[%s176 + $0x138] sm:$0xff]
      %v233 = vld [vmem:[%s176 + $0x140] sm:$0xf]
      %v234 = vld [vmem:[%s176 + $0x144] sm:$0xff]
      %v235 = vld [vmem:[%s176 + $0x14c] sm:$0xff]
      %v236 = vld [vmem:[%s176 + $0x154] sm:$0xff]
      %v237 = vld [vmem:[%s176 + $0x15c] sm:$0xff]
      %v238 = vld [vmem:[%s176 + $0x164] sm:$0xf]
      %v239 = vld [vmem:[%s176 + $0x168] sm:$0xff]
      %v240 = vld [vmem:[%s176 + $0x170] sm:$0xff]
      %v241 = vld [vmem:[%s176 + $0x178] sm:$0xff]
      %v242 = vld [vmem:[%s176 + $0x180] sm:$0xff]
      %v243 = vld [vmem:[%s176 + $0x188] sm:$0xf]
      %v244 = vld [vmem:[%s176 + $0x18c] sm:$0xff]
      %v245 = vld [vmem:[%s176 + $0x194] sm:$0xff]
      %v246 = vld [vmem:[%s176 + $0x19c] sm:$0xff]
      %v247 = vld [vmem:[%s176 + $0x1a4] sm:$0xff]
      %v248 = vld [vmem:[%s176 + $0x1ac] sm:$0xf]
      %v249 = vld [vmem:[%s176 + $0x1b0] sm:$0xff]
      %v250 = vld [vmem:[%s176 + $0x1b8] sm:$0xff]
      %v251 = vld [vmem:[%s176 + $0x1c0] sm:$0xff]
      %v252 = vld [vmem:[%s176 + $0x1c8] sm:$0xff]
      %v253 = vld [vmem:[%s176 + $0x1d0] sm:$0xf]
      %v254 = vld [vmem:[%s176 + $0x1d4] sm:$0xff]
      %v255 = vld [vmem:[%s176 + $0x1dc] sm:$0xff]
      %v256 = vld [vmem:[%s176 + $0x1e4] sm:$0xff]
      %v257 = vld [vmem:[%s176 + $0x1ec] sm:$0xff]
      %v258 = vld [vmem:[%s176 + $0x1f4] sm:$0xf]
      %v259 = vld [vmem:[%s176 + $0x1f8] sm:$0xff]
      %v260 = vld [vmem:[%s176 + $0x200] sm:$0xff]
      %v261 = vld [vmem:[%s176 + $0x208] sm:$0xff]
      %v262 = vld [vmem:[%s176 + $0x210] sm:$0xff]
      %v263 = vld [vmem:[%s176 + $0x218] sm:$0xf]
      %v264 = vld [vmem:[%s176 + $0x21c] sm:$0xff]
      %v265 = vld [vmem:[%s176 + $0x224] sm:$0xff]
      %v266 = vld [vmem:[%s176 + $0x22c] sm:$0xff]
      %v267 = vld [vmem:[%s176 + $0x234] sm:$0xff]
      %v268 = vld [vmem:[%s176 + $0x23c] sm:$0xf]
      %v269 = vld [vmem:[%s176 + $0x240] sm:$0xff]
      %v270 = vld [vmem:[%s176 + $0x248] sm:$0xff]
      %v271 = vld [vmem:[%s176 + $0x250] sm:$0xff]
      %v272 = vld [vmem:[%s176 + $0x258] sm:$0xff]
      %v273 = vld [vmem:[%s176 + $0x260] sm:$0xf]
      %v274 = vld [vmem:[%s176 + $0x264] sm:$0xff]
      %v275 = vld [vmem:[%s176 + $0x26c] sm:$0xff]
      %v276 = vld [vmem:[%s176 + $0x274] sm:$0xff]
      %v277 = vld [vmem:[%s176 + $0x27c] sm:$0xff]
      %v278 = vld [vmem:[%s176 + $0x284] sm:$0xf]
      %v279 = vld [vmem:[%s176 + $0x288] sm:$0xff]
      %v280 = vld [vmem:[%s176 + $0x290] sm:$0xff]
      %v281 = vld [vmem:[%s176 + $0x298] sm:$0xff]
      %v282 = vld [vmem:[%s176 + $0x2a0] sm:$0xff]
      %v283 = vld [vmem:[%s176 + $0x2a8] sm:$0xf]
      %v284 = vld [vmem:[%s176 + $0x2ac] sm:$0xff]
      %v285 = vld [vmem:[%s176 + $0x2b4] sm:$0xff]
      %v286 = vld [vmem:[%s176 + $0x2bc] sm:$0xff]
      %v287 = vld [vmem:[%s176 + $0x2c4] sm:$0xff]
      %v288 = vld [vmem:[%s176 + $0x2cc] sm:$0xf]
      %v289 = vld [vmem:[%s176 + $0x2d0] sm:$0xff]
      %v290 = vld [vmem:[%s176 + $0x2d8] sm:$0xff]
      %v291 = vld [vmem:[%s176 + $0x2e0] sm:$0xff]
      %v292 = vld [vmem:[%s176 + $0x2e8] sm:$0xff]
      %v293 = vld [vmem:[%s176 + $0x2f0] sm:$0xf]
      %v294 = vld [vmem:[%s176 + $0x2f4] sm:$0xff]
      %v295 = vld [vmem:[%s176 + $0x2fc] sm:$0xff]
      %v296 = vld [vmem:[%s176 + $0x304] sm:$0xff]
      %v297 = vld [vmem:[%s176 + $0x30c] sm:$0xff]
      %v298 = vld [vmem:[%s176 + $0x314] sm:$0xf]
      %v299 = vld [vmem:[%s176 + $0x318] sm:$0xff]
      %v300 = vld [vmem:[%s176 + $0x320] sm:$0xff]
      %v301 = vld [vmem:[%s176 + $0x328] sm:$0xff]
      %v302 = vld [vmem:[%s176 + $0x330] sm:$0xff]
      %v303 = vld [vmem:[%s176 + $0x338] sm:$0xf]
      %v304 = vld [vmem:[%s176 + $0x33c] sm:$0xff]
      %v305 = vld [vmem:[%s176 + $0x344] sm:$0xff]
      %v306 = vld [vmem:[%s176 + $0x34c] sm:$0xff]
      %v307 = vld [vmem:[%s176 + $0x354] sm:$0xff]
      %v308 = vld [vmem:[%s176 + $0x35c] sm:$0xf]
      %v309 = vld [vmem:[%s176 + $0x360] sm:$0xff]
      %v310 = vld [vmem:[%s176 + $0x368] sm:$0xff]
      %v311 = vld [vmem:[%s176 + $0x370] sm:$0xff]
      %v312 = vld [vmem:[%s176 + $0x378] sm:$0xff]
      %v313 = vld [vmem:[%s176 + $0x380] sm:$0xf]
      %v314 = vld [vmem:[%s176 + $0x384] sm:$0xff]
      %v315 = vld [vmem:[%s176 + $0x38c] sm:$0xff]
      %v316 = vld [vmem:[%s176 + $0x394] sm:$0xff]
      %v317 = vld [vmem:[%s176 + $0x39c] sm:$0xff]
      %v318 = vld [vmem:[%s176 + $0x3a4] sm:$0xf]
      %v319 = vld [vmem:[%s176 + $0x3a8] sm:$0xff]
      %v320 = vld [vmem:[%s176 + $0x3b0] sm:$0xff]
      %v321 = vld [vmem:[%s176 + $0x3b8] sm:$0xff]
      %v322 = vld [vmem:[%s176 + $0x3c0] sm:$0xff]
      %v323 = vld [vmem:[%s176 + $0x3c8] sm:$0xf]
      %v324 = vld [vmem:[%s176 + $0x3cc] sm:$0xff]
      %v325 = vld [vmem:[%s176 + $0x3d4] sm:$0xff]
      %v326 = vld [vmem:[%s176 + $0x3dc] sm:$0xff]
      %v327 = vld [vmem:[%s176 + $0x3e4] sm:$0xff]
      %v328 = vld [vmem:[%s176 + $0x3ec] sm:$0xf]
      %v329 = vld [vmem:[%s176 + $0x3f0] sm:$0xff]
      %v330 = vld [vmem:[%s176 + $0x3f8] sm:$0xff]
      %v331 = vld [vmem:[%s176 + $0x400] sm:$0xff]
      %v332 = vld [vmem:[%s176 + $0x408] sm:$0xff]
      %v333 = vld [vmem:[%s176 + $0x410] sm:$0xf]
      %v334 = vld [vmem:[%s176 + $0x414] sm:$0xff]
      %v335 = vld [vmem:[%s176 + $0x41c] sm:$0xff]
      %v336 = vld [vmem:[%s176 + $0x424] sm:$0xff]
      %v337 = vld [vmem:[%s176 + $0x42c] sm:$0xff]
      %v338 = vld [vmem:[%s176 + $0x434] sm:$0xf]
      %v339 = vld [vmem:[%s176 + $0x438] sm:$0xff]
      %v340 = vld [vmem:[%s176 + $0x440] sm:$0xff]
      %v341 = vld [vmem:[%s176 + $0x448] sm:$0xff]
      %v342 = vld [vmem:[%s176 + $0x450] sm:$0xff]
      %v343 = vld [vmem:[%s176 + $0x458] sm:$0xf]
      %v344 = vld [vmem:[%s176 + $0x45c] sm:$0xff]
      %v345 = vld [vmem:[%s176 + $0x464] sm:$0xff]
      %v346 = vld [vmem:[%s176 + $0x46c] sm:$0xff]
      %v347 = vld [vmem:[%s176 + $0x474] sm:$0xff]
      %v348 = vld [vmem:[%s176 + $0x47c] sm:$0xf]
      %v349 = vld [vmem:[%s1] sm:$0xf]
      %v350 = vld [vmem:[%s1 + $0x4] sm:$0xf]
      %v351 = vld [vmem:[%s1 + $0x8] sm:$0xf]
      %v352 = vld [vmem:[%s1 + $0xc] sm:$0xf]
      %v353 = vld [vmem:[%s1 + $0x10] sm:$0xf]
      %v354 = vld [vmem:[%s1 + $0x14] sm:$0xf]
      %v355 = vld [vmem:[%s1 + $0x18] sm:$0xf]
      %v356 = vld [vmem:[%s1 + $0x1c] sm:$0xf]
      %v357 = vld [vmem:[%s1 + $0x20] sm:$0xf]
      %v358 = vld [vmem:[%s1 + $0x24] sm:$0xf]
      %v359 = vld [vmem:[%s1 + $0x28] sm:$0xf]
      %v360 = vld [vmem:[%s1 + $0x2c] sm:$0xf]
      %v361 = vld [vmem:[%s1 + $0x30] sm:$0xf]
      %v362 = vld [vmem:[%s1 + $0x34] sm:$0xf]
      %v363 = vld [vmem:[%s1 + $0x38] sm:$0xf]
      %v364 = vld [vmem:[%s1 + $0x3c] sm:$0xf]
      %v365 = vld [vmem:[%s1 + $0x40] sm:$0xf]
      %v366 = vld [vmem:[%s1 + $0x44] sm:$0xf]
      %v367 = vld [vmem:[%s1 + $0x48] sm:$0xf]
      %v368 = vld [vmem:[%s1 + $0x4c] sm:$0xf]
      %v369 = vld [vmem:[%s1 + $0x50] sm:$0xf]
      %v370 = vld [vmem:[%s1 + $0x54] sm:$0xf]
      %v371 = vld [vmem:[%s1 + $0x58] sm:$0xf]
      %v372 = vld [vmem:[%s1 + $0x5c] sm:$0xf]
      %v373 = vld [vmem:[%s1 + $0x60] sm:$0xf]
      %v374 = vld [vmem:[%s1 + $0x64] sm:$0xf]
      %v375 = vld [vmem:[%s1 + $0x68] sm:$0xf]
      %v376 = vld [vmem:[%s1 + $0x6c] sm:$0xf]
      %v377 = vld [vmem:[%s1 + $0x70] sm:$0xf]
      %v378 = vld [vmem:[%s1 + $0x74] sm:$0xf]
      %v379 = vld [vmem:[%s1 + $0x78] sm:$0xf]
      %v380 = vld [vmem:[%s1 + $0x7c] sm:$0xf]
      %v381 = vld [vmem:[%s1 + $0x80] sm:$0xf]
      %v382 = vld [vmem:[%s1 + $0x84] sm:$0xf]
      %v383 = vld [vmem:[%s1 + $0x88] sm:$0xf]
      %v384 = vld [vmem:[%s1 + $0x8c] sm:$0xf]
      %v385 = vld [vmem:[%s1 + $0x90] sm:$0xf]
      %v386 = vld [vmem:[%s1 + $0x94] sm:$0xf]
      %v387 = vld [vmem:[%s1 + $0x98] sm:$0xf]
      %v388 = vld [vmem:[%s1 + $0x9c] sm:$0xf]
      %v389 = vld [vmem:[%s1 + $0xa0] sm:$0xf]
      %v390 = vld [vmem:[%s1 + $0xa4] sm:$0xf]
      %v391 = vld [vmem:[%s1 + $0xa8] sm:$0xf]
      %v392 = vld [vmem:[%s1 + $0xac] sm:$0xf]
      %v393 = vld [vmem:[%s1 + $0xb0] sm:$0xf]
      %v394 = vld [vmem:[%s1 + $0xb4] sm:$0xf]
      %v395 = vld [vmem:[%s1 + $0xb8] sm:$0xf]
      %v396 = vld [vmem:[%s1 + $0xbc] sm:$0xf]
      %v397 = vld [vmem:[%s1 + $0xc0] sm:$0xf]
      %v398 = vld [vmem:[%s1 + $0xc4] sm:$0xf]
      %v399 = vld [vmem:[%s1 + $0xc8] sm:$0xf]
      %v400 = vld [vmem:[%s1 + $0xcc] sm:$0xf]
      %v401 = vld [vmem:[%s1 + $0xd0] sm:$0xf]
      %v402 = vld [vmem:[%s1 + $0xd4] sm:$0xf]
      %v403 = vld [vmem:[%s1 + $0xd8] sm:$0xf]
      %v404 = vld [vmem:[%s1 + $0xdc] sm:$0xf]
      %v405 = vld [vmem:[%s1 + $0xe0] sm:$0xf]
      %v406 = vld [vmem:[%s1 + $0xe4] sm:$0xf]
      %v407 = vld [vmem:[%s1 + $0xe8] sm:$0xf]
      %v408 = vld [vmem:[%s1 + $0xec] sm:$0xf]
      %v409 = vld [vmem:[%s1 + $0xf0] sm:$0xf]
      %v410 = vld [vmem:[%s1 + $0xf4] sm:$0xf]
      %v411 = vld [vmem:[%s1 + $0xf8] sm:$0xf]
      %v412 = vld [vmem:[%s1 + $0xfc] sm:$0xf]
      %v413 = vld [vmem:[%s1 + $0x100] sm:$0xf]
      %v414 = vld [vmem:[%s1 + $0x104] sm:$0xf]
      %v415 = vld [vmem:[%s1 + $0x108] sm:$0xf]
      %v416 = vld [vmem:[%s1 + $0x10c] sm:$0xf]
      %v417 = vld [vmem:[%s1 + $0x110] sm:$0xf]
      %v418 = vld [vmem:[%s1 + $0x114] sm:$0xf]
      %v419 = vld [vmem:[%s1 + $0x118] sm:$0xf]
      %v420 = vld [vmem:[%s1 + $0x11c] sm:$0xf]
      %v421 = vld [vmem:[%s1 + $0x120] sm:$0xf]
      %v422 = vld [vmem:[%s1 + $0x124] sm:$0xf]
      %v423 = vld [vmem:[%s1 + $0x128] sm:$0xf]
      %v424 = vld [vmem:[%s1 + $0x12c] sm:$0xf]
      %v425 = vld [vmem:[%s1 + $0x130] sm:$0xf]
      %v426 = vld [vmem:[%s1 + $0x134] sm:$0xf]
      %v427 = vld [vmem:[%s1 + $0x138] sm:$0xf]
      %v428 = vld [vmem:[%s1 + $0x13c] sm:$0xf]
      %v429 = vld [vmem:[%s1 + $0x140] sm:$0xf]
      %v430 = vld [vmem:[%s1 + $0x144] sm:$0xf]
      %v431 = vld [vmem:[%s1 + $0x148] sm:$0xf]
      %v432 = vld [vmem:[%s1 + $0x14c] sm:$0xf]
      %v433 = vld [vmem:[%s1 + $0x150] sm:$0xf]
      %v434 = vld [vmem:[%s1 + $0x154] sm:$0xf]
      %v435 = vld [vmem:[%s1 + $0x158] sm:$0xf]
      %v436 = vld [vmem:[%s1 + $0x15c] sm:$0xf]
      %v437 = vld [vmem:[%s1 + $0x160] sm:$0xf]
      %v438 = vld [vmem:[%s1 + $0x164] sm:$0xf]
      %v439 = vld [vmem:[%s1 + $0x168] sm:$0xf]
      %v440 = vld [vmem:[%s1 + $0x16c] sm:$0xf]
      %v441 = vld [vmem:[%s1 + $0x170] sm:$0xf]
      %v442 = vld [vmem:[%s1 + $0x174] sm:$0xf]
      %v443 = vld [vmem:[%s1 + $0x178] sm:$0xf]
      %v444 = vld [vmem:[%s1 + $0x17c] sm:$0xf]
      %v445 = vld [vmem:[%s1 + $0x180] sm:$0xf]
      %v446 = vld [vmem:[%s1 + $0x184] sm:$0xf]
      %v447 = vld [vmem:[%s1 + $0x188] sm:$0xf]
      %v448 = vld [vmem:[%s1 + $0x18c] sm:$0xf]
      %v449 = vld [vmem:[%s1 + $0x190] sm:$0xf]
      %v450 = vld [vmem:[%s1 + $0x194] sm:$0xf]
      %v451 = vld [vmem:[%s1 + $0x198] sm:$0xf]
      %v452 = vld [vmem:[%s1 + $0x19c] sm:$0xf]
      %v453 = vld [vmem:[%s1 + $0x1a0] sm:$0xf]
      %v454 = vld [vmem:[%s1 + $0x1a4] sm:$0xf]
      %v455 = vld [vmem:[%s1 + $0x1a8] sm:$0xf]
      %v456 = vld [vmem:[%s1 + $0x1ac] sm:$0xf]
      %v457 = vld [vmem:[%s1 + $0x1b0] sm:$0xf]
      %v458 = vld [vmem:[%s1 + $0x1b4] sm:$0xf]
      %v459 = vld [vmem:[%s1 + $0x1b8] sm:$0xf]
      %v460 = vld [vmem:[%s1 + $0x1bc] sm:$0xf]
      %v461 = vld [vmem:[%s1 + $0x1c0] sm:$0xf]
      %v462 = vld [vmem:[%s1 + $0x1c4] sm:$0xf]
      %v463 = vld [vmem:[%s1 + $0x1c8] sm:$0xf]
      %v464 = vld [vmem:[%s1 + $0x1cc] sm:$0xf]
      %v465 = vld [vmem:[%s1 + $0x1d0] sm:$0xf]
      %v466 = vld [vmem:[%s1 + $0x1d4] sm:$0xf]
      %v467 = vld [vmem:[%s1 + $0x1d8] sm:$0xf]
      %v468 = vld [vmem:[%s1 + $0x1dc] sm:$0xf]
      %v469 = vld [vmem:[%s1 + $0x1e0] sm:$0xf]
      %v470 = vld [vmem:[%s1 + $0x1e4] sm:$0xf]
      %v471 = vld [vmem:[%s1 + $0x1e8] sm:$0xf]
      %v472 = vld [vmem:[%s1 + $0x1ec] sm:$0xf]
      %v473 = vld [vmem:[%s1 + $0x1f0] sm:$0xf]
      %v474 = vld [vmem:[%s1 + $0x1f4] sm:$0xf]
      %v475 = vld [vmem:[%s1 + $0x1f8] sm:$0xf]
      %v476 = vld [vmem:[%s1 + $0x1fc] sm:$0xf]
      %v477 = vld [vmem:[%s1 + $0x200] sm:$0xf]
      %v478 = vld [vmem:[%s1 + $0x204] sm:$0xf]
      %v479 = vld [vmem:[%s1 + $0x208] sm:$0xf]
      %v480 = vld [vmem:[%s1 + $0x20c] sm:$0xf]
      %v481 = vld [vmem:[%s1 + $0x210] sm:$0xf]
      %v482 = vld [vmem:[%s1 + $0x214] sm:$0xf]
      %v483 = vld [vmem:[%s1 + $0x218] sm:$0xf]
      %v484 = vld [vmem:[%s1 + $0x21c] sm:$0xf]
      %v485 = vld [vmem:[%s1 + $0x220] sm:$0xf]
      %v486 = vld [vmem:[%s1 + $0x224] sm:$0xf]
      %v487 = vld [vmem:[%s1 + $0x228] sm:$0xf]
      %v488 = vld [vmem:[%s1 + $0x22c] sm:$0xf]
      %v489 = vld [vmem:[%s1 + $0x230] sm:$0xf]
      %v490 = vld [vmem:[%s1 + $0x234] sm:$0xf]
      %v491 = vld [vmem:[%s1 + $0x238] sm:$0xf]
      %v492 = vld [vmem:[%s1 + $0x23c] sm:$0xf]
      %v653 = vunpack.c.l.b16 %v189
      %v654 = vunpack.c.h.b16 %v189
      %v655 = vunpack.c.l.b16 %v190
      %v656 = vunpack.c.h.b16 %v190
      %v657 = vunpack.c.l.b16 %v191
      %v658 = vunpack.c.h.b16 %v191
      %v659 = vunpack.c.l.b16 %v192
      %v660 = vunpack.c.h.b16 %v192
      %v661 = vunpack.c.l.b16 %v193
      %v662 = vunpack.c.l.b16 %v194
      %v663 = vunpack.c.h.b16 %v194
      %v664 = vunpack.c.l.b16 %v195
      %v665 = vunpack.c.h.b16 %v195
      %v666 = vunpack.c.l.b16 %v196
      %v667 = vunpack.c.h.b16 %v196
      %v668 = vunpack.c.l.b16 %v197
      %v669 = vunpack.c.h.b16 %v197
      %v670 = vunpack.c.l.b16 %v198
      %v671 = vunpack.c.l.b16 %v199
      %v672 = vunpack.c.h.b16 %v199
      %v673 = vunpack.c.l.b16 %v200
      %v674 = vunpack.c.h.b16 %v200
      %v675 = vunpack.c.l.b16 %v201
      %v676 = vunpack.c.h.b16 %v201
      %v677 = vunpack.c.l.b16 %v202
      %v678 = vunpack.c.h.b16 %v202
      %v679 = vunpack.c.l.b16 %v203
      %v680 = vunpack.c.l.b16 %v204
      %v681 = vunpack.c.h.b16 %v204
      %v682 = vunpack.c.l.b16 %v205
      %v683 = vunpack.c.h.b16 %v205
      %v684 = vunpack.c.l.b16 %v206
      %v685 = vunpack.c.h.b16 %v206
      %v686 = vunpack.c.l.b16 %v207
      %v687 = vunpack.c.h.b16 %v207
      %v688 = vunpack.c.l.b16 %v208
      %v689 = vunpack.c.l.b16 %v209
      %v690 = vunpack.c.h.b16 %v209
      %v691 = vunpack.c.l.b16 %v210
      %v692 = vunpack.c.h.b16 %v210
      %v693 = vunpack.c.l.b16 %v211
      %v694 = vunpack.c.h.b16 %v211
      %v695 = vunpack.c.l.b16 %v212
      %v696 = vunpack.c.h.b16 %v212
      %v697 = vunpack.c.l.b16 %v213
      %v698 = vunpack.c.l.b16 %v214
      %v699 = vunpack.c.h.b16 %v214
      %v700 = vunpack.c.l.b16 %v215
      %v701 = vunpack.c.h.b16 %v215
      %v702 = vunpack.c.l.b16 %v216
      %v703 = vunpack.c.h.b16 %v216
      %v704 = vunpack.c.l.b16 %v217
      %v705 = vunpack.c.h.b16 %v217
      %v706 = vunpack.c.l.b16 %v218
      %v707 = vunpack.c.l.b16 %v219
      %v708 = vunpack.c.h.b16 %v219
      %v709 = vunpack.c.l.b16 %v220
      %v710 = vunpack.c.h.b16 %v220
      %v711 = vunpack.c.l.b16 %v221
      %v712 = vunpack.c.h.b16 %v221
      %v713 = vunpack.c.l.b16 %v222
      %v714 = vunpack.c.h.b16 %v222
      %v715 = vunpack.c.l.b16 %v223
      %v716 = vunpack.c.l.b16 %v224
      %v717 = vunpack.c.h.b16 %v224
      %v718 = vunpack.c.l.b16 %v225
      %v719 = vunpack.c.h.b16 %v225
      %v720 = vunpack.c.l.b16 %v226
      %v721 = vunpack.c.h.b16 %v226
      %v722 = vunpack.c.l.b16 %v227
      %v723 = vunpack.c.h.b16 %v227
      %v724 = vunpack.c.l.b16 %v228
      %v725 = vunpack.c.l.b16 %v229
      %v726 = vunpack.c.h.b16 %v229
      %v727 = vunpack.c.l.b16 %v230
      %v728 = vunpack.c.h.b16 %v230
      %v729 = vunpack.c.l.b16 %v231
      %v730 = vunpack.c.h.b16 %v231
      %v731 = vunpack.c.l.b16 %v232
      %v732 = vunpack.c.h.b16 %v232
      %v733 = vunpack.c.l.b16 %v233
      %v734 = vunpack.c.l.b16 %v234
      %v735 = vunpack.c.h.b16 %v234
      %v736 = vunpack.c.l.b16 %v235
      %v737 = vunpack.c.h.b16 %v235
      %v738 = vunpack.c.l.b16 %v236
      %v739 = vunpack.c.h.b16 %v236
      %v740 = vunpack.c.l.b16 %v237
      %v741 = vunpack.c.h.b16 %v237
      %v742 = vunpack.c.l.b16 %v238
      %v743 = vunpack.c.l.b16 %v239
      %v744 = vunpack.c.h.b16 %v239
      %v745 = vunpack.c.l.b16 %v240
      %v746 = vunpack.c.h.b16 %v240
      %v747 = vunpack.c.l.b16 %v241
      %v748 = vunpack.c.h.b16 %v241
      %v749 = vunpack.c.l.b16 %v242
      %v750 = vunpack.c.h.b16 %v242
      %v751 = vunpack.c.l.b16 %v243
      %v752 = vunpack.c.l.b16 %v244
      %v753 = vunpack.c.h.b16 %v244
      %v754 = vunpack.c.l.b16 %v245
      %v755 = vunpack.c.h.b16 %v245
      %v756 = vunpack.c.l.b16 %v246
      %v757 = vunpack.c.h.b16 %v246
      %v758 = vunpack.c.l.b16 %v247
      %v759 = vunpack.c.h.b16 %v247
      %v760 = vunpack.c.l.b16 %v248
      %v761 = vunpack.c.l.b16 %v249
      %v762 = vunpack.c.h.b16 %v249
      %v763 = vunpack.c.l.b16 %v250
      %v764 = vunpack.c.h.b16 %v250
      %v765 = vunpack.c.l.b16 %v251
      %v766 = vunpack.c.h.b16 %v251
      %v767 = vunpack.c.l.b16 %v252
      %v768 = vunpack.c.h.b16 %v252
      %v769 = vunpack.c.l.b16 %v253
      %v770 = vunpack.c.l.b16 %v254
      %v771 = vunpack.c.h.b16 %v254
      %v772 = vunpack.c.l.b16 %v255
      %v773 = vunpack.c.h.b16 %v255
      %v774 = vunpack.c.l.b16 %v256
      %v775 = vunpack.c.h.b16 %v256
      %v776 = vunpack.c.l.b16 %v257
      %v777 = vunpack.c.h.b16 %v257
      %v778 = vunpack.c.l.b16 %v258
      %v779 = vunpack.c.l.b16 %v259
      %v780 = vunpack.c.h.b16 %v259
      %v781 = vunpack.c.l.b16 %v260
      %v782 = vunpack.c.h.b16 %v260
      %v783 = vunpack.c.l.b16 %v261
      %v784 = vunpack.c.h.b16 %v261
      %v785 = vunpack.c.l.b16 %v262
      %v786 = vunpack.c.h.b16 %v262
      %v787 = vunpack.c.l.b16 %v263
      %v788 = vunpack.c.l.b16 %v264
      %v789 = vunpack.c.h.b16 %v264
      %v790 = vunpack.c.l.b16 %v265
      %v791 = vunpack.c.h.b16 %v265
      %v792 = vunpack.c.l.b16 %v266
      %v793 = vunpack.c.h.b16 %v266
      %v794 = vunpack.c.l.b16 %v267
      %v795 = vunpack.c.h.b16 %v267
      %v796 = vunpack.c.l.b16 %v268
      %v797 = vunpack.c.l.b16 %v269
      %v798 = vunpack.c.h.b16 %v269
      %v799 = vunpack.c.l.b16 %v270
      %v800 = vunpack.c.h.b16 %v270
      %v801 = vunpack.c.l.b16 %v271
      %v802 = vunpack.c.h.b16 %v271
      %v803 = vunpack.c.l.b16 %v272
      %v804 = vunpack.c.h.b16 %v272
      %v805 = vunpack.c.l.b16 %v273
      %v806 = vunpack.c.l.b16 %v274
      %v807 = vunpack.c.h.b16 %v274
      %v808 = vunpack.c.l.b16 %v275
      %v809 = vunpack.c.h.b16 %v275
      %v810 = vunpack.c.l.b16 %v276
      %v811 = vunpack.c.h.b16 %v276
      %v812 = vunpack.c.l.b16 %v277
      %v813 = vunpack.c.h.b16 %v277
      %v814 = vunpack.c.l.b16 %v278
      %v815 = vunpack.c.l.b16 %v279
      %v816 = vunpack.c.h.b16 %v279
      %v817 = vunpack.c.l.b16 %v280
      %v818 = vunpack.c.h.b16 %v280
      %v819 = vunpack.c.l.b16 %v281
      %v820 = vunpack.c.h.b16 %v281
      %v821 = vunpack.c.l.b16 %v282
      %v822 = vunpack.c.h.b16 %v282
      %v823 = vunpack.c.l.b16 %v283
      %v824 = vunpack.c.l.b16 %v284
      %v825 = vunpack.c.h.b16 %v284
      %v826 = vunpack.c.l.b16 %v285
      %v827 = vunpack.c.h.b16 %v285
      %v828 = vunpack.c.l.b16 %v286
      %v829 = vunpack.c.h.b16 %v286
      %v830 = vunpack.c.l.b16 %v287
      %v831 = vunpack.c.h.b16 %v287
      %v832 = vunpack.c.l.b16 %v288
      %v833 = vunpack.c.l.b16 %v289
      %v834 = vunpack.c.h.b16 %v289
      %v835 = vunpack.c.l.b16 %v290
      %v836 = vunpack.c.h.b16 %v290
      %v837 = vunpack.c.l.b16 %v291
      %v838 = vunpack.c.h.b16 %v291
      %v839 = vunpack.c.l.b16 %v292
      %v840 = vunpack.c.h.b16 %v292
      %v841 = vunpack.c.l.b16 %v293
      %v842 = vunpack.c.l.b16 %v294
      %v843 = vunpack.c.h.b16 %v294
      %v844 = vunpack.c.l.b16 %v295
      %v845 = vunpack.c.h.b16 %v295
      %v846 = vunpack.c.l.b16 %v296
      %v847 = vunpack.c.h.b16 %v296
      %v848 = vunpack.c.l.b16 %v297
      %v849 = vunpack.c.h.b16 %v297
      %v850 = vunpack.c.l.b16 %v298
      %v851 = vunpack.c.l.b16 %v299
      %v852 = vunpack.c.h.b16 %v299
      %v853 = vunpack.c.l.b16 %v300
      %v854 = vunpack.c.h.b16 %v300
      %v855 = vunpack.c.l.b16 %v301
      %v856 = vunpack.c.h.b16 %v301
      %v857 = vunpack.c.l.b16 %v302
      %v858 = vunpack.c.h.b16 %v302
      %v859 = vunpack.c.l.b16 %v303
      %v860 = vunpack.c.l.b16 %v304
      %v861 = vunpack.c.h.b16 %v304
      %v862 = vunpack.c.l.b16 %v305
      %v863 = vunpack.c.h.b16 %v305
      %v864 = vunpack.c.l.b16 %v306
      %v865 = vunpack.c.h.b16 %v306
      %v866 = vunpack.c.l.b16 %v307
      %v867 = vunpack.c.h.b16 %v307
      %v868 = vunpack.c.l.b16 %v308
      %v869 = vunpack.c.l.b16 %v309
      %v870 = vunpack.c.h.b16 %v309
      %v871 = vunpack.c.l.b16 %v310
      %v872 = vunpack.c.h.b16 %v310
      %v873 = vunpack.c.l.b16 %v311
      %v874 = vunpack.c.h.b16 %v311
      %v875 = vunpack.c.l.b16 %v312
      %v876 = vunpack.c.h.b16 %v312
      %v877 = vunpack.c.l.b16 %v313
      %v878 = vunpack.c.l.b16 %v314
      %v879 = vunpack.c.h.b16 %v314
      %v880 = vunpack.c.l.b16 %v315
      %v881 = vunpack.c.h.b16 %v315
      %v882 = vunpack.c.l.b16 %v316
      %v883 = vunpack.c.h.b16 %v316
      %v884 = vunpack.c.l.b16 %v317
      %v885 = vunpack.c.h.b16 %v317
      %v886 = vunpack.c.l.b16 %v318
      %v887 = vunpack.c.l.b16 %v319
      %v888 = vunpack.c.h.b16 %v319
      %v889 = vunpack.c.l.b16 %v320
      %v890 = vunpack.c.h.b16 %v320
      %v891 = vunpack.c.l.b16 %v321
      %v892 = vunpack.c.h.b16 %v321
      %v893 = vunpack.c.l.b16 %v322
      %v894 = vunpack.c.h.b16 %v322
      %v895 = vunpack.c.l.b16 %v323
      %v896 = vunpack.c.l.b16 %v324
      %v897 = vunpack.c.h.b16 %v324
      %v898 = vunpack.c.l.b16 %v325
      %v899 = vunpack.c.h.b16 %v325
      %v900 = vunpack.c.l.b16 %v326
      %v901 = vunpack.c.h.b16 %v326
      %v902 = vunpack.c.l.b16 %v327
      %v903 = vunpack.c.h.b16 %v327
      %v904 = vunpack.c.l.b16 %v328
      %v905 = vunpack.c.l.b16 %v329
      %v906 = vunpack.c.h.b16 %v329
      %v907 = vunpack.c.l.b16 %v330
      %v908 = vunpack.c.h.b16 %v330
      %v909 = vunpack.c.l.b16 %v331
      %v910 = vunpack.c.h.b16 %v331
      %v911 = vunpack.c.l.b16 %v332
      %v912 = vunpack.c.h.b16 %v332
      %v913 = vunpack.c.l.b16 %v333
      %v914 = vunpack.c.l.b16 %v334
      %v915 = vunpack.c.h.b16 %v334
      %v916 = vunpack.c.l.b16 %v335
      %v917 = vunpack.c.h.b16 %v335
      %v918 = vunpack.c.l.b16 %v336
      %v919 = vunpack.c.h.b16 %v336
      %v920 = vunpack.c.l.b16 %v337
      %v921 = vunpack.c.h.b16 %v337
      %v922 = vunpack.c.l.b16 %v338
      %v923 = vunpack.c.l.b16 %v339
      %v924 = vunpack.c.h.b16 %v339
      %v925 = vunpack.c.l.b16 %v340
      %v926 = vunpack.c.h.b16 %v340
      %v927 = vunpack.c.l.b16 %v341
      %v928 = vunpack.c.h.b16 %v341
      %v929 = vunpack.c.l.b16 %v342
      %v930 = vunpack.c.h.b16 %v342
      %v931 = vunpack.c.l.b16 %v343
      %v932 = vunpack.c.l.b16 %v344
      %v933 = vunpack.c.h.b16 %v344
      %v934 = vunpack.c.l.b16 %v345
      %v935 = vunpack.c.h.b16 %v345
      %v936 = vunpack.c.l.b16 %v346
      %v937 = vunpack.c.h.b16 %v346
      %v938 = vunpack.c.l.b16 %v347
      %v939 = vunpack.c.h.b16 %v347
      %v940 = vunpack.c.l.b16 %v348
      %v941 = vpack.c.b16 %v662, %v653
      %v942 = vpack.c.b16 %v663, %v654
      %v943 = vpack.c.b16 %v664, %v655
      %v944 = vpack.c.b16 %v665, %v656
      %v945 = vpack.c.b16 %v666, %v657
      %v946 = vpack.c.b16 %v667, %v658
      %v947 = vpack.c.b16 %v668, %v659
      %v948 = vpack.c.b16 %v669, %v660
      %v949 = vpack.c.b16 %v670, %v661
      %v950 = vpack.c.b16 %v680, %v671
      %v951 = vpack.c.b16 %v681, %v672
      %v952 = vpack.c.b16 %v682, %v673
      %v953 = vpack.c.b16 %v683, %v674
      %v954 = vpack.c.b16 %v684, %v675
      %v955 = vpack.c.b16 %v685, %v676
      %v956 = vpack.c.b16 %v686, %v677
      %v957 = vpack.c.b16 %v687, %v678
      %v958 = vpack.c.b16 %v688, %v679
      %v959 = vpack.c.b16 %v698, %v689
      %v960 = vpack.c.b16 %v699, %v690
      %v961 = vpack.c.b16 %v700, %v691
      %v962 = vpack.c.b16 %v701, %v692
      %v963 = vpack.c.b16 %v702, %v693
      %v964 = vpack.c.b16 %v703, %v694
      %v965 = vpack.c.b16 %v704, %v695
      %v966 = vpack.c.b16 %v705, %v696
      %v967 = vpack.c.b16 %v706, %v697
      %v968 = vpack.c.b16 %v716, %v707
      %v969 = vpack.c.b16 %v717, %v708
      %v970 = vpack.c.b16 %v718, %v709
      %v971 = vpack.c.b16 %v719, %v710
      %v972 = vpack.c.b16 %v720, %v711
      %v973 = vpack.c.b16 %v721, %v712
      %v974 = vpack.c.b16 %v722, %v713
      %v975 = vpack.c.b16 %v723, %v714
      %v976 = vpack.c.b16 %v724, %v715
      %v977 = vpack.c.b16 %v734, %v725
      %v978 = vpack.c.b16 %v735, %v726
      %v979 = vpack.c.b16 %v736, %v727
      %v980 = vpack.c.b16 %v737, %v728
      %v981 = vpack.c.b16 %v738, %v729
      %v982 = vpack.c.b16 %v739, %v730
      %v983 = vpack.c.b16 %v740, %v731
      %v984 = vpack.c.b16 %v741, %v732
      %v985 = vpack.c.b16 %v742, %v733
      %v986 = vpack.c.b16 %v752, %v743
      %v987 = vpack.c.b16 %v753, %v744
      %v988 = vpack.c.b16 %v754, %v745
      %v989 = vpack.c.b16 %v755, %v746
      %v990 = vpack.c.b16 %v756, %v747
      %v991 = vpack.c.b16 %v757, %v748
      %v992 = vpack.c.b16 %v758, %v749
      %v993 = vpack.c.b16 %v759, %v750
      %v994 = vpack.c.b16 %v760, %v751
      %v995 = vpack.c.b16 %v770, %v761
      %v996 = vpack.c.b16 %v771, %v762
      %v997 = vpack.c.b16 %v772, %v763
      %v998 = vpack.c.b16 %v773, %v764
      %v999 = vpack.c.b16 %v774, %v765
      %v1000 = vpack.c.b16 %v775, %v766
      %v1001 = vpack.c.b16 %v776, %v767
      %v1002 = vpack.c.b16 %v777, %v768
      %v1003 = vpack.c.b16 %v778, %v769
      %v1004 = vpack.c.b16 %v788, %v779
      %v1005 = vpack.c.b16 %v789, %v780
      %v1006 = vpack.c.b16 %v790, %v781
      %v1007 = vpack.c.b16 %v791, %v782
      %v1008 = vpack.c.b16 %v792, %v783
      %v1009 = vpack.c.b16 %v793, %v784
      %v1010 = vpack.c.b16 %v794, %v785
      %v1011 = vpack.c.b16 %v795, %v786
      %v1012 = vpack.c.b16 %v796, %v787
      %v1013 = vpack.c.b16 %v806, %v797
      %v1014 = vpack.c.b16 %v807, %v798
      %v1015 = vpack.c.b16 %v808, %v799
      %v1016 = vpack.c.b16 %v809, %v800
      %v1017 = vpack.c.b16 %v810, %v801
      %v1018 = vpack.c.b16 %v811, %v802
      %v1019 = vpack.c.b16 %v812, %v803
      %v1020 = vpack.c.b16 %v813, %v804
      %v1021 = vpack.c.b16 %v814, %v805
      %v1022 = vpack.c.b16 %v824, %v815
      %v1023 = vpack.c.b16 %v825, %v816
      %v1024 = vpack.c.b16 %v826, %v817
      %v1025 = vpack.c.b16 %v827, %v818
      %v1026 = vpack.c.b16 %v828, %v819
      %v1027 = vpack.c.b16 %v829, %v820
      %v1028 = vpack.c.b16 %v830, %v821
      %v1029 = vpack.c.b16 %v831, %v822
      %v1030 = vpack.c.b16 %v832, %v823
      %v1031 = vpack.c.b16 %v842, %v833
      %v1032 = vpack.c.b16 %v843, %v834
      %v1033 = vpack.c.b16 %v844, %v835
      %v1034 = vpack.c.b16 %v845, %v836
      %v1035 = vpack.c.b16 %v846, %v837
      %v1036 = vpack.c.b16 %v847, %v838
      %v1037 = vpack.c.b16 %v848, %v839
      %v1038 = vpack.c.b16 %v849, %v840
      %v1039 = vpack.c.b16 %v850, %v841
      %v1040 = vpack.c.b16 %v860, %v851
      %v1041 = vpack.c.b16 %v861, %v852
      %v1042 = vpack.c.b16 %v862, %v853
      %v1043 = vpack.c.b16 %v863, %v854
      %v1044 = vpack.c.b16 %v864, %v855
      %v1045 = vpack.c.b16 %v865, %v856
      %v1046 = vpack.c.b16 %v866, %v857
      %v1047 = vpack.c.b16 %v867, %v858
      %v1048 = vpack.c.b16 %v868, %v859
      %v1049 = vpack.c.b16 %v878, %v869
      %v1050 = vpack.c.b16 %v879, %v870
      %v1051 = vpack.c.b16 %v880, %v871
      %v1052 = vpack.c.b16 %v881, %v872
      %v1053 = vpack.c.b16 %v882, %v873
      %v1054 = vpack.c.b16 %v883, %v874
      %v1055 = vpack.c.b16 %v884, %v875
      %v1056 = vpack.c.b16 %v885, %v876
      %v1057 = vpack.c.b16 %v886, %v877
      %v1058 = vpack.c.b16 %v896, %v887
      %v1059 = vpack.c.b16 %v897, %v888
      %v1060 = vpack.c.b16 %v898, %v889
      %v1061 = vpack.c.b16 %v899, %v890
      %v1062 = vpack.c.b16 %v900, %v891
      %v1063 = vpack.c.b16 %v901, %v892
      %v1064 = vpack.c.b16 %v902, %v893
      %v1065 = vpack.c.b16 %v903, %v894
      %v1066 = vpack.c.b16 %v904, %v895
      %v1067 = vpack.c.b16 %v914, %v905
      %v1068 = vpack.c.b16 %v915, %v906
      %v1069 = vpack.c.b16 %v916, %v907
      %v1070 = vpack.c.b16 %v917, %v908
      %v1071 = vpack.c.b16 %v918, %v909
      %v1072 = vpack.c.b16 %v919, %v910
      %v1073 = vpack.c.b16 %v920, %v911
      %v1074 = vpack.c.b16 %v921, %v912
      %v1075 = vpack.c.b16 %v922, %v913
      %v1076 = vpack.c.b16 %v932, %v923
      %v1077 = vpack.c.b16 %v933, %v924
      %v1078 = vpack.c.b16 %v934, %v925
      %v1079 = vpack.c.b16 %v935, %v926
      %v1080 = vpack.c.b16 %v936, %v927
      %v1081 = vpack.c.b16 %v937, %v928
      %v1082 = vpack.c.b16 %v938, %v929
      %v1083 = vpack.c.b16 %v939, %v930
      %v1084 = vpack.c.b16 %v940, %v931
      %v1373 = vunpack.c.l.b16 %v349
      %v1374 = vunpack.c.l.b16 %v350
      %v1375 = vunpack.c.l.b16 %v351
      %v1376 = vunpack.c.l.b16 %v352
      %v1377 = vunpack.c.l.b16 %v353
      %v1378 = vunpack.c.l.b16 %v354
      %v1379 = vunpack.c.l.b16 %v355
      %v1380 = vunpack.c.l.b16 %v356
      %v1381 = vunpack.c.l.b16 %v357
      %v1382 = vunpack.c.l.b16 %v358
      %v1383 = vunpack.c.l.b16 %v359
      %v1384 = vunpack.c.l.b16 %v360
      %v1385 = vunpack.c.l.b16 %v361
      %v1386 = vunpack.c.l.b16 %v362
      %v1387 = vunpack.c.l.b16 %v363
      %v1388 = vunpack.c.l.b16 %v364
      %v1389 = vunpack.c.l.b16 %v365
      %v1390 = vunpack.c.l.b16 %v366
      %v1391 = vunpack.c.l.b16 %v367
      %v1392 = vunpack.c.l.b16 %v368
      %v1393 = vunpack.c.l.b16 %v369
      %v1394 = vunpack.c.l.b16 %v370
      %v1395 = vunpack.c.l.b16 %v371
      %v1396 = vunpack.c.l.b16 %v372
      %v1397 = vunpack.c.l.b16 %v373
      %v1398 = vunpack.c.l.b16 %v374
      %v1399 = vunpack.c.l.b16 %v375
      %v1400 = vunpack.c.l.b16 %v376
      %v1401 = vunpack.c.l.b16 %v377
      %v1402 = vunpack.c.l.b16 %v378
      %v1403 = vunpack.c.l.b16 %v379
      %v1404 = vunpack.c.l.b16 %v380
      %v1405 = vunpack.c.l.b16 %v381
      %v1406 = vunpack.c.l.b16 %v382
      %v1407 = vunpack.c.l.b16 %v383
      %v1408 = vunpack.c.l.b16 %v384
      %v1409 = vunpack.c.l.b16 %v385
      %v1410 = vunpack.c.l.b16 %v386
      %v1411 = vunpack.c.l.b16 %v387
      %v1412 = vunpack.c.l.b16 %v388
      %v1413 = vunpack.c.l.b16 %v389
      %v1414 = vunpack.c.l.b16 %v390
      %v1415 = vunpack.c.l.b16 %v391
      %v1416 = vunpack.c.l.b16 %v392
      %v1417 = vunpack.c.l.b16 %v393
      %v1418 = vunpack.c.l.b16 %v394
      %v1419 = vunpack.c.l.b16 %v395
      %v1420 = vunpack.c.l.b16 %v396
      %v1421 = vunpack.c.l.b16 %v397
      %v1422 = vunpack.c.l.b16 %v398
      %v1423 = vunpack.c.l.b16 %v399
      %v1424 = vunpack.c.l.b16 %v400
      %v1425 = vunpack.c.l.b16 %v401
      %v1426 = vunpack.c.l.b16 %v402
      %v1427 = vunpack.c.l.b16 %v403
      %v1428 = vunpack.c.l.b16 %v404
      %v1429 = vunpack.c.l.b16 %v405
      %v1430 = vunpack.c.l.b16 %v406
      %v1431 = vunpack.c.l.b16 %v407
      %v1432 = vunpack.c.l.b16 %v408
      %v1433 = vunpack.c.l.b16 %v409
      %v1434 = vunpack.c.l.b16 %v410
      %v1435 = vunpack.c.l.b16 %v411
      %v1436 = vunpack.c.l.b16 %v412
      %v1437 = vunpack.c.l.b16 %v413
      %v1438 = vunpack.c.l.b16 %v414
      %v1439 = vunpack.c.l.b16 %v415
      %v1440 = vunpack.c.l.b16 %v416
      %v1441 = vunpack.c.l.b16 %v417
      %v1442 = vunpack.c.l.b16 %v418
      %v1443 = vunpack.c.l.b16 %v419
      %v1444 = vunpack.c.l.b16 %v420
      %v1445 = vunpack.c.l.b16 %v421
      %v1446 = vunpack.c.l.b16 %v422
      %v1447 = vunpack.c.l.b16 %v423
      %v1448 = vunpack.c.l.b16 %v424
      %v1449 = vunpack.c.l.b16 %v425
      %v1450 = vunpack.c.l.b16 %v426
      %v1451 = vunpack.c.l.b16 %v427
      %v1452 = vunpack.c.l.b16 %v428
      %v1453 = vunpack.c.l.b16 %v429
      %v1454 = vunpack.c.l.b16 %v430
      %v1455 = vunpack.c.l.b16 %v431
      %v1456 = vunpack.c.l.b16 %v432
      %v1457 = vunpack.c.l.b16 %v433
      %v1458 = vunpack.c.l.b16 %v434
      %v1459 = vunpack.c.l.b16 %v435
      %v1460 = vunpack.c.l.b16 %v436
      %v1461 = vunpack.c.l.b16 %v437
      %v1462 = vunpack.c.l.b16 %v438
      %v1463 = vunpack.c.l.b16 %v439
      %v1464 = vunpack.c.l.b16 %v440
      %v1465 = vunpack.c.l.b16 %v441
      %v1466 = vunpack.c.l.b16 %v442
      %v1467 = vunpack.c.l.b16 %v443
      %v1468 = vunpack.c.l.b16 %v444
      %v1469 = vunpack.c.l.b16 %v445
      %v1470 = vunpack.c.l.b16 %v446
      %v1471 = vunpack.c.l.b16 %v447
      %v1472 = vunpack.c.l.b16 %v448
      %v1473 = vunpack.c.l.b16 %v449
      %v1474 = vunpack.c.l.b16 %v450
      %v1475 = vunpack.c.l.b16 %v451
      %v1476 = vunpack.c.l.b16 %v452
      %v1477 = vunpack.c.l.b16 %v453
      %v1478 = vunpack.c.l.b16 %v454
      %v1479 = vunpack.c.l.b16 %v455
      %v1480 = vunpack.c.l.b16 %v456
      %v1481 = vunpack.c.l.b16 %v457
      %v1482 = vunpack.c.l.b16 %v458
      %v1483 = vunpack.c.l.b16 %v459
      %v1484 = vunpack.c.l.b16 %v460
      %v1485 = vunpack.c.l.b16 %v461
      %v1486 = vunpack.c.l.b16 %v462
      %v1487 = vunpack.c.l.b16 %v463
      %v1488 = vunpack.c.l.b16 %v464
      %v1489 = vunpack.c.l.b16 %v465
      %v1490 = vunpack.c.l.b16 %v466
      %v1491 = vunpack.c.l.b16 %v467
      %v1492 = vunpack.c.l.b16 %v468
      %v1493 = vunpack.c.l.b16 %v469
      %v1494 = vunpack.c.l.b16 %v470
      %v1495 = vunpack.c.l.b16 %v471
      %v1496 = vunpack.c.l.b16 %v472
      %v1497 = vunpack.c.l.b16 %v473
      %v1498 = vunpack.c.l.b16 %v474
      %v1499 = vunpack.c.l.b16 %v475
      %v1500 = vunpack.c.l.b16 %v476
      %v1501 = vunpack.c.l.b16 %v477
      %v1502 = vunpack.c.l.b16 %v478
      %v1503 = vunpack.c.l.b16 %v479
      %v1504 = vunpack.c.l.b16 %v480
      %v1505 = vunpack.c.l.b16 %v481
      %v1506 = vunpack.c.l.b16 %v482
      %v1507 = vunpack.c.l.b16 %v483
      %v1508 = vunpack.c.l.b16 %v484
      %v1509 = vunpack.c.l.b16 %v485
      %v1510 = vunpack.c.l.b16 %v486
      %v1511 = vunpack.c.l.b16 %v487
      %v1512 = vunpack.c.l.b16 %v488
      %v1513 = vunpack.c.l.b16 %v489
      %v1514 = vunpack.c.l.b16 %v490
      %v1515 = vunpack.c.l.b16 %v491
      %v1516 = vunpack.c.l.b16 %v492
      %v1517 = vpack.c.b16 %v1374, %v1373
      %v1518 = vpack.c.b16 %v1376, %v1375
      %v1519 = vpack.c.b16 %v1378, %v1377
      %v1520 = vpack.c.b16 %v1380, %v1379
      %v1521 = vpack.c.b16 %v1382, %v1381
      %v1522 = vpack.c.b16 %v1384, %v1383
      %v1523 = vpack.c.b16 %v1386, %v1385
      %v1524 = vpack.c.b16 %v1388, %v1387
      %v1525 = vpack.c.b16 %v1390, %v1389
      %v1526 = vpack.c.b16 %v1392, %v1391
      %v1527 = vpack.c.b16 %v1394, %v1393
      %v1528 = vpack.c.b16 %v1396, %v1395
      %v1529 = vpack.c.b16 %v1398, %v1397
      %v1530 = vpack.c.b16 %v1400, %v1399
      %v1531 = vpack.c.b16 %v1402, %v1401
      %v1532 = vpack.c.b16 %v1404, %v1403
      %v1533 = vpack.c.b16 %v1406, %v1405
      %v1534 = vpack.c.b16 %v1408, %v1407
      %v1535 = vpack.c.b16 %v1410, %v1409
      %v1536 = vpack.c.b16 %v1412, %v1411
      %v1537 = vpack.c.b16 %v1414, %v1413
      %v1538 = vpack.c.b16 %v1416, %v1415
      %v1539 = vpack.c.b16 %v1418, %v1417
      %v1540 = vpack.c.b16 %v1420, %v1419
      %v1541 = vpack.c.b16 %v1422, %v1421
      %v1542 = vpack.c.b16 %v1424, %v1423
      %v1543 = vpack.c.b16 %v1426, %v1425
      %v1544 = vpack.c.b16 %v1428, %v1427
      %v1545 = vpack.c.b16 %v1430, %v1429
      %v1546 = vpack.c.b16 %v1432, %v1431
      %v1547 = vpack.c.b16 %v1434, %v1433
      %v1548 = vpack.c.b16 %v1436, %v1435
      %v1549 = vpack.c.b16 %v1438, %v1437
      %v1550 = vpack.c.b16 %v1440, %v1439
      %v1551 = vpack.c.b16 %v1442, %v1441
      %v1552 = vpack.c.b16 %v1444, %v1443
      %v1553 = vpack.c.b16 %v1446, %v1445
      %v1554 = vpack.c.b16 %v1448, %v1447
      %v1555 = vpack.c.b16 %v1450, %v1449
      %v1556 = vpack.c.b16 %v1452, %v1451
      %v1557 = vpack.c.b16 %v1454, %v1453
      %v1558 = vpack.c.b16 %v1456, %v1455
      %v1559 = vpack.c.b16 %v1458, %v1457
      %v1560 = vpack.c.b16 %v1460, %v1459
      %v1561 = vpack.c.b16 %v1462, %v1461
      %v1562 = vpack.c.b16 %v1464, %v1463
      %v1563 = vpack.c.b16 %v1466, %v1465
      %v1564 = vpack.c.b16 %v1468, %v1467
      %v1565 = vpack.c.b16 %v1470, %v1469
      %v1566 = vpack.c.b16 %v1472, %v1471
      %v1567 = vpack.c.b16 %v1474, %v1473
      %v1568 = vpack.c.b16 %v1476, %v1475
      %v1569 = vpack.c.b16 %v1478, %v1477
      %v1570 = vpack.c.b16 %v1480, %v1479
      %v1571 = vpack.c.b16 %v1482, %v1481
      %v1572 = vpack.c.b16 %v1484, %v1483
      %v1573 = vpack.c.b16 %v1486, %v1485
      %v1574 = vpack.c.b16 %v1488, %v1487
      %v1575 = vpack.c.b16 %v1490, %v1489
      %v1576 = vpack.c.b16 %v1492, %v1491
      %v1577 = vpack.c.b16 %v1494, %v1493
      %v1578 = vpack.c.b16 %v1496, %v1495
      %v1579 = vpack.c.b16 %v1498, %v1497
      %v1580 = vpack.c.b16 %v1500, %v1499
      %v1581 = vpack.c.b16 %v1502, %v1501
      %v1582 = vpack.c.b16 %v1504, %v1503
      %v1583 = vpack.c.b16 %v1506, %v1505
      %v1584 = vpack.c.b16 %v1508, %v1507
      %v1585 = vpack.c.b16 %v1510, %v1509
      %v1586 = vpack.c.b16 %v1512, %v1511
      %v1587 = vpack.c.b16 %v1514, %v1513
      %v1588 = vpack.c.b16 %v1516, %v1515
      %1661 = vmatprep.subr.bf16.mxu0 0
      %1662 = vmatpush1.bf16.msra.mxu0 %v1524
      %1663 = vmatprep.subr.bf16.mxu0 0
      %1664 = vmatpush1.bf16.msra.mxu0 %v1523
      %1665 = vmatprep.subr.bf16.mxu0 0
      %1666 = vmatpush1.bf16.msra.mxu0 %v1522
      %1667 = vmatprep.subr.bf16.mxu0 0
      %1668 = vmatpush1.bf16.msra.mxu0 %v1521
      %1669 = vmatprep.subr.bf16.mxu0 0
      %1670 = vmatpush1.bf16.msra.mxu0 %v1520
      %1671 = vmatprep.subr.bf16.mxu0 0
      %1672 = vmatpush1.bf16.msra.mxu0 %v1519
      %1673 = vmatprep.subr.bf16.mxu0 0
      %1674 = vmatpush1.bf16.msra.mxu0 %v1518
      %1675 = vmatprep.subr.bf16.mxu0 0
      %1676 = vmatpush1.bf16.msra.mxu0 %v1517
      %1677 = vmatprep.subr.bf16.mxu0 0
      %1678 = vmatpush2.bf16.msra.mxu0 %v1532
      %1679 = vmatprep.subr.bf16.mxu0 0
      %1680 = vmatpush2.bf16.msra.mxu0 %v1531
      %1681 = vmatprep.subr.bf16.mxu0 0
      %1682 = vmatpush2.bf16.msra.mxu0 %v1530
      %1683 = vmatprep.subr.bf16.mxu0 0
      %1684 = vmatpush2.bf16.msra.mxu0 %v1529
      %1685 = vmatprep.subr.bf16.mxu0 0
      %1686 = vmatpush2.bf16.msra.mxu0 %v1528
      %1687 = vmatprep.subr.bf16.mxu0 0
      %1688 = vmatpush2.bf16.msra.mxu0 %v1527
      %1689 = vmatprep.subr.bf16.mxu0 0
      %1690 = vmatpush2.bf16.msra.mxu0 %v1526
      %1691 = vmatprep.subr.bf16.mxu0 0
      %1692 = vmatpush2.bf16.msra.mxu0 %v1525
      %1693 = vmatprep.mubr.bf16.mxu0 %v942
      %1694 = vmatmul.mubr.bf16.gmra.mxu0 %v941
      %v1695 = vpop.f32.mrf.mxu0
      %v1696 = vadd.f32 0.0, %v1695
      %v1697 = vpop.f32.mrf.mxu0
      %v1698 = vpop.f32.mrf.mxu0
      %v1699 = vadd.f32 0.0, %v1698
      %v1700 = vpop.f32.mrf.mxu0
      %1701 = vmatprep.mubr.bf16.mxu0 %v951
      %1702 = vmatmul.mubr.bf16.gmra.mxu0 %v950
      %v1703 = vpop.f32.mrf.mxu0
      %v1704 = vadd.f32 0.0, %v1703
      %v1705 = vpop.f32.mrf.mxu0
      %v1706 = vpop.f32.mrf.mxu0
      %v1707 = vadd.f32 0.0, %v1706
      %v1708 = vpop.f32.mrf.mxu0
      %1709 = vmatprep.mubr.bf16.mxu0 %v960
      %1710 = vmatmul.mubr.bf16.gmra.mxu0 %v959
      %v1711 = vpop.f32.mrf.mxu0
      %v1712 = vadd.f32 0.0, %v1711
      %v1713 = vpop.f32.mrf.mxu0
      %v1714 = vpop.f32.mrf.mxu0
      %v1715 = vadd.f32 0.0, %v1714
      %v1716 = vpop.f32.mrf.mxu0
      %1717 = vmatprep.mubr.bf16.mxu0 %v969
      %1718 = vmatmul.mubr.bf16.gmra.mxu0 %v968
      %v1719 = vpop.f32.mrf.mxu0
      %v1720 = vadd.f32 0.0, %v1719
      %v1721 = vpop.f32.mrf.mxu0
      %v1722 = vpop.f32.mrf.mxu0
      %v1723 = vadd.f32 0.0, %v1722
      %v1724 = vpop.f32.mrf.mxu0
      %1725 = vmatprep.mubr.bf16.mxu0 %v978
      %1726 = vmatmul.mubr.bf16.gmra.mxu0 %v977
      %v1727 = vpop.f32.mrf.mxu0
      %v1728 = vadd.f32 0.0, %v1727
      %v1729 = vpop.f32.mrf.mxu0
      %v1730 = vpop.f32.mrf.mxu0
      %v1731 = vadd.f32 0.0, %v1730
      %v1732 = vpop.f32.mrf.mxu0
      %1733 = vmatprep.mubr.bf16.mxu0 %v987
      %1734 = vmatmul.mubr.bf16.gmra.mxu0 %v986
      %v1735 = vpop.f32.mrf.mxu0
      %v1736 = vadd.f32 0.0, %v1735
      %v1737 = vpop.f32.mrf.mxu0
      %v1738 = vpop.f32.mrf.mxu0
      %v1739 = vadd.f32 0.0, %v1738
      %v1740 = vpop.f32.mrf.mxu0
      %1741 = vmatprep.mubr.bf16.mxu0 %v996
      %1742 = vmatmul.mubr.bf16.gmra.mxu0 %v995
      %v1743 = vpop.f32.mrf.mxu0
      %v1744 = vadd.f32 0.0, %v1743
      %v1745 = vpop.f32.mrf.mxu0
      %v1746 = vpop.f32.mrf.mxu0
      %v1747 = vadd.f32 0.0, %v1746
      %v1748 = vpop.f32.mrf.mxu0
      %1749 = vmatprep.mubr.bf16.mxu0 %v1005
      %1750 = vmatmul.mubr.bf16.gmra.mxu0 %v1004
      %v1751 = vpop.f32.mrf.mxu0
      %v1752 = vadd.f32 0.0, %v1751
      %v1753 = vpop.f32.mrf.mxu0
      %v1754 = vpop.f32.mrf.mxu0
      %v1755 = vadd.f32 0.0, %v1754
      %v1756 = vpop.f32.mrf.mxu0
      %1757 = vmatprep.mubr.bf16.mxu0 %v1014
      %1758 = vmatmul.mubr.bf16.gmra.mxu0 %v1013
      %v1759 = vpop.f32.mrf.mxu0
      %v1760 = vadd.f32 0.0, %v1759
      %v1761 = vpop.f32.mrf.mxu0
      %v1762 = vpop.f32.mrf.mxu0
      %v1763 = vadd.f32 0.0, %v1762
      %v1764 = vpop.f32.mrf.mxu0
      %1765 = vmatprep.mubr.bf16.mxu0 %v1023
      %1766 = vmatmul.mubr.bf16.gmra.mxu0 %v1022
      %v1767 = vpop.f32.mrf.mxu0
      %v1768 = vadd.f32 0.0, %v1767
      %v1769 = vpop.f32.mrf.mxu0
      %v1770 = vpop.f32.mrf.mxu0
      %v1771 = vadd.f32 0.0, %v1770
      %v1772 = vpop.f32.mrf.mxu0
      %1773 = vmatprep.mubr.bf16.mxu0 %v1032
      %1774 = vmatmul.mubr.bf16.gmra.mxu0 %v1031
      %v1775 = vpop.f32.mrf.mxu0
      %v1776 = vadd.f32 0.0, %v1775
      %v1777 = vpop.f32.mrf.mxu0
      %v1778 = vpop.f32.mrf.mxu0
      %v1779 = vadd.f32 0.0, %v1778
      %v1780 = vpop.f32.mrf.mxu0
      %1781 = vmatprep.mubr.bf16.mxu0 %v1041
      %1782 = vmatmul.mubr.bf16.gmra.mxu0 %v1040
      %v1783 = vpop.f32.mrf.mxu0
      %v1784 = vadd.f32 0.0, %v1783
      %v1785 = vpop.f32.mrf.mxu0
      %v1786 = vpop.f32.mrf.mxu0
      %v1787 = vadd.f32 0.0, %v1786
      %v1788 = vpop.f32.mrf.mxu0
      %1789 = vmatprep.mubr.bf16.mxu0 %v1050
      %1790 = vmatmul.mubr.bf16.gmra.mxu0 %v1049
      %v1791 = vpop.f32.mrf.mxu0
      %v1792 = vadd.f32 0.0, %v1791
      %v1793 = vpop.f32.mrf.mxu0
      %v1794 = vpop.f32.mrf.mxu0
      %v1795 = vadd.f32 0.0, %v1794
      %v1796 = vpop.f32.mrf.mxu0
      %1797 = vmatprep.mubr.bf16.mxu0 %v1059
      %1798 = vmatmul.mubr.bf16.gmra.mxu0 %v1058
      %v1799 = vpop.f32.mrf.mxu0
      %v1800 = vadd.f32 0.0, %v1799
      %v1801 = vpop.f32.mrf.mxu0
      %v1802 = vpop.f32.mrf.mxu0
      %v1803 = vadd.f32 0.0, %v1802
      %v1804 = vpop.f32.mrf.mxu0
      %1805 = vmatprep.mubr.bf16.mxu0 %v1068
      %1806 = vmatmul.mubr.bf16.gmra.mxu0 %v1067
      %v1807 = vpop.f32.mrf.mxu0
      %v1808 = vadd.f32 0.0, %v1807
      %v1809 = vpop.f32.mrf.mxu0
      %v1810 = vpop.f32.mrf.mxu0
      %v1811 = vadd.f32 0.0, %v1810
      %v1812 = vpop.f32.mrf.mxu0
      %1813 = vmatprep.mubr.bf16.mxu0 %v1077
      %1814 = vmatmul.mubr.bf16.gmra.mxu0 %v1076
      %v1815 = vpop.f32.mrf.mxu0
      %v1816 = vadd.f32 0.0, %v1815
      %v1817 = vpop.f32.mrf.mxu0
      %v1818 = vpop.f32.mrf.mxu0
      %v1819 = vadd.f32 0.0, %v1818
      %v1820 = vpop.f32.mrf.mxu0
      %1821 = vdwg.mxu0
      %1822 = vmatprep.subr.bf16.mxu0 0
      %1823 = vmatpush1.bf16.msra.mxu0 %v1540
      %1824 = vmatprep.subr.bf16.mxu0 0
      %1825 = vmatpush1.bf16.msra.mxu0 %v1539
      %1826 = vmatprep.subr.bf16.mxu0 0
      %1827 = vmatpush1.bf16.msra.mxu0 %v1538
      %1828 = vmatprep.subr.bf16.mxu0 0
      %1829 = vmatpush1.bf16.msra.mxu0 %v1537
      %1830 = vmatprep.subr.bf16.mxu0 0
      %1831 = vmatpush1.bf16.msra.mxu0 %v1536
      %1832 = vmatprep.subr.bf16.mxu0 0
      %1833 = vmatpush1.bf16.msra.mxu0 %v1535
      %1834 = vmatprep.subr.bf16.mxu0 0
      %1835 = vmatpush1.bf16.msra.mxu0 %v1534
      %1836 = vmatprep.subr.bf16.mxu0 0
      %1837 = vmatpush1.bf16.msra.mxu0 %v1533
      %1838 = vmatprep.subr.bf16.mxu0 0
      %1839 = vmatpush2.bf16.msra.mxu0 %v1548
      %1840 = vmatprep.subr.bf16.mxu0 0
      %1841 = vmatpush2.bf16.msra.mxu0 %v1547
      %1842 = vmatprep.subr.bf16.mxu0 0
      %1843 = vmatpush2.bf16.msra.mxu0 %v1546
      %1844 = vmatprep.subr.bf16.mxu0 0
      %1845 = vmatpush2.bf16.msra.mxu0 %v1545
      %1846 = vmatprep.subr.bf16.mxu0 0
      %1847 = vmatpush2.bf16.msra.mxu0 %v1544
      %1848 = vmatprep.subr.bf16.mxu0 0
      %1849 = vmatpush2.bf16.msra.mxu0 %v1543
      %1850 = vmatprep.subr.bf16.mxu0 0
      %1851 = vmatpush2.bf16.msra.mxu0 %v1542
      %1852 = vmatprep.subr.bf16.mxu0 0
      %1853 = vmatpush2.bf16.msra.mxu0 %v1541
      %1854 = vmatprep.mubr.bf16.mxu0 %v944
      %1855 = vmatmul.mubr.bf16.gmra.mxu0 %v943
      %v1856 = vpop.f32.mrf.mxu0
      %v1857 = vadd.f32 %v1696, %v1856
      %v1858 = vpop.f32.mrf.mxu0
      %v1859 = vpop.f32.mrf.mxu0
      %v1860 = vadd.f32 %v1699, %v1859
      %v1861 = vpop.f32.mrf.mxu0
      %1862 = vmatprep.mubr.bf16.mxu0 %v953
      %1863 = vmatmul.mubr.bf16.gmra.mxu0 %v952
      %v1864 = vpop.f32.mrf.mxu0
      %v1865 = vadd.f32 %v1704, %v1864
      %v1866 = vpop.f32.mrf.mxu0
      %v1867 = vpop.f32.mrf.mxu0
      %v1868 = vadd.f32 %v1707, %v1867
      %v1869 = vpop.f32.mrf.mxu0
      %1870 = vmatprep.mubr.bf16.mxu0 %v962
      %1871 = vmatmul.mubr.bf16.gmra.mxu0 %v961
      %v1872 = vpop.f32.mrf.mxu0
      %v1873 = vadd.f32 %v1712, %v1872
      %v1874 = vpop.f32.mrf.mxu0
      %v1875 = vpop.f32.mrf.mxu0
      %v1876 = vadd.f32 %v1715, %v1875
      %v1877 = vpop.f32.mrf.mxu0
      %1878 = vmatprep.mubr.bf16.mxu0 %v971
      %1879 = vmatmul.mubr.bf16.gmra.mxu0 %v970
      %v1880 = vpop.f32.mrf.mxu0
      %v1881 = vadd.f32 %v1720, %v1880
      %v1882 = vpop.f32.mrf.mxu0
      %v1883 = vpop.f32.mrf.mxu0
      %v1884 = vadd.f32 %v1723, %v1883
      %v1885 = vpop.f32.mrf.mxu0
      %1886 = vmatprep.mubr.bf16.mxu0 %v980
      %1887 = vmatmul.mubr.bf16.gmra.mxu0 %v979
      %v1888 = vpop.f32.mrf.mxu0
      %v1889 = vadd.f32 %v1728, %v1888
      %v1890 = vpop.f32.mrf.mxu0
      %v1891 = vpop.f32.mrf.mxu0
      %v1892 = vadd.f32 %v1731, %v1891
      %v1893 = vpop.f32.mrf.mxu0
      %1894 = vmatprep.mubr.bf16.mxu0 %v989
      %1895 = vmatmul.mubr.bf16.gmra.mxu0 %v988
      %v1896 = vpop.f32.mrf.mxu0
      %v1897 = vadd.f32 %v1736, %v1896
      %v1898 = vpop.f32.mrf.mxu0
      %v1899 = vpop.f32.mrf.mxu0
      %v1900 = vadd.f32 %v1739, %v1899
      %v1901 = vpop.f32.mrf.mxu0
      %1902 = vmatprep.mubr.bf16.mxu0 %v998
      %1903 = vmatmul.mubr.bf16.gmra.mxu0 %v997
      %v1904 = vpop.f32.mrf.mxu0
      %v1905 = vadd.f32 %v1744, %v1904
      %v1906 = vpop.f32.mrf.mxu0
      %v1907 = vpop.f32.mrf.mxu0
      %v1908 = vadd.f32 %v1747, %v1907
      %v1909 = vpop.f32.mrf.mxu0
      %1910 = vmatprep.mubr.bf16.mxu0 %v1007
      %1911 = vmatmul.mubr.bf16.gmra.mxu0 %v1006
      %v1912 = vpop.f32.mrf.mxu0
      %v1913 = vadd.f32 %v1752, %v1912
      %v1914 = vpop.f32.mrf.mxu0
      %v1915 = vpop.f32.mrf.mxu0
      %v1916 = vadd.f32 %v1755, %v1915
      %v1917 = vpop.f32.mrf.mxu0
      %1918 = vmatprep.mubr.bf16.mxu0 %v1016
      %1919 = vmatmul.mubr.bf16.gmra.mxu0 %v1015
      %v1920 = vpop.f32.mrf.mxu0
      %v1921 = vadd.f32 %v1760, %v1920
      %v1922 = vpop.f32.mrf.mxu0
      %v1923 = vpop.f32.mrf.mxu0
      %v1924 = vadd.f32 %v1763, %v1923
      %v1925 = vpop.f32.mrf.mxu0
      %1926 = vmatprep.mubr.bf16.mxu0 %v1025
      %1927 = vmatmul.mubr.bf16.gmra.mxu0 %v1024
      %v1928 = vpop.f32.mrf.mxu0
      %v1929 = vadd.f32 %v1768, %v1928
      %v1930 = vpop.f32.mrf.mxu0
      %v1931 = vpop.f32.mrf.mxu0
      %v1932 = vadd.f32 %v1771, %v1931
      %v1933 = vpop.f32.mrf.mxu0
      %1934 = vmatprep.mubr.bf16.mxu0 %v1034
      %1935 = vmatmul.mubr.bf16.gmra.mxu0 %v1033
      %v1936 = vpop.f32.mrf.mxu0
      %v1937 = vadd.f32 %v1776, %v1936
      %v1938 = vpop.f32.mrf.mxu0
      %v1939 = vpop.f32.mrf.mxu0
      %v1940 = vadd.f32 %v1779, %v1939
      %v1941 = vpop.f32.mrf.mxu0
      %1942 = vmatprep.mubr.bf16.mxu0 %v1043
      %1943 = vmatmul.mubr.bf16.gmra.mxu0 %v1042
      %v1944 = vpop.f32.mrf.mxu0
      %v1945 = vadd.f32 %v1784, %v1944
      %v1946 = vpop.f32.mrf.mxu0
      %v1947 = vpop.f32.mrf.mxu0
      %v1948 = vadd.f32 %v1787, %v1947
      %v1949 = vpop.f32.mrf.mxu0
      %1950 = vmatprep.mubr.bf16.mxu0 %v1052
      %1951 = vmatmul.mubr.bf16.gmra.mxu0 %v1051
      %v1952 = vpop.f32.mrf.mxu0
      %v1953 = vadd.f32 %v1792, %v1952
      %v1954 = vpop.f32.mrf.mxu0
      %v1955 = vpop.f32.mrf.mxu0
      %v1956 = vadd.f32 %v1795, %v1955
      %v1957 = vpop.f32.mrf.mxu0
      %1958 = vmatprep.mubr.bf16.mxu0 %v1061
      %1959 = vmatmul.mubr.bf16.gmra.mxu0 %v1060
      %v1960 = vpop.f32.mrf.mxu0
      %v1961 = vadd.f32 %v1800, %v1960
      %v1962 = vpop.f32.mrf.mxu0
      %v1963 = vpop.f32.mrf.mxu0
      %v1964 = vadd.f32 %v1803, %v1963
      %v1965 = vpop.f32.mrf.mxu0
      %1966 = vmatprep.mubr.bf16.mxu0 %v1070
      %1967 = vmatmul.mubr.bf16.gmra.mxu0 %v1069
      %v1968 = vpop.f32.mrf.mxu0
      %v1969 = vadd.f32 %v1808, %v1968
      %v1970 = vpop.f32.mrf.mxu0
      %v1971 = vpop.f32.mrf.mxu0
      %v1972 = vadd.f32 %v1811, %v1971
      %v1973 = vpop.f32.mrf.mxu0
      %1974 = vmatprep.mubr.bf16.mxu0 %v1079
      %1975 = vmatmul.mubr.bf16.gmra.mxu0 %v1078
      %v1976 = vpop.f32.mrf.mxu0
      %v1977 = vadd.f32 %v1816, %v1976
      %v1978 = vpop.f32.mrf.mxu0
      %v1979 = vpop.f32.mrf.mxu0
      %v1980 = vadd.f32 %v1819, %v1979
      %v1981 = vpop.f32.mrf.mxu0
      %1982 = vdwg.mxu0
      %1983 = vmatprep.subr.bf16.mxu0 0
      %1984 = vmatpush1.bf16.msra.mxu0 %v1556
      %1985 = vmatprep.subr.bf16.mxu0 0
      %1986 = vmatpush1.bf16.msra.mxu0 %v1555
      %1987 = vmatprep.subr.bf16.mxu0 0
      %1988 = vmatpush1.bf16.msra.mxu0 %v1554
      %1989 = vmatprep.subr.bf16.mxu0 0
      %1990 = vmatpush1.bf16.msra.mxu0 %v1553
      %1991 = vmatprep.subr.bf16.mxu0 0
      %1992 = vmatpush1.bf16.msra.mxu0 %v1552
      %1993 = vmatprep.subr.bf16.mxu0 0
      %1994 = vmatpush1.bf16.msra.mxu0 %v1551
      %1995 = vmatprep.subr.bf16.mxu0 0
      %1996 = vmatpush1.bf16.msra.mxu0 %v1550
      %1997 = vmatprep.subr.bf16.mxu0 0
      %1998 = vmatpush1.bf16.msra.mxu0 %v1549
      %1999 = vmatprep.subr.bf16.mxu0 0
      %2000 = vmatpush2.bf16.msra.mxu0 %v1564
      %2001 = vmatprep.subr.bf16.mxu0 0
      %2002 = vmatpush2.bf16.msra.mxu0 %v1563
      %2003 = vmatprep.subr.bf16.mxu0 0
      %2004 = vmatpush2.bf16.msra.mxu0 %v1562
      %2005 = vmatprep.subr.bf16.mxu0 0
      %2006 = vmatpush2.bf16.msra.mxu0 %v1561
      %2007 = vmatprep.subr.bf16.mxu0 0
      %2008 = vmatpush2.bf16.msra.mxu0 %v1560
      %2009 = vmatprep.subr.bf16.mxu0 0
      %2010 = vmatpush2.bf16.msra.mxu0 %v1559
      %2011 = vmatprep.subr.bf16.mxu0 0
      %2012 = vmatpush2.bf16.msra.mxu0 %v1558
      %2013 = vmatprep.subr.bf16.mxu0 0
      %2014 = vmatpush2.bf16.msra.mxu0 %v1557
      %2015 = vmatprep.mubr.bf16.mxu0 %v946
      %2016 = vmatmul.mubr.bf16.gmra.mxu0 %v945
      %v2017 = vpop.f32.mrf.mxu0
      %v2018 = vadd.f32 %v1857, %v2017
      %v2019 = vpop.f32.mrf.mxu0
      %v2020 = vpop.f32.mrf.mxu0
      %v2021 = vadd.f32 %v1860, %v2020
      %v2022 = vpop.f32.mrf.mxu0
      %2023 = vmatprep.mubr.bf16.mxu0 %v955
      %2024 = vmatmul.mubr.bf16.gmra.mxu0 %v954
      %v2025 = vpop.f32.mrf.mxu0
      %v2026 = vadd.f32 %v1865, %v2025
      %v2027 = vpop.f32.mrf.mxu0
      %v2028 = vpop.f32.mrf.mxu0
      %v2029 = vadd.f32 %v1868, %v2028
      %v2030 = vpop.f32.mrf.mxu0
      %2031 = vmatprep.mubr.bf16.mxu0 %v964
      %2032 = vmatmul.mubr.bf16.gmra.mxu0 %v963
      %v2033 = vpop.f32.mrf.mxu0
      %v2034 = vadd.f32 %v1873, %v2033
      %v2035 = vpop.f32.mrf.mxu0
      %v2036 = vpop.f32.mrf.mxu0
      %v2037 = vadd.f32 %v1876, %v2036
      %v2038 = vpop.f32.mrf.mxu0
      %2039 = vmatprep.mubr.bf16.mxu0 %v973
      %2040 = vmatmul.mubr.bf16.gmra.mxu0 %v972
      %v2041 = vpop.f32.mrf.mxu0
      %v2042 = vadd.f32 %v1881, %v2041
      %v2043 = vpop.f32.mrf.mxu0
      %v2044 = vpop.f32.mrf.mxu0
      %v2045 = vadd.f32 %v1884, %v2044
      %v2046 = vpop.f32.mrf.mxu0
      %2047 = vmatprep.mubr.bf16.mxu0 %v982
      %2048 = vmatmul.mubr.bf16.gmra.mxu0 %v981
      %v2049 = vpop.f32.mrf.mxu0
      %v2050 = vadd.f32 %v1889, %v2049
      %v2051 = vpop.f32.mrf.mxu0
      %v2052 = vpop.f32.mrf.mxu0
      %v2053 = vadd.f32 %v1892, %v2052
      %v2054 = vpop.f32.mrf.mxu0
      %2055 = vmatprep.mubr.bf16.mxu0 %v991
      %2056 = vmatmul.mubr.bf16.gmra.mxu0 %v990
      %v2057 = vpop.f32.mrf.mxu0
      %v2058 = vadd.f32 %v1897, %v2057
      %v2059 = vpop.f32.mrf.mxu0
      %v2060 = vpop.f32.mrf.mxu0
      %v2061 = vadd.f32 %v1900, %v2060
      %v2062 = vpop.f32.mrf.mxu0
      %2063 = vmatprep.mubr.bf16.mxu0 %v1000
      %2064 = vmatmul.mubr.bf16.gmra.mxu0 %v999
      %v2065 = vpop.f32.mrf.mxu0
      %v2066 = vadd.f32 %v1905, %v2065
      %v2067 = vpop.f32.mrf.mxu0
      %v2068 = vpop.f32.mrf.mxu0
      %v2069 = vadd.f32 %v1908, %v2068
      %v2070 = vpop.f32.mrf.mxu0
      %2071 = vmatprep.mubr.bf16.mxu0 %v1009
      %2072 = vmatmul.mubr.bf16.gmra.mxu0 %v1008
      %v2073 = vpop.f32.mrf.mxu0
      %v2074 = vadd.f32 %v1913, %v2073
      %v2075 = vpop.f32.mrf.mxu0
      %v2076 = vpop.f32.mrf.mxu0
      %v2077 = vadd.f32 %v1916, %v2076
      %v2078 = vpop.f32.mrf.mxu0
      %2079 = vmatprep.mubr.bf16.mxu0 %v1018
      %2080 = vmatmul.mubr.bf16.gmra.mxu0 %v1017
      %v2081 = vpop.f32.mrf.mxu0
      %v2082 = vadd.f32 %v1921, %v2081
      %v2083 = vpop.f32.mrf.mxu0
      %v2084 = vpop.f32.mrf.mxu0
      %v2085 = vadd.f32 %v1924, %v2084
      %v2086 = vpop.f32.mrf.mxu0
      %2087 = vmatprep.mubr.bf16.mxu0 %v1027
      %2088 = vmatmul.mubr.bf16.gmra.mxu0 %v1026
      %v2089 = vpop.f32.mrf.mxu0
      %v2090 = vadd.f32 %v1929, %v2089
      %v2091 = vpop.f32.mrf.mxu0
      %v2092 = vpop.f32.mrf.mxu0
      %v2093 = vadd.f32 %v1932, %v2092
      %v2094 = vpop.f32.mrf.mxu0
      %2095 = vmatprep.mubr.bf16.mxu0 %v1036
      %2096 = vmatmul.mubr.bf16.gmra.mxu0 %v1035
      %v2097 = vpop.f32.mrf.mxu0
      %v2098 = vadd.f32 %v1937, %v2097
      %v2099 = vpop.f32.mrf.mxu0
      %v2100 = vpop.f32.mrf.mxu0
      %v2101 = vadd.f32 %v1940, %v2100
      %v2102 = vpop.f32.mrf.mxu0
      %2103 = vmatprep.mubr.bf16.mxu0 %v1045
      %2104 = vmatmul.mubr.bf16.gmra.mxu0 %v1044
      %v2105 = vpop.f32.mrf.mxu0
      %v2106 = vadd.f32 %v1945, %v2105
      %v2107 = vpop.f32.mrf.mxu0
      %v2108 = vpop.f32.mrf.mxu0
      %v2109 = vadd.f32 %v1948, %v2108
      %v2110 = vpop.f32.mrf.mxu0
      %2111 = vmatprep.mubr.bf16.mxu0 %v1054
      %2112 = vmatmul.mubr.bf16.gmra.mxu0 %v1053
      %v2113 = vpop.f32.mrf.mxu0
      %v2114 = vadd.f32 %v1953, %v2113
      %v2115 = vpop.f32.mrf.mxu0
      %v2116 = vpop.f32.mrf.mxu0
      %v2117 = vadd.f32 %v1956, %v2116
      %v2118 = vpop.f32.mrf.mxu0
      %2119 = vmatprep.mubr.bf16.mxu0 %v1063
      %2120 = vmatmul.mubr.bf16.gmra.mxu0 %v1062
      %v2121 = vpop.f32.mrf.mxu0
      %v2122 = vadd.f32 %v1961, %v2121
      %v2123 = vpop.f32.mrf.mxu0
      %v2124 = vpop.f32.mrf.mxu0
      %v2125 = vadd.f32 %v1964, %v2124
      %v2126 = vpop.f32.mrf.mxu0
      %2127 = vmatprep.mubr.bf16.mxu0 %v1072
      %2128 = vmatmul.mubr.bf16.gmra.mxu0 %v1071
      %v2129 = vpop.f32.mrf.mxu0
      %v2130 = vadd.f32 %v1969, %v2129
      %v2131 = vpop.f32.mrf.mxu0
      %v2132 = vpop.f32.mrf.mxu0
      %v2133 = vadd.f32 %v1972, %v2132
      %v2134 = vpop.f32.mrf.mxu0
      %2135 = vmatprep.mubr.bf16.mxu0 %v1081
      %2136 = vmatmul.mubr.bf16.gmra.mxu0 %v1080
      %v2137 = vpop.f32.mrf.mxu0
      %v2138 = vadd.f32 %v1977, %v2137
      %v2139 = vpop.f32.mrf.mxu0
      %v2140 = vpop.f32.mrf.mxu0
      %v2141 = vadd.f32 %v1980, %v2140
      %v2142 = vpop.f32.mrf.mxu0
      %2143 = vdwg.mxu0
      %2144 = vmatprep.subr.bf16.mxu0 0
      %2145 = vmatpush1.bf16.msra.mxu0 %v1572
      %2146 = vmatprep.subr.bf16.mxu0 0
      %2147 = vmatpush1.bf16.msra.mxu0 %v1571
      %2148 = vmatprep.subr.bf16.mxu0 0
      %2149 = vmatpush1.bf16.msra.mxu0 %v1570
      %2150 = vmatprep.subr.bf16.mxu0 0
      %2151 = vmatpush1.bf16.msra.mxu0 %v1569
      %2152 = vmatprep.subr.bf16.mxu0 0
      %2153 = vmatpush1.bf16.msra.mxu0 %v1568
      %2154 = vmatprep.subr.bf16.mxu0 0
      %2155 = vmatpush1.bf16.msra.mxu0 %v1567
      %2156 = vmatprep.subr.bf16.mxu0 0
      %2157 = vmatpush1.bf16.msra.mxu0 %v1566
      %2158 = vmatprep.subr.bf16.mxu0 0
      %2159 = vmatpush1.bf16.msra.mxu0 %v1565
      %2160 = vmatprep.subr.bf16.mxu0 0
      %2161 = vmatpush2.bf16.msra.mxu0 %v1580
      %2162 = vmatprep.subr.bf16.mxu0 0
      %2163 = vmatpush2.bf16.msra.mxu0 %v1579
      %2164 = vmatprep.subr.bf16.mxu0 0
      %2165 = vmatpush2.bf16.msra.mxu0 %v1578
      %2166 = vmatprep.subr.bf16.mxu0 0
      %2167 = vmatpush2.bf16.msra.mxu0 %v1577
      %2168 = vmatprep.subr.bf16.mxu0 0
      %2169 = vmatpush2.bf16.msra.mxu0 %v1576
      %2170 = vmatprep.subr.bf16.mxu0 0
      %2171 = vmatpush2.bf16.msra.mxu0 %v1575
      %2172 = vmatprep.subr.bf16.mxu0 0
      %2173 = vmatpush2.bf16.msra.mxu0 %v1574
      %2174 = vmatprep.subr.bf16.mxu0 0
      %2175 = vmatpush2.bf16.msra.mxu0 %v1573
      %2176 = vmatprep.mubr.bf16.mxu0 %v948
      %2177 = vmatmul.mubr.bf16.gmra.mxu0 %v947
      %v2178 = vpop.f32.mrf.mxu0
      %v2179 = vadd.f32 %v2018, %v2178
      %v2180 = vpop.f32.mrf.mxu0
      %v2181 = vpop.f32.mrf.mxu0
      %v2182 = vadd.f32 %v2021, %v2181
      %v2183 = vpop.f32.mrf.mxu0
      %2184 = vmatprep.mubr.bf16.mxu0 %v957
      %2185 = vmatmul.mubr.bf16.gmra.mxu0 %v956
      %v2186 = vpop.f32.mrf.mxu0
      %v2187 = vadd.f32 %v2026, %v2186
      %v2188 = vpop.f32.mrf.mxu0
      %v2189 = vpop.f32.mrf.mxu0
      %v2190 = vadd.f32 %v2029, %v2189
      %v2191 = vpop.f32.mrf.mxu0
      %2192 = vmatprep.mubr.bf16.mxu0 %v966
      %2193 = vmatmul.mubr.bf16.gmra.mxu0 %v965
      %v2194 = vpop.f32.mrf.mxu0
      %v2195 = vadd.f32 %v2034, %v2194
      %v2196 = vpop.f32.mrf.mxu0
      %v2197 = vpop.f32.mrf.mxu0
      %v2198 = vadd.f32 %v2037, %v2197
      %v2199 = vpop.f32.mrf.mxu0
      %2200 = vmatprep.mubr.bf16.mxu0 %v975
      %2201 = vmatmul.mubr.bf16.gmra.mxu0 %v974
      %v2202 = vpop.f32.mrf.mxu0
      %v2203 = vadd.f32 %v2042, %v2202
      %v2204 = vpop.f32.mrf.mxu0
      %v2205 = vpop.f32.mrf.mxu0
      %v2206 = vadd.f32 %v2045, %v2205
      %v2207 = vpop.f32.mrf.mxu0
      %2208 = vmatprep.mubr.bf16.mxu0 %v984
      %2209 = vmatmul.mubr.bf16.gmra.mxu0 %v983
      %v2210 = vpop.f32.mrf.mxu0
      %v2211 = vadd.f32 %v2050, %v2210
      %v2212 = vpop.f32.mrf.mxu0
      %v2213 = vpop.f32.mrf.mxu0
      %v2214 = vadd.f32 %v2053, %v2213
      %v2215 = vpop.f32.mrf.mxu0
      %2216 = vmatprep.mubr.bf16.mxu0 %v993
      %2217 = vmatmul.mubr.bf16.gmra.mxu0 %v992
      %v2218 = vpop.f32.mrf.mxu0
      %v2219 = vadd.f32 %v2058, %v2218
      %v2220 = vpop.f32.mrf.mxu0
      %v2221 = vpop.f32.mrf.mxu0
      %v2222 = vadd.f32 %v2061, %v2221
      %v2223 = vpop.f32.mrf.mxu0
      %2224 = vmatprep.mubr.bf16.mxu0 %v1002
      %2225 = vmatmul.mubr.bf16.gmra.mxu0 %v1001
      %v2226 = vpop.f32.mrf.mxu0
      %v2227 = vadd.f32 %v2066, %v2226
      %v2228 = vpop.f32.mrf.mxu0
      %v2229 = vpop.f32.mrf.mxu0
      %v2230 = vadd.f32 %v2069, %v2229
      %v2231 = vpop.f32.mrf.mxu0
      %2232 = vmatprep.mubr.bf16.mxu0 %v1011
      %2233 = vmatmul.mubr.bf16.gmra.mxu0 %v1010
      %v2234 = vpop.f32.mrf.mxu0
      %v2235 = vadd.f32 %v2074, %v2234
      %v2236 = vpop.f32.mrf.mxu0
      %v2237 = vpop.f32.mrf.mxu0
      %v2238 = vadd.f32 %v2077, %v2237
      %v2239 = vpop.f32.mrf.mxu0
      %2240 = vmatprep.mubr.bf16.mxu0 %v1020
      %2241 = vmatmul.mubr.bf16.gmra.mxu0 %v1019
      %v2242 = vpop.f32.mrf.mxu0
      %v2243 = vadd.f32 %v2082, %v2242
      %v2244 = vpop.f32.mrf.mxu0
      %v2245 = vpop.f32.mrf.mxu0
      %v2246 = vadd.f32 %v2085, %v2245
      %v2247 = vpop.f32.mrf.mxu0
      %2248 = vmatprep.mubr.bf16.mxu0 %v1029
      %2249 = vmatmul.mubr.bf16.gmra.mxu0 %v1028
      %v2250 = vpop.f32.mrf.mxu0
      %v2251 = vadd.f32 %v2090, %v2250
      %v2252 = vpop.f32.mrf.mxu0
      %v2253 = vpop.f32.mrf.mxu0
      %v2254 = vadd.f32 %v2093, %v2253
      %v2255 = vpop.f32.mrf.mxu0
      %2256 = vmatprep.mubr.bf16.mxu0 %v1038
      %2257 = vmatmul.mubr.bf16.gmra.mxu0 %v1037
      %v2258 = vpop.f32.mrf.mxu0
      %v2259 = vadd.f32 %v2098, %v2258
      %v2260 = vpop.f32.mrf.mxu0
      %v2261 = vpop.f32.mrf.mxu0
      %v2262 = vadd.f32 %v2101, %v2261
      %v2263 = vpop.f32.mrf.mxu0
      %2264 = vmatprep.mubr.bf16.mxu0 %v1047
      %2265 = vmatmul.mubr.bf16.gmra.mxu0 %v1046
      %v2266 = vpop.f32.mrf.mxu0
      %v2267 = vadd.f32 %v2106, %v2266
      %v2268 = vpop.f32.mrf.mxu0
      %v2269 = vpop.f32.mrf.mxu0
      %v2270 = vadd.f32 %v2109, %v2269
      %v2271 = vpop.f32.mrf.mxu0
      %2272 = vmatprep.mubr.bf16.mxu0 %v1056
      %2273 = vmatmul.mubr.bf16.gmra.mxu0 %v1055
      %v2274 = vpop.f32.mrf.mxu0
      %v2275 = vadd.f32 %v2114, %v2274
      %v2276 = vpop.f32.mrf.mxu0
      %v2277 = vpop.f32.mrf.mxu0
      %v2278 = vadd.f32 %v2117, %v2277
      %v2279 = vpop.f32.mrf.mxu0
      %2280 = vmatprep.mubr.bf16.mxu0 %v1065
      %2281 = vmatmul.mubr.bf16.gmra.mxu0 %v1064
      %v2282 = vpop.f32.mrf.mxu0
      %v2283 = vadd.f32 %v2122, %v2282
      %v2284 = vpop.f32.mrf.mxu0
      %v2285 = vpop.f32.mrf.mxu0
      %v2286 = vadd.f32 %v2125, %v2285
      %v2287 = vpop.f32.mrf.mxu0
      %2288 = vmatprep.mubr.bf16.mxu0 %v1074
      %2289 = vmatmul.mubr.bf16.gmra.mxu0 %v1073
      %v2290 = vpop.f32.mrf.mxu0
      %v2291 = vadd.f32 %v2130, %v2290
      %v2292 = vpop.f32.mrf.mxu0
      %v2293 = vpop.f32.mrf.mxu0
      %v2294 = vadd.f32 %v2133, %v2293
      %v2295 = vpop.f32.mrf.mxu0
      %2296 = vmatprep.mubr.bf16.mxu0 %v1083
      %2297 = vmatmul.mubr.bf16.gmra.mxu0 %v1082
      %v2298 = vpop.f32.mrf.mxu0
      %v2299 = vadd.f32 %v2138, %v2298
      %v2300 = vpop.f32.mrf.mxu0
      %v2301 = vpop.f32.mrf.mxu0
      %v2302 = vadd.f32 %v2141, %v2301
      %v2303 = vpop.f32.mrf.mxu0
      %2304 = vdwg.mxu0
      %2305 = vmatprep.subr.bf16.mxu0 0
      %2306 = vmatpush1.bf16.msra.mxu0 %v1588
      %2307 = vmatprep.subr.bf16.mxu0 0
      %2308 = vmatpush1.bf16.msra.mxu0 %v1587
      %2309 = vmatprep.subr.bf16.mxu0 0
      %2310 = vmatpush1.bf16.msra.mxu0 %v1586
      %2311 = vmatprep.subr.bf16.mxu0 0
      %2312 = vmatpush1.bf16.msra.mxu0 %v1585
      %2313 = vmatprep.subr.bf16.mxu0 0
      %2314 = vmatpush1.bf16.msra.mxu0 %v1584
      %2315 = vmatprep.subr.bf16.mxu0 0
      %2316 = vmatpush1.bf16.msra.mxu0 %v1583
      %2317 = vmatprep.subr.bf16.mxu0 0
      %2318 = vmatpush1.bf16.msra.mxu0 %v1582
      %2319 = vmatprep.subr.bf16.mxu0 0
      %2320 = vmatpush1.bf16.msra.mxu0 %v1581
      %2321 = vmatprep.subr.bf16.mxu0 0
      %2322 = vmatpush2.bf16.msra.mxu0 0
      %2323 = vmatprep.subr.bf16.mxu0 0
      %2324 = vmatpush2.bf16.msra.mxu0 0
      %2325 = vmatprep.subr.bf16.mxu0 0
      %2326 = vmatpush2.bf16.msra.mxu0 0
      %2327 = vmatprep.subr.bf16.mxu0 0
      %2328 = vmatpush2.bf16.msra.mxu0 0
      %2329 = vmatprep.subr.bf16.mxu0 0
      %2330 = vmatpush2.bf16.msra.mxu0 0
      %2331 = vmatprep.subr.bf16.mxu0 0
      %2332 = vmatpush2.bf16.msra.mxu0 0
      %2333 = vmatprep.subr.bf16.mxu0 0
      %2334 = vmatpush2.bf16.msra.mxu0 0
      %2335 = vmatprep.subr.bf16.mxu0 0
      %2336 = vmatpush2.bf16.msra.mxu0 0
      %2337 = vmatprep.mubr.bf16.mxu0 0
      %2338 = vmatmul.mubr.bf16.gmra.mxu0 %v949
      %v2339 = vpop.f32.mrf.mxu0
      %v2340 = vadd.f32 %v2179, %v2339
      %v2341 = vpop.f32.mrf.mxu0
      %v2342 = vpop.f32.mrf.mxu0
      %v2343 = vadd.f32 %v2182, %v2342
      %v2344 = vpop.f32.mrf.mxu0
      %2345 = vmatprep.mubr.bf16.mxu0 0
      %2346 = vmatmul.mubr.bf16.gmra.mxu0 %v958
      %v2347 = vpop.f32.mrf.mxu0
      %v2348 = vadd.f32 %v2187, %v2347
      %v2349 = vpop.f32.mrf.mxu0
      %v2350 = vpop.f32.mrf.mxu0
      %v2351 = vadd.f32 %v2190, %v2350
      %v2352 = vpop.f32.mrf.mxu0
      %2353 = vmatprep.mubr.bf16.mxu0 0
      %2354 = vmatmul.mubr.bf16.gmra.mxu0 %v967
      %v2355 = vpop.f32.mrf.mxu0
      %v2356 = vadd.f32 %v2195, %v2355
      %v2357 = vpop.f32.mrf.mxu0
      %v2358 = vpop.f32.mrf.mxu0
      %v2359 = vadd.f32 %v2198, %v2358
      %v2360 = vpop.f32.mrf.mxu0
      %2361 = vmatprep.mubr.bf16.mxu0 0
      %2362 = vmatmul.mubr.bf16.gmra.mxu0 %v976
      %v2363 = vpop.f32.mrf.mxu0
      %v2364 = vadd.f32 %v2203, %v2363
      %v2365 = vpop.f32.mrf.mxu0
      %v2366 = vpop.f32.mrf.mxu0
      %v2367 = vadd.f32 %v2206, %v2366
      %v2368 = vpop.f32.mrf.mxu0
      %2369 = vmatprep.mubr.bf16.mxu0 0
      %2370 = vmatmul.mubr.bf16.gmra.mxu0 %v985
      %v2371 = vpop.f32.mrf.mxu0
      %v2372 = vadd.f32 %v2211, %v2371
      %v2373 = vpop.f32.mrf.mxu0
      %v2374 = vpop.f32.mrf.mxu0
      %v2375 = vadd.f32 %v2214, %v2374
      %v2376 = vpop.f32.mrf.mxu0
      %2377 = vmatprep.mubr.bf16.mxu0 0
      %2378 = vmatmul.mubr.bf16.gmra.mxu0 %v994
      %v2379 = vpop.f32.mrf.mxu0
      %v2380 = vadd.f32 %v2219, %v2379
      %v2381 = vpop.f32.mrf.mxu0
      %v2382 = vpop.f32.mrf.mxu0
      %v2383 = vadd.f32 %v2222, %v2382
      %v2384 = vpop.f32.mrf.mxu0
      %2385 = vmatprep.mubr.bf16.mxu0 0
      %2386 = vmatmul.mubr.bf16.gmra.mxu0 %v1003
      %v2387 = vpop.f32.mrf.mxu0
      %v2388 = vadd.f32 %v2227, %v2387
      %v2389 = vpop.f32.mrf.mxu0
      %v2390 = vpop.f32.mrf.mxu0
      %v2391 = vadd.f32 %v2230, %v2390
      %v2392 = vpop.f32.mrf.mxu0
      %2393 = vmatprep.mubr.bf16.mxu0 0
      %2394 = vmatmul.mubr.bf16.gmra.mxu0 %v1012
      %v2395 = vpop.f32.mrf.mxu0
      %v2396 = vadd.f32 %v2235, %v2395
      %v2397 = vpop.f32.mrf.mxu0
      %v2398 = vpop.f32.mrf.mxu0
      %v2399 = vadd.f32 %v2238, %v2398
      %v2400 = vpop.f32.mrf.mxu0
      %2401 = vmatprep.mubr.bf16.mxu0 0
      %2402 = vmatmul.mubr.bf16.gmra.mxu0 %v1021
      %v2403 = vpop.f32.mrf.mxu0
      %v2404 = vadd.f32 %v2243, %v2403
      %v2405 = vpop.f32.mrf.mxu0
      %v2406 = vpop.f32.mrf.mxu0
      %v2407 = vadd.f32 %v2246, %v2406
      %v2408 = vpop.f32.mrf.mxu0
      %2409 = vmatprep.mubr.bf16.mxu0 0
      %2410 = vmatmul.mubr.bf16.gmra.mxu0 %v1030
      %v2411 = vpop.f32.mrf.mxu0
      %v2412 = vadd.f32 %v2251, %v2411
      %v2413 = vpop.f32.mrf.mxu0
      %v2414 = vpop.f32.mrf.mxu0
      %v2415 = vadd.f32 %v2254, %v2414
      %v2416 = vpop.f32.mrf.mxu0
      %2417 = vmatprep.mubr.bf16.mxu0 0
      %2418 = vmatmul.mubr.bf16.gmra.mxu0 %v1039
      %v2419 = vpop.f32.mrf.mxu0
      %v2420 = vadd.f32 %v2259, %v2419
      %v2421 = vpop.f32.mrf.mxu0
      %v2422 = vpop.f32.mrf.mxu0
      %v2423 = vadd.f32 %v2262, %v2422
      %v2424 = vpop.f32.mrf.mxu0
      %2425 = vmatprep.mubr.bf16.mxu0 0
      %2426 = vmatmul.mubr.bf16.gmra.mxu0 %v1048
      %v2427 = vpop.f32.mrf.mxu0
      %v2428 = vadd.f32 %v2267, %v2427
      %v2429 = vpop.f32.mrf.mxu0
      %v2430 = vpop.f32.mrf.mxu0
      %v2431 = vadd.f32 %v2270, %v2430
      %v2432 = vpop.f32.mrf.mxu0
      %2433 = vmatprep.mubr.bf16.mxu0 0
      %2434 = vmatmul.mubr.bf16.gmra.mxu0 %v1057
      %v2435 = vpop.f32.mrf.mxu0
      %v2436 = vadd.f32 %v2275, %v2435
      %v2437 = vpop.f32.mrf.mxu0
      %v2438 = vpop.f32.mrf.mxu0
      %v2439 = vadd.f32 %v2278, %v2438
      %v2440 = vpop.f32.mrf.mxu0
      %2441 = vmatprep.mubr.bf16.mxu0 0
      %2442 = vmatmul.mubr.bf16.gmra.mxu0 %v1066
      %v2443 = vpop.f32.mrf.mxu0
      %v2444 = vadd.f32 %v2283, %v2443
      %v2445 = vpop.f32.mrf.mxu0
      %v2446 = vpop.f32.mrf.mxu0
      %v2447 = vadd.f32 %v2286, %v2446
      %v2448 = vpop.f32.mrf.mxu0
      %2449 = vmatprep.mubr.bf16.mxu0 0
      %2450 = vmatmul.mubr.bf16.gmra.mxu0 %v1075
      %v2451 = vpop.f32.mrf.mxu0
      %v2452 = vadd.f32 %v2291, %v2451
      %v2453 = vpop.f32.mrf.mxu0
      %v2454 = vpop.f32.mrf.mxu0
      %v2455 = vadd.f32 %v2294, %v2454
      %v2456 = vpop.f32.mrf.mxu0
      %2457 = vmatprep.mubr.bf16.mxu0 0
      %2458 = vmatmul.mubr.bf16.gmra.mxu0 %v1084
      %v2459 = vpop.f32.mrf.mxu0
      %v2460 = vadd.f32 %v2299, %v2459
      %v2461 = vpop.f32.mrf.mxu0
      %v2462 = vpop.f32.mrf.mxu0
      %v2463 = vadd.f32 %v2302, %v2462
      %v2464 = vpop.f32.mrf.mxu0
      %2465 = vdwg.mxu0
      %2466 = vst [vmem:[%s182] sm:$0xff] %v2340
      %2467 = vst [vmem:[%s182 + $0x8] sm:$0xff] %v2343
      %2468 = vst [vmem:[%s182 + $0x10] sm:$0xff] %v2348
      %2469 = vst [vmem:[%s182 + $0x18] sm:$0xff] %v2351
      %2470 = vst [vmem:[%s182 + $0x20] sm:$0xff] %v2356
      %2471 = vst [vmem:[%s182 + $0x28] sm:$0xff] %v2359
      %2472 = vst [vmem:[%s182 + $0x30] sm:$0xff] %v2364
      %2473 = vst [vmem:[%s182 + $0x38] sm:$0xff] %v2367
      %2474 = vst [vmem:[%s182 + $0x40] sm:$0xff] %v2372
      %2475 = vst [vmem:[%s182 + $0x48] sm:$0xff] %v2375
      %2476 = vst [vmem:[%s182 + $0x50] sm:$0xff] %v2380
      %2477 = vst [vmem:[%s182 + $0x58] sm:$0xff] %v2383
      %2478 = vst [vmem:[%s182 + $0x60] sm:$0xff] %v2388
      %2479 = vst [vmem:[%s182 + $0x68] sm:$0xff] %v2391
      %2480 = vst [vmem:[%s182 + $0x70] sm:$0xff] %v2396
      %2481 = vst [vmem:[%s182 + $0x78] sm:$0xff] %v2399
      %2482 = vst [vmem:[%s182 + $0x80] sm:$0xff] %v2404
      %2483 = vst [vmem:[%s182 + $0x88] sm:$0xff] %v2407
      %2484 = vst [vmem:[%s182 + $0x90] sm:$0xff] %v2412
      %2485 = vst [vmem:[%s182 + $0x98] sm:$0xff] %v2415
      %2486 = vst [vmem:[%s182 + $0xa0] sm:$0xff] %v2420
      %2487 = vst [vmem:[%s182 + $0xa8] sm:$0xff] %v2423
      %2488 = vst [vmem:[%s182 + $0xb0] sm:$0xff] %v2428
      %2489 = vst [vmem:[%s182 + $0xb8] sm:$0xff] %v2431
      %2490 = vst [vmem:[%s182 + $0xc0] sm:$0xff] %v2436
      %2491 = vst [vmem:[%s182 + $0xc8] sm:$0xff] %v2439
      %2492 = vst [vmem:[%s182 + $0xd0] sm:$0xff] %v2444
      %2493 = vst [vmem:[%s182 + $0xd8] sm:$0xff] %v2447
      %2494 = vst [vmem:[%s182 + $0xe0] sm:$0xff] %v2452
      %2495 = vst [vmem:[%s182 + $0xe8] sm:$0xff] %v2455
      %2496 = vst [vmem:[%s182 + $0xf0] sm:$0xff] %v2460
      %2497 = vst [vmem:[%s182 + $0xf8] sm:$0xff] %v2463
      %v2498 = vadd.f32 %v2340, %v2343
      %v2499 = vadd.f32 %v2498, %v2348
      %v2500 = vadd.f32 %v2499, %v2351
      %v2501 = vadd.f32 %v2500, %v2356
      %v2502 = vadd.f32 %v2501, %v2359
      %v2503 = vadd.f32 %v2502, %v2364
      %v2504 = vadd.f32 %v2503, %v2367
      %v2505 = vadd.f32 %v2504, %v2372
      %v2506 = vadd.f32 %v2505, %v2375
      %v2507 = vadd.f32 %v2506, %v2380
      %v2508 = vadd.f32 %v2507, %v2383
      %v2509 = vadd.f32 %v2508, %v2388
      %v2510 = vadd.f32 %v2509, %v2391
      %v2511 = vadd.f32 %v2510, %v2396
      %v2512 = vadd.f32 %v2511, %v2399
      %v2513 = vadd.f32 %v2512, %v2404
      %v2514 = vadd.f32 %v2513, %v2407
      %v2515 = vadd.f32 %v2514, %v2412
      %v2516 = vadd.f32 %v2515, %v2415
      %v2517 = vadd.f32 %v2516, %v2420
      %v2518 = vadd.f32 %v2517, %v2423
      %v2519 = vadd.f32 %v2518, %v2428
      %v2520 = vadd.f32 %v2519, %v2431
      %v2521 = vadd.f32 %v2520, %v2436
      %v2522 = vadd.f32 %v2521, %v2439
      %v2523 = vadd.f32 %v2522, %v2444
      %v2524 = vadd.f32 %v2523, %v2447
      %v2525 = vadd.f32 %v2524, %v2452
      %v2526 = vadd.f32 %v2525, %v2455
      %v2527 = vadd.f32 %v2526, %v2460
      %v2528 = vadd.f32 %v2527, %v2463
      %v2529 = vrot.slane %v2528, 4
      %v2530 = vadd.f32 %v2528, %v2529
      %v2531 = vrot.slane %v2530, 2
      %v2532 = vadd.f32 %v2530, %v2531
      %v2533 = vrot.slane %v2532, 1
      %v2534 = vadd.f32 %v2532, %v2533
      %v2535 = vmul.f32 %v2340, %v2340
      %v2536 = vmul.f32 %v2343, %v2343
      %v2537 = vmul.f32 %v2348, %v2348
      %v2538 = vmul.f32 %v2351, %v2351
      %v2539 = vmul.f32 %v2356, %v2356
      %v2540 = vmul.f32 %v2359, %v2359
      %v2541 = vmul.f32 %v2364, %v2364
      %v2542 = vmul.f32 %v2367, %v2367
      %v2543 = vmul.f32 %v2372, %v2372
      %v2544 = vmul.f32 %v2375, %v2375
      %v2545 = vmul.f32 %v2380, %v2380
      %v2546 = vmul.f32 %v2383, %v2383
      %v2547 = vmul.f32 %v2388, %v2388
      %v2548 = vmul.f32 %v2391, %v2391
      %v2549 = vmul.f32 %v2396, %v2396
      %v2550 = vmul.f32 %v2399, %v2399
      %v2551 = vmul.f32 %v2404, %v2404
      %v2552 = vmul.f32 %v2407, %v2407
      %v2553 = vmul.f32 %v2412, %v2412
      %v2554 = vmul.f32 %v2415, %v2415
      %v2555 = vmul.f32 %v2420, %v2420
      %v2556 = vmul.f32 %v2423, %v2423
      %v2557 = vmul.f32 %v2428, %v2428
      %v2558 = vmul.f32 %v2431, %v2431
      %v2559 = vmul.f32 %v2436, %v2436
      %v2560 = vmul.f32 %v2439, %v2439
      %v2561 = vmul.f32 %v2444, %v2444
      %v2562 = vmul.f32 %v2447, %v2447
      %v2563 = vmul.f32 %v2452, %v2452
      %v2564 = vmul.f32 %v2455, %v2455
      %v2565 = vmul.f32 %v2460, %v2460
      %v2566 = vmul.f32 %v2463, %v2463
      %v2567 = vadd.f32 %v2535, %v2536
      %v2568 = vadd.f32 %v2567, %v2537
      %v2569 = vadd.f32 %v2568, %v2538
      %v2570 = vadd.f32 %v2569, %v2539
      %v2571 = vadd.f32 %v2570, %v2540
      %v2572 = vadd.f32 %v2571, %v2541
      %v2573 = vadd.f32 %v2572, %v2542
      %v2574 = vadd.f32 %v2573, %v2543
      %v2575 = vadd.f32 %v2574, %v2544
      %v2576 = vadd.f32 %v2575, %v2545
      %v2577 = vadd.f32 %v2576, %v2546
      %v2578 = vadd.f32 %v2577, %v2547
      %v2579 = vadd.f32 %v2578, %v2548
      %v2580 = vadd.f32 %v2579, %v2549
      %v2581 = vadd.f32 %v2580, %v2550
      %v2582 = vadd.f32 %v2581, %v2551
      %v2583 = vadd.f32 %v2582, %v2552
      %v2584 = vadd.f32 %v2583, %v2553
      %v2585 = vadd.f32 %v2584, %v2554
      %v2586 = vadd.f32 %v2585, %v2555
      %v2587 = vadd.f32 %v2586, %v2556
      %v2588 = vadd.f32 %v2587, %v2557
      %v2589 = vadd.f32 %v2588, %v2558
      %v2590 = vadd.f32 %v2589, %v2559
      %v2591 = vadd.f32 %v2590, %v2560
      %v2592 = vadd.f32 %v2591, %v2561
      %v2593 = vadd.f32 %v2592, %v2562
      %v2594 = vadd.f32 %v2593, %v2563
      %v2595 = vadd.f32 %v2594, %v2564
      %v2596 = vadd.f32 %v2595, %v2565
      %v2597 = vadd.f32 %v2596, %v2566
      %v2598 = vrot.slane %v2597, 4
      %v2599 = vadd.f32 %v2597, %v2598
      %v2600 = vrot.slane %v2599, 2
      %v2601 = vadd.f32 %v2599, %v2600
      %v2602 = vrot.slane %v2601, 1
      %v2603 = vadd.f32 %v2601, %v2602
      %vm2604 = vcmask 1040384
      %v2605 = vsel %vm2604, %v2534, %v2603
      %vm2606 = vcmask 1041408
      %v2607 = vsel %vm2606, %v2605, 0.0
      %2608 = vst [vmem:[%s187] sm:$0xff] %v2607
      %s2609 = smul.u32 32, %s15
      %p2610 = scmp.lt.s32.totalorder %s2609, 63
      %s2611 = scalar_select %p2610, %s2609, 63
      %s2612 = smul.addr %s2611, 8
      %s2613 = scalar_lea.vmem %s2, %s2612
      %p2614 = scmp.lt.s32.totalorder %s15, 1
      %s2615 = scalar_select %p2614, %s15, 1
      %s2616 = smul.addr %s2615, 8
      %s2617 = scalar_lea.vmem %s3, %s2616
      // Predicated region
      $region29: #{_bottleneck_impl.8} parent=27 // pred_check
        %p2618 = pneg %p80
      $region30: #{_bottleneck_impl.8} parent=27 // pred_check_branch
        %2620 = sbr.rel (%p2618) target = $region32
      $region31: #{_bottleneck_impl.8} parent=27 // pred_region
        %s2621 = smul.u32 32, %s15
      $region32: #{_bottleneck_impl.8} parent=27 // pred_fallthru
        _
      // Predicated region
      $region33: #{_bottleneck_impl.8} parent=27 // pred_check
        %p2622 = pneg %p106
      $region34: #{_bottleneck_impl.8} parent=27 // pred_check_branch
        %2624 = sbr.rel (%p2622) target = $region36
      $region35: #{_bottleneck_impl.8} parent=27 // pred_region
        _
      $region36: #{_bottleneck_impl.8} parent=27 // pred_fallthru
        _
    $region28: #{_bottleneck_impl.8} parent=5 // pred_fallthru
      _
    %p2625 = scmp.le.s32.totalorder 2, %s10
    // Predicated region
    $region37: #{_bottleneck_impl.8} parent=5 // pred_check
      %p2626 = pneg %p2625
    $region38: #{_bottleneck_impl.8} parent=5 // pred_check_branch
      %2628 = sbr.rel (%p2626) target = $region40
    $region39: #{_bottleneck_impl.8} parent=5 // pred_region
      %s2629 = ssub.s32 %s10, 2
      // Predicated region
      $region41: #{_bottleneck_impl.8} parent=39 // pred_check
        %p2630 = pneg %p86
      $region42: #{_bottleneck_impl.8} parent=39 // pred_check_branch
        %2632 = sbr.rel (%p2630) target = $region44
      $region43: #{_bottleneck_impl.8} parent=39 // pred_region
        %s2633 = smul.u32 32, %s16
        %p2634 = scmp.lt.s32.totalorder %s2633, 63
        %s2635 = scalar_select %p2634, %s2633, 63
        %s2636 = smul.addr %s2635, 8
        %s2637 = scalar_lea.vmem %s2, %s2636
      $region44: #{_bottleneck_impl.8} parent=39 // pred_fallthru
        _
      // Predicated region
      $region45: #{_bottleneck_impl.8} parent=39 // pred_check
        %p2638 = pneg %p112
      $region46: #{_bottleneck_impl.8} parent=39 // pred_check_branch
        %2640 = sbr.rel (%p2638) target = $region48
      $region47: #{_bottleneck_impl.8} parent=39 // pred_region
        %p2641 = scmp.lt.s32.totalorder %s16, 1
        %s2642 = scalar_select %p2641, %s16, 1
        %s2643 = smul.addr %s2642, 8
        %s2644 = scalar_lea.vmem %s3, %s2643
      $region48: #{_bottleneck_impl.8} parent=39 // pred_fallthru
        _
    $region40: #{_bottleneck_impl.8} parent=5 // pred_fallthru
      _
  $region6: #{_bottleneck_impl.8} parent=0 // loop_footer
    %s14 = sadd.s32 1, %s10
  $region7: #{_bottleneck_impl.8} parent=0 // loop_footer_branch
    %9 = sbr.rel target = $region3
  $region8: #{_bottleneck_impl.8} parent=0 // loop_exit
    _

</llo_original>
